<compile_context>
chip_gen: v6e
topology: v6e:2x2x1
jax: 0.10.0
libtpu: 0.0.40
codegen_flags: <defaults>
</compile_context>

<pallas_src>
import functools

import jax
import jax.numpy as jnp
from jax.experimental import pallas as pl
from jax.experimental.pallas import tpu as pltpu


# ------------------------------ lane geometry --------------------------------

def _rup(x, m):
    return ((x + m - 1) // m) * m


def _rup8(c):
    return _rup(c, 8)


def _lane_dims(H, W):
    """Lane-dense dims for a 3x3 'same' conv on an (H, W) image.

    Wp   : padded row width (W + 2)
    Lout : number of conv-output columns actually used (H * Wp)
    Lr   : Lout rounded up to full vregs (multiple of 128)
    Lp   : padded-flat input lane count (fits all 9 tap slices of width Lr)
    """
    Wp = W + 2
    Lout = H * Wp
    Lr = _rup(Lout, 128)
    Lp = _rup(max(2 * Wp + 2 + Lr, (H + 2) * Wp), 128)
    return Wp, Lout, Lr, Lp


# ----------------------------- in-kernel helpers -----------------------------

def _im2col_conv(xv, w_ref, W, n_cols):
    """3x3 'same' conv as ONE lane-dense MXU matmul.

    xv:     (Cin, Lp) activation (any float dtype); cast ONCE to bf16 before
            the 9 tap slices (avoids materializing a larger f32 patch buffer).
    w_ref:  (Cout, 9*Cin) bf16 weight ref, column order (dy*3+dx)*Cin + ci.
    n_cols: lane-dense output width (multiple of 128).
    Output column l corresponds to output pixel (l // (W+2), l % (W+2));
    columns with l % (W+2) >= W or l >= H*(W+2) are garbage and must be
    masked / sliced by the caller.
    """
    Wp = W + 2
    xb = xv.astype(jnp.bfloat16)
    taps = [xb[:, dy * Wp + dx: dy * Wp + dx + n_cols]
            for dy in range(3) for dx in range(3)]
    patches = jnp.concatenate(taps, axis=0)                # (9*Cin, n_cols) bf16
    return jnp.dot(w_ref[...], patches, preferred_element_type=jnp.float32)


# ------------------------------- Pallas kernels -------------------------------

def _subpixel_kernel(alpha_ref, x_ref, w_ref, b_ref, o_ref, *, W):
    """conv3x3(Cin -> 4*Cin) + bias + PReLU (PixelShuffle done by the caller)."""
    acc = _im2col_conv(x_ref[0], w_ref, W, o_ref.shape[-1]) + b_ref[...]
    alpha = alpha_ref[0]
    o_ref[0] = jnp.where(acc >= 0.0, acc, alpha * acc).astype(o_ref.dtype)


def _fused_tail_kernel(x_ref, wa_ref, bc1_ref, wc2_ref, bc2_ref, ws2_ref,
                       o_ref, o1_pad, cat_pad, *, H, W, out_ch):
    """Whole tail of JUp_Concat_v1 fused, per batch element — 3 MXU matmuls:
         [residual ; o1] = [sep1_folded ; conv1_bnfolded] @ im2col(x)   (merged)
         o2              = relu(conv2_bnfolded @ im2col(pad(o1)) + b2)
         out             = sep2_folded @ im2col(pad([o2 ; residual]))   (merged)
    Intermediates are re-padded into bf16 VMEM scratch (single full-width,
    lane-dense stores), never touching HBM.
    """
    Wp = W + 2
    Lout = H * Wp
    Lr = o_ref.shape[-1]            # multiple of 128
    Lp = o1_pad.shape[-1]           # multiple of 128

    # valid-column mask built in-kernel (no HBM input needed)
    col = jax.lax.broadcasted_iota(jnp.int32, (1, Lr), 1)
    mask = ((col % Wp < W) & (col < Lout)).astype(jnp.float32)

    def padded_slab(val, nrows):
        # [zeros(:, Wp+1) | val*mask | zeros(tail)] built in registers so the
        # caller writes the whole scratch with ONE unmasked full-width store
        # (no separate whole-buffer zero fill, no offset partial stores).
        rows = val.shape[0]
        parts = [jnp.zeros((rows, Wp + 1), jnp.float32), val * mask]
        tail = Lp - (Wp + 1) - Lr
        if tail:
            parts.append(jnp.zeros((rows, tail), jnp.float32))
        slab = jnp.concatenate(parts, axis=1)
        if nrows > rows:
            slab = jnp.concatenate(
                [slab, jnp.zeros((nrows - rows, Lp), jnp.float32)], axis=0)
        return slab

    xv = x_ref[0]                   # (c2p, Lp) bf16

    # merged matmul #1: residual (sep1 dw*pw folded) + conv_block2-conv1 (BN folded)
    ra = _im2col_conv(xv, wa_ref, W, Lr)                    # (2*out_ch, Lr) f32
    residual = ra[:out_ch]
    o1 = jnp.maximum(ra[out_ch:] + bc1_ref[...], 0.0)
    o1_pad[...] = padded_slab(o1, o1_pad.shape[0]).astype(o1_pad.dtype)

    # conv_block2 conv2 (BN folded)
    o2 = jnp.maximum(_im2col_conv(o1_pad[...], wc2_ref, W, Lr) + bc2_ref[...],
                     0.0)

    # merged matmul #3: SeparableConv2d#2 on concat([o2, residual], channels)
    cat = jnp.concatenate([o2, residual], axis=0)           # (2*out_ch, Lr)
    cat_pad[...] = padded_slab(cat, cat_pad.shape[0]).astype(cat_pad.dtype)
    out = _im2col_conv(cat_pad[...], ws2_ref, W, Lr)
    o_ref[0] = out.astype(o_ref.dtype)


# ------------------------------ host-side helpers -----------------------------

def _pad_channels(x_nchw, cp):
    c = x_nchw.shape[1]
    if c == cp:
        return x_nchw
    return jnp.pad(x_nchw, ((0, 0), (0, cp - c), (0, 0), (0, 0)))


def _to_padded_flat(x_nchw, lanes):
    """(N, C, H, W) -> (N, C, lanes): zero-pad spatially, row-flatten, pad the
    lane axis to a full-vreg multiple so every tap slice is in-bounds."""
    N, C, H, W = x_nchw.shape
    xp = jnp.pad(x_nchw, ((0, 0), (0, 0), (1, 1), (1, 1)))
    flat = xp.reshape(N, C, (H + 2) * (W + 2))
    return jnp.pad(flat, ((0, 0), (0, 0), (0, lanes - flat.shape[-1])))


def _wmat(w, cin_pad):
    """HWIO (3,3,Cin,Cout) -> (Cout, 9*cin_pad) bf16 im2col weight matrix."""
    if w.shape[2] != cin_pad:
        w = jnp.pad(w, ((0, 0), (0, 0), (0, cin_pad - w.shape[2]), (0, 0)))
    cout = w.shape[-1]
    return jnp.transpose(w, (3, 0, 1, 2)).reshape(cout, -1).astype(jnp.bfloat16)


def _sep_weight(dw, pw):
    """Fold depthwise (3,3,1,C) + pointwise (C,Cout) into a full (3,3,C,Cout)."""
    return dw[:, :, 0, :, None] * pw[None, None, :, :]


def fold_bn(w, b, gamma, beta, mean, var, eps=1e-5):
    scale = gamma / jnp.sqrt(var + eps)
    return w * scale, (b - mean) * scale + beta


# ------------------------------ forward (2 pallas_calls) ----------------------

@jax.jit
def jup_concat_forward(params, x, skip):
    N, H, W, in_ch = x.shape
    H2, W2 = 2 * H, 2 * W
    c4 = 4 * in_ch
    cparams = pltpu.CompilerParams(dimension_semantics=("parallel",),
                                   vmem_limit_bytes=64 * 1024 * 1024)

    # ---- stage 1: SubPixelConvolutionalBlock (conv + bias + PReLU fused) -----
    cin_p = _rup8(in_ch)
    Wp1, Lo1, Lr1, Lp1 = _lane_dims(H, W)
    xin = _to_padded_flat(
        _pad_channels(jnp.transpose(x, (0, 3, 1, 2)), cin_p), Lp1
    ).astype(jnp.bfloat16)
    y = pl.pallas_call(
        functools.partial(_subpixel_kernel, W=W),
        out_shape=jax.ShapeDtypeStruct((N, c4, Lr1), jnp.bfloat16),
        grid=(N,),
        in_specs=[
            pl.BlockSpec(memory_space=pltpu.MemorySpace.SMEM),   # PReLU alpha
            pl.BlockSpec((1, cin_p, Lp1), lambda n: (n, 0, 0)),
            pl.BlockSpec((c4, 9 * cin_p), lambda n: (0, 0)),
            pl.BlockSpec((c4, 1), lambda n: (0, 0)),
        ],
        out_specs=pl.BlockSpec((1, c4, Lr1), lambda n: (n, 0, 0)),
        compiler_params=cparams,
    )(params["prelu_alpha"], xin, _wmat(params["sub_w"], cin_p),
      params["sub_b"].reshape(c4, 1))

    # PixelShuffle(2) + concat with skip: tiny bf16 layout glue between calls
    y = y[:, :, :Lo1].reshape(N, c4, H, Wp1)[:, :, :, :W]
    y = (y.reshape(N, in_ch, 2, 2, H, W)
           .transpose(0, 1, 4, 2, 5, 3).reshape(N, in_ch, H2, W2))
    skip_nchw = jnp.transpose(skip, (0, 3, 1, 2)).astype(jnp.bfloat16)
    outputs = jnp.concatenate([skip_nchw, y], axis=1)        # (N, 2*out_ch, H2, W2)

    # ---- stage 2: sep1 + conv_block2 + sep2 fused into ONE kernel ------------
    out_ch = params["sep1_pw"].shape[-1]
    c2 = outputs.shape[1]                                    # = 2 * out_ch
    c2p = _rup8(c2)
    cp = _rup8(out_ch)

    w1, b1 = fold_bn(params["cb_w1"], params["cb_b1"], params["bn1_gamma"],
                     params["bn1_beta"], params["bn1_mean"], params["bn1_var"])
    w2, b2 = fold_bn(params["cb_w2"], params["cb_b2"], params["bn2_gamma"],
                     params["bn2_beta"], params["bn2_mean"], params["bn2_var"])
    wsep1 = _sep_weight(params["sep1_dw"], params["sep1_pw"])
    wsep2 = _sep_weight(params["sep2_dw"], params["sep2_pw"])
    # merged LHS for matmul #1: sep1 and conv1 share the same input image
    wa = jnp.concatenate([wsep1, w1], axis=-1)               # (3,3,2oc,2oc)

    Wp2, Lo2, Lr2, Lp2 = _lane_dims(H2, W2)
    xin2 = _to_padded_flat(_pad_channels(outputs, c2p), Lp2)  # bf16

    wspec = lambda shape: pl.BlockSpec(shape, lambda n: (0, 0))
    out = pl.pallas_call(
        functools.partial(_fused_tail_kernel, H=H2, W=W2, out_ch=out_ch),
        out_shape=jax.ShapeDtypeStruct((N, out_ch, Lr2), jnp.float32),
        grid=(N,),
        in_specs=[
            pl.BlockSpec((1, c2p, Lp2), lambda n: (n, 0, 0)),
            wspec((2 * out_ch, 9 * c2p)),     # merged [sep1 ; conv1] weights
            wspec((out_ch, 1)),               # conv1 bias (BN folded)
            wspec((out_ch, 9 * cp)),          # conv2 weights (BN folded)
            wspec((out_ch, 1)),               # conv2 bias (BN folded)
            wspec((out_ch, 9 * c2p)),         # sep2 (dw*pw folded), one matmul
        ],
        out_specs=pl.BlockSpec((1, out_ch, Lr2), lambda n: (n, 0, 0)),
        scratch_shapes=[pltpu.VMEM((cp, Lp2), jnp.bfloat16),
                        pltpu.VMEM((c2p, Lp2), jnp.bfloat16)],
        compiler_params=cparams,
    )(xin2, _wmat(wa, c2p), b1.reshape(out_ch, 1),
      _wmat(w2, cp), b2.reshape(out_ch, 1), _wmat(wsep2, c2p))

    out = out[:, :, :Lo2].reshape(N, out_ch, H2, Wp2)[:, :, :, :W2]
    return jnp.transpose(out, (0, 2, 3, 1))                  # back to NHWC


# --------------------------------- parameters ---------------------------------

def init_params(key, in_ch, out_ch):
    ks = jax.random.split(key, 14)
    s = 0.1
    p = {}
    # SubPixelConvolutionalBlock: conv3x3 in->4*in (bias), PixelShuffle(2), PReLU
    p["sub_w"] = s * jax.random.normal(ks[0], (3, 3, in_ch, 4 * in_ch), jnp.float32)
    p["sub_b"] = s * jax.random.normal(ks[1], (4 * in_ch,), jnp.float32)
    p["prelu_alpha"] = jnp.array([0.25], jnp.float32)
    # SeparableConv2d #1: depthwise 3x3 (2*out ch) + pointwise 1x1 -> out, no bias
    p["sep1_dw"] = s * jax.random.normal(ks[2], (3, 3, 1, 2 * out_ch), jnp.float32)
    p["sep1_pw"] = s * jax.random.normal(ks[3], (2 * out_ch, out_ch), jnp.float32)
    # conv_block2: conv3x3(2*out->out,bias) BN ReLU conv3x3(out->out,bias) BN ReLU
    p["cb_w1"] = s * jax.random.normal(ks[4], (3, 3, 2 * out_ch, out_ch), jnp.float32)
    p["cb_b1"] = s * jax.random.normal(ks[5], (out_ch,), jnp.float32)
    p["bn1_gamma"] = 1.0 + 0.1 * jax.random.normal(ks[6], (out_ch,), jnp.float32)
    p["bn1_beta"] = 0.1 * jax.random.normal(ks[7], (out_ch,), jnp.float32)
    p["bn1_mean"] = jnp.zeros((out_ch,), jnp.float32)
    p["bn1_var"] = jnp.ones((out_ch,), jnp.float32)
    p["cb_w2"] = s * jax.random.normal(ks[8], (3, 3, out_ch, out_ch), jnp.float32)
    p["cb_b2"] = s * jax.random.normal(ks[9], (out_ch,), jnp.float32)
    p["bn2_gamma"] = 1.0 + 0.1 * jax.random.normal(ks[10], (out_ch,), jnp.float32)
    p["bn2_beta"] = 0.1 * jax.random.normal(ks[11], (out_ch,), jnp.float32)
    p["bn2_mean"] = jnp.zeros((out_ch,), jnp.float32)
    p["bn2_var"] = jnp.ones((out_ch,), jnp.float32)
    # SeparableConv2d #2: 2*out -> out
    p["sep2_dw"] = s * jax.random.normal(ks[12], (3, 3, 1, 2 * out_ch), jnp.float32)
    p["sep2_pw"] = s * jax.random.normal(ks[13], (2 * out_ch, out_ch), jnp.float32)
    return p


# ------------------------- pure-JAX reference (lax.conv) -----------------------

def pixel_shuffle_nhwc(x, r):
    # matches torch.nn.PixelShuffle channel ordering (c, i, j) with j fastest
    N, H, W, Crr = x.shape
    C = Crr // (r * r)
    x = x.reshape(N, H, W, C, r, r)
    x = jnp.transpose(x, (0, 1, 4, 2, 5, 3))
    return x.reshape(N, H * r, W * r, C)


def _conv3x3_ref(x, w, b):
    y = jax.lax.conv_general_dilated(
        x, w, window_strides=(1, 1), padding="SAME",
        dimension_numbers=("NHWC", "HWIO", "NHWC"))
    return y + b


def _sepconv_ref(x, wdw, wpw):
    C = x.shape[-1]
    y = jax.lax.conv_general_dilated(
        x, wdw, window_strides=(1, 1), padding="SAME",
        dimension_numbers=("NHWC", "HWIO", "NHWC"),
        feature_group_count=C)
    return jnp.einsum("nhwc,cd->nhwd", y, wpw)


def jup_concat_forward_ref(params, x, skip):
    alpha = params["prelu_alpha"][0]
    y = _conv3x3_ref(x, params["sub_w"], params["sub_b"])
    y = pixel_shuffle_nhwc(y, 2)
    y = jnp.where(y >= 0.0, y, alpha * y)     # PReLU after shuffle, PyTorch order
    outputs = jnp.concatenate([skip, y], axis=-1)
    residual = _sepconv_ref(outputs, params["sep1_dw"], params["sep1_pw"])
    w1, b1 = fold_bn(params["cb_w1"], params["cb_b1"], params["bn1_gamma"],
                     params["bn1_beta"], params["bn1_mean"], params["bn1_var"])
    o = jnp.maximum(_conv3x3_ref(outputs, w1, b1), 0.0)
    w2, b2 = fold_bn(params["cb_w2"], params["cb_b2"], params["bn2_gamma"],
                     params["bn2_beta"], params["bn2_mean"], params["bn2_var"])
    o = jnp.maximum(_conv3x3_ref(o, w2, b2), 0.0)
    o = jnp.concatenate([o, residual], axis=-1)
    return _sepconv_ref(o, params["sep2_dw"], params["sep2_pw"])


# ----------------------------------- main --------------------------------------

if __name__ == "__main__":
    in_ch, out_ch = 4, 4
    N, H, W = 2, 16, 16

    key = jax.random.PRNGKey(0)
    kx, ksk, kp = jax.random.split(key, 3)
    x = jax.random.normal(kx, (N, H, W, in_ch), jnp.float32)
    # skip channels so that concat([skip, up(x)]) has 2*out_ch channels
    skip_ch = 2 * out_ch - in_ch
    skip = jax.random.normal(ksk, (N, 2 * H, 2 * W, skip_ch), jnp.float32)

    params = init_params(kp, in_ch, out_ch)

    out = jax.block_until_ready(jup_concat_forward(params, x, skip))
    ref = jax.block_until_ready(jup_concat_forward_ref(params, x, skip))

    assert out.shape == (N, 2 * H, 2 * W, out_ch), out.shape
    max_err = float(jnp.max(jnp.abs(out - ref)))
    # f32 reference vs bf16-MXU kernel path (f32 accumulation): ~5e-3 expected.
    assert max_err < 2e-2, f"mismatch vs reference: {max_err}"
    print("KERNEL_OK")
</pallas_src>

<mosaic_0001>
module attributes {stable_mosaic.version = 11 : i64} {
  func.func @_subpixel_kernel(%arg0: i32, %arg1: memref<1xf32, #tpu.memory_space<smem>>, %arg2: memref<1x8x512xbf16, #tpu.memory_space<vmem>>, %arg3: memref<16x72xbf16, #tpu.memory_space<vmem>>, %arg4: memref<16x1xf32, #tpu.memory_space<vmem>>, %arg5: memref<1x16x384xbf16, #tpu.memory_space<vmem>>) attributes {dimension_semantics = [#tpu.dimension_semantics<parallel>], iteration_bounds = array<i64: 2>, scalar_prefetch = 0 : i64, scratch_operands = 0 : i64, tpu.core_type = #tpu.core_type<tc>, window_params = [{transform_indices = @transform_0, window_bounds = array<i64: 1>}, {transform_indices = @transform_1, window_bounds = array<i64: 1, 8, 512>}, {pipeline_mode = #tpu.pipeline_mode<synchronous>, transform_indices = @transform_2, window_bounds = array<i64: 16, 72>}, {pipeline_mode = #tpu.pipeline_mode<synchronous>, transform_indices = @transform_3, window_bounds = array<i64: 16, 1>}, {transform_indices = @transform_4, window_bounds = array<i64: 1, 16, 384>}]} {
    %c0 = arith.constant 0 : index
    %c0_0 = arith.constant 0 : index
    %c0_1 = arith.constant 0 : index
    %0 = vector.load %arg2[%c0, %c0_0, %c0_1] : memref<1x8x512xbf16, #tpu.memory_space<vmem>>, vector<1x8x512xbf16>
    %1 = vector.shape_cast %0 : vector<1x8x512xbf16> to vector<8x512xbf16>
    %2 = vector.extract_strided_slice %1 {offsets = [0, 0], sizes = [8, 384], strides = [1, 1]} : vector<8x512xbf16> to vector<8x384xbf16>
    %3 = vector.extract_strided_slice %1 {offsets = [0, 1], sizes = [8, 384], strides = [1, 1]} : vector<8x512xbf16> to vector<8x384xbf16>
    %4 = vector.extract_strided_slice %1 {offsets = [0, 2], sizes = [8, 384], strides = [1, 1]} : vector<8x512xbf16> to vector<8x384xbf16>
    %5 = vector.extract_strided_slice %1 {offsets = [0, 18], sizes = [8, 384], strides = [1, 1]} : vector<8x512xbf16> to vector<8x384xbf16>
    %6 = vector.extract_strided_slice %1 {offsets = [0, 19], sizes = [8, 384], strides = [1, 1]} : vector<8x512xbf16> to vector<8x384xbf16>
    %7 = vector.extract_strided_slice %1 {offsets = [0, 20], sizes = [8, 384], strides = [1, 1]} : vector<8x512xbf16> to vector<8x384xbf16>
    %8 = vector.extract_strided_slice %1 {offsets = [0, 36], sizes = [8, 384], strides = [1, 1]} : vector<8x512xbf16> to vector<8x384xbf16>
    %9 = vector.extract_strided_slice %1 {offsets = [0, 37], sizes = [8, 384], strides = [1, 1]} : vector<8x512xbf16> to vector<8x384xbf16>
    %10 = vector.extract_strided_slice %1 {offsets = [0, 38], sizes = [8, 384], strides = [1, 1]} : vector<8x512xbf16> to vector<8x384xbf16>
    %11 = tpu.concatenate %2, %3, %4, %5, %6, %7, %8, %9, %10 in 0 : vector<8x384xbf16>, vector<8x384xbf16>, vector<8x384xbf16>, vector<8x384xbf16>, vector<8x384xbf16>, vector<8x384xbf16>, vector<8x384xbf16>, vector<8x384xbf16>, vector<8x384xbf16> -> vector<72x384xbf16>
    %c0_2 = arith.constant 0 : index
    %c0_3 = arith.constant 0 : index
    %12 = vector.load %arg3[%c0_2, %c0_3] : memref<16x72xbf16, #tpu.memory_space<vmem>>, vector<16x72xbf16>
    %cst = arith.constant dense<0.000000e+00> : vector<16x384xf32>
    %13 = tpu.matmul %12, %11, %cst {dimension_numbers = #tpu.dot_dimension_numbers<[1], [0], [0], [1], [0, 0, 1, 1], [], []>} : vector<16x72xbf16>, vector<72x384xbf16>, vector<16x384xf32> -> vector<16x384xf32>
    %c0_4 = arith.constant 0 : index
    %c0_5 = arith.constant 0 : index
    %14 = vector.load %arg4[%c0_4, %c0_5] : memref<16x1xf32, #tpu.memory_space<vmem>>, vector<16x1xf32>
    %15 = vector.broadcast %14 : vector<16x1xf32> to vector<16x384xf32>
    %16 = arith.addf %13, %15 : vector<16x384xf32>
    %c0_6 = arith.constant 0 : index
    %17 = memref.load %arg1[%c0_6] : memref<1xf32, #tpu.memory_space<smem>>
    %cst_7 = arith.constant 0.000000e+00 : f32
    %18 = vector.broadcast %cst_7 : f32 to vector<16x384xf32>
    %19 = arith.cmpf oge, %16, %18 : vector<16x384xf32>
    %20 = vector.broadcast %17 : f32 to vector<16x384xf32>
    %21 = arith.mulf %20, %16 : vector<16x384xf32>
    %22 = arith.select %19, %16, %21 : vector<16x384xi1>, vector<16x384xf32>
    %23 = arith.truncf %22 : vector<16x384xf32> to vector<16x384xbf16>
    %c0_8 = arith.constant 0 : index
    %c0_9 = arith.constant 0 : index
    %c0_10 = arith.constant 0 : index
    %24 = vector.load %arg5[%c0_8, %c0_9, %c0_10] : memref<1x16x384xbf16, #tpu.memory_space<vmem>>, vector<1x16x384xbf16>
    %25 = vector.shape_cast %24 : vector<1x16x384xbf16> to vector<16x384xbf16>
    %26 = vector.shape_cast %23 : vector<16x384xbf16> to vector<1x16x384xbf16>
    tpu.vector_store %arg5[%c0_8, %c0_9, %c0_10], %26 {strides = array<i32>} : memref<1x16x384xbf16, #tpu.memory_space<vmem>>, vector<1x16x384xbf16>,
    return
  }
  func.func @transform_0(%arg0: i32) -> i32 {
    %c0_i32 = arith.constant 0 : i32
    %c0_i32_0 = arith.constant 0 : i32
    return %c0_i32 : i32
  }
  func.func @transform_1(%arg0: i32) -> (i32, i32, i32) {
    %c0_i32 = arith.constant 0 : i32
    %c0_i32_0 = arith.constant 0 : i32
    %c0_i32_1 = arith.constant 0 : i32
    return %arg0, %c0_i32, %c0_i32_0 : i32, i32, i32
  }
  func.func @transform_2(%arg0: i32) -> (i32, i32) {
    %c0_i32 = arith.constant 0 : i32
    %c0_i32_0 = arith.constant 0 : i32
    %c0_i32_1 = arith.constant 0 : i32
    return %c0_i32, %c0_i32_0 : i32, i32
  }
  func.func @transform_3(%arg0: i32) -> (i32, i32) {
    %c0_i32 = arith.constant 0 : i32
    %c0_i32_0 = arith.constant 0 : i32
    %c0_i32_1 = arith.constant 0 : i32
    return %c0_i32, %c0_i32_0 : i32, i32
  }
  func.func @transform_4(%arg0: i32) -> (i32, i32, i32) {
    %c0_i32 = arith.constant 0 : i32
    %c0_i32_0 = arith.constant 0 : i32
    %c0_i32_1 = arith.constant 0 : i32
    return %arg0, %c0_i32, %c0_i32_0 : i32, i32, i32
  }
}

module attributes {stable_mosaic.version = 11 : i64} {
  func.func @_fused_tail_kernel(%arg0: i32, %arg1: memref<1x8x1280xbf16, #tpu.memory_space<vmem>>, %arg2: memref<8x72xbf16, #tpu.memory_space<vmem>>, %arg3: memref<4x1xf32, #tpu.memory_space<vmem>>, %arg4: memref<4x72xbf16, #tpu.memory_space<vmem>>, %arg5: memref<4x1xf32, #tpu.memory_space<vmem>>, %arg6: memref<4x72xbf16, #tpu.memory_space<vmem>>, %arg7: memref<1x4x1152xf32, #tpu.memory_space<vmem>>, %arg8: memref<8x1280xbf16, #tpu.memory_space<vmem>>, %arg9: memref<8x1280xbf16, #tpu.memory_space<vmem>>) attributes {dimension_semantics = [#tpu.dimension_semantics<parallel>], iteration_bounds = array<i64: 2>, scalar_prefetch = 0 : i64, scratch_operands = 2 : i64, tpu.core_type = #tpu.core_type<tc>, window_params = [{transform_indices = @transform_0, window_bounds = array<i64: 1, 8, 1280>}, {pipeline_mode = #tpu.pipeline_mode<synchronous>, transform_indices = @transform_1, window_bounds = array<i64: 8, 72>}, {pipeline_mode = #tpu.pipeline_mode<synchronous>, transform_indices = @transform_2, window_bounds = array<i64: 4, 1>}, {pipeline_mode = #tpu.pipeline_mode<synchronous>, transform_indices = @transform_3, window_bounds = array<i64: 4, 72>}, {pipeline_mode = #tpu.pipeline_mode<synchronous>, transform_indices = @transform_4, window_bounds = array<i64: 4, 1>}, {pipeline_mode = #tpu.pipeline_mode<synchronous>, transform_indices = @transform_5, window_bounds = array<i64: 4, 72>}, {transform_indices = @transform_6, window_bounds = array<i64: 1, 4, 1152>}]} {
    %0 = tpu.iota {dimensions = array<i32: 1>} : vector<1x1152xi32>
    %c34_i32 = arith.constant 34 : i32
    %c0_i32 = arith.constant 0 : i32
    %1 = arith.cmpi eq, %c34_i32, %c0_i32 : i32
    %c1_i32 = arith.constant 1 : i32
    %2 = arith.select %1, %c1_i32, %c34_i32 : i32
    %3 = vector.broadcast %2 : i32 to vector<1x1152xi32>
    %4 = arith.remsi %0, %3 : vector<1x1152xi32>
    %c0_i32_0 = arith.constant 0 : i32
    %5 = vector.broadcast %c0_i32_0 : i32 to vector<1x1152xi32>
    %6 = arith.cmpi ne, %4, %5 : vector<1x1152xi32>
    %c0_i32_1 = arith.constant 0 : i32
    %7 = vector.broadcast %c0_i32_1 : i32 to vector<1x1152xi32>
    %8 = arith.cmpi slt, %4, %7 : vector<1x1152xi32>
    %c0_i32_2 = arith.constant 0 : i32
    %9 = arith.cmpi slt, %2, %c0_i32_2 : i32
    %10 = vector.broadcast %9 : i1 to vector<1x1152xi1>
    %11 = vector.broadcast %10 : vector<1x1152xi1> to vector<1x1152xi1>
    %12 = arith.xori %8, %11 : vector<1x1152xi1>
    %13 = arith.andi %12, %6 : vector<1x1152xi1>
    %14 = vector.broadcast %2 : i32 to vector<1x1152xi32>
    %15 = arith.addi %4, %14 : vector<1x1152xi32>
    %16 = arith.select %13, %15, %4 : vector<1x1152xi1>, vector<1x1152xi32>
    %c32_i32 = arith.constant 32 : i32
    %17 = vector.broadcast %c32_i32 : i32 to vector<1x1152xi32>
    %18 = arith.cmpi slt, %16, %17 : vector<1x1152xi32>
    %c1088_i32 = arith.constant 1088 : i32
    %19 = vector.broadcast %c1088_i32 : i32 to vector<1x1152xi32>
    %20 = arith.cmpi slt, %0, %19 : vector<1x1152xi32>
    %21 = arith.andi %18, %20 : vector<1x1152xi1>
    %22 = arith.extui %21 : vector<1x1152xi1> to vector<1x1152xi32>
    %23 = arith.sitofp %22 : vector<1x1152xi32> to vector<1x1152xf32>
    %c0 = arith.constant 0 : index
    %c0_3 = arith.constant 0 : index
    %c0_4 = arith.constant 0 : index
    %24 = vector.load %arg1[%c0, %c0_3, %c0_4] : memref<1x8x1280xbf16, #tpu.memory_space<vmem>>, vector<1x8x1280xbf16>
    %25 = vector.shape_cast %24 : vector<1x8x1280xbf16> to vector<8x1280xbf16>
    %26 = vector.extract_strided_slice %25 {offsets = [0, 0], sizes = [8, 1152], strides = [1, 1]} : vector<8x1280xbf16> to vector<8x1152xbf16>
    %27 = vector.extract_strided_slice %25 {offsets = [0, 1], sizes = [8, 1152], strides = [1, 1]} : vector<8x1280xbf16> to vector<8x1152xbf16>
    %28 = vector.extract_strided_slice %25 {offsets = [0, 2], sizes = [8, 1152], strides = [1, 1]} : vector<8x1280xbf16> to vector<8x1152xbf16>
    %29 = vector.extract_strided_slice %25 {offsets = [0, 34], sizes = [8, 1152], strides = [1, 1]} : vector<8x1280xbf16> to vector<8x1152xbf16>
    %30 = vector.extract_strided_slice %25 {offsets = [0, 35], sizes = [8, 1152], strides = [1, 1]} : vector<8x1280xbf16> to vector<8x1152xbf16>
    %31 = vector.extract_strided_slice %25 {offsets = [0, 36], sizes = [8, 1152], strides = [1, 1]} : vector<8x1280xbf16> to vector<8x1152xbf16>
    %32 = vector.extract_strided_slice %25 {offsets = [0, 68], sizes = [8, 1152], strides = [1, 1]} : vector<8x1280xbf16> to vector<8x1152xbf16>
    %33 = vector.extract_strided_slice %25 {offsets = [0, 69], sizes = [8, 1152], strides = [1, 1]} : vector<8x1280xbf16> to vector<8x1152xbf16>
    %34 = vector.extract_strided_slice %25 {offsets = [0, 70], sizes = [8, 1152], strides = [1, 1]} : vector<8x1280xbf16> to vector<8x1152xbf16>
    %35 = tpu.concatenate %26, %27, %28, %29, %30, %31, %32, %33, %34 in 0 : vector<8x1152xbf16>, vector<8x1152xbf16>, vector<8x1152xbf16>, vector<8x1152xbf16>, vector<8x1152xbf16>, vector<8x1152xbf16>, vector<8x1152xbf16>, vector<8x1152xbf16>, vector<8x1152xbf16> -> vector<72x1152xbf16>
    %c0_5 = arith.constant 0 : index
    %c0_6 = arith.constant 0 : index
    %36 = vector.load %arg2[%c0_5, %c0_6] : memref<8x72xbf16, #tpu.memory_space<vmem>>, vector<8x72xbf16>
    %cst = arith.constant dense<0.000000e+00> : vector<8x1152xf32>
    %37 = tpu.matmul %36, %35, %cst {dimension_numbers = #tpu.dot_dimension_numbers<[1], [0], [0], [1], [0, 0, 1, 1], [], []>} : vector<8x72xbf16>, vector<72x1152xbf16>, vector<8x1152xf32> -> vector<8x1152xf32>
    %38 = vector.extract_strided_slice %37 {offsets = [0, 0], sizes = [4, 1152], strides = [1, 1]} : vector<8x1152xf32> to vector<4x1152xf32>
    %39 = vector.extract_strided_slice %37 {offsets = [4, 0], sizes = [4, 1152], strides = [1, 1]} : vector<8x1152xf32> to vector<4x1152xf32>
    %c0_7 = arith.constant 0 : index
    %c0_8 = arith.constant 0 : index
    %40 = vector.load %arg3[%c0_7, %c0_8] : memref<4x1xf32, #tpu.memory_space<vmem>>, vector<4x1xf32>
    %41 = vector.broadcast %40 : vector<4x1xf32> to vector<4x1152xf32>
    %42 = arith.addf %39, %41 : vector<4x1152xf32>
    %cst_9 = arith.constant 0.000000e+00 : f32
    %43 = vector.broadcast %cst_9 : f32 to vector<4x1152xf32>
    %44 = arith.maximumf %42, %43 : vector<4x1152xf32>
    %cst_10 = arith.constant 0.000000e+00 : f32
    %45 = vector.broadcast %cst_10 : f32 to vector<4x35xf32>
    %46 = vector.broadcast %23 : vector<1x1152xf32> to vector<4x1152xf32>
    %47 = arith.mulf %44, %46 : vector<4x1152xf32>
    %cst_11 = arith.constant 0.000000e+00 : f32
    %48 = vector.broadcast %cst_11 : f32 to vector<4x93xf32>
    %49 = tpu.concatenate %45, %47, %48 in 1 : vector<4x35xf32>, vector<4x1152xf32>, vector<4x93xf32> -> vector<4x1280xf32>
    %cst_12 = arith.constant 0.000000e+00 : f32
    %50 = vector.broadcast %cst_12 : f32 to vector<4x1280xf32>
    %51 = tpu.concatenate %49, %50 in 0 : vector<4x1280xf32>, vector<4x1280xf32> -> vector<8x1280xf32>
    %52 = arith.truncf %51 : vector<8x1280xf32> to vector<8x1280xbf16>
    %c0_13 = arith.constant 0 : index
    %c0_14 = arith.constant 0 : index
    %53 = vector.load %arg8[%c0_13, %c0_14] : memref<8x1280xbf16, #tpu.memory_space<vmem>>, vector<8x1280xbf16>
    tpu.vector_store %arg8[%c0_13, %c0_14], %52 {strides = array<i32>} : memref<8x1280xbf16, #tpu.memory_space<vmem>>, vector<8x1280xbf16>,
    %c0_15 = arith.constant 0 : index
    %c0_16 = arith.constant 0 : index
    %54 = vector.load %arg8[%c0_15, %c0_16] : memref<8x1280xbf16, #tpu.memory_space<vmem>>, vector<8x1280xbf16>
    %55 = vector.extract_strided_slice %54 {offsets = [0, 0], sizes = [8, 1152], strides = [1, 1]} : vector<8x1280xbf16> to vector<8x1152xbf16>
    %56 = vector.extract_strided_slice %54 {offsets = [0, 1], sizes = [8, 1152], strides = [1, 1]} : vector<8x1280xbf16> to vector<8x1152xbf16>
    %57 = vector.extract_strided_slice %54 {offsets = [0, 2], sizes = [8, 1152], strides = [1, 1]} : vector<8x1280xbf16> to vector<8x1152xbf16>
    %58 = vector.extract_strided_slice %54 {offsets = [0, 34], sizes = [8, 1152], strides = [1, 1]} : vector<8x1280xbf16> to vector<8x1152xbf16>
    %59 = vector.extract_strided_slice %54 {offsets = [0, 35], sizes = [8, 1152], strides = [1, 1]} : vector<8x1280xbf16> to vector<8x1152xbf16>
    %60 = vector.extract_strided_slice %54 {offsets = [0, 36], sizes = [8, 1152], strides = [1, 1]} : vector<8x1280xbf16> to vector<8x1152xbf16>
    %61 = vector.extract_strided_slice %54 {offsets = [0, 68], sizes = [8, 1152], strides = [1, 1]} : vector<8x1280xbf16> to vector<8x1152xbf16>
    %62 = vector.extract_strided_slice %54 {offsets = [0, 69], sizes = [8, 1152], strides = [1, 1]} : vector<8x1280xbf16> to vector<8x1152xbf16>
    %63 = vector.extract_strided_slice %54 {offsets = [0, 70], sizes = [8, 1152], strides = [1, 1]} : vector<8x1280xbf16> to vector<8x1152xbf16>
    %64 = tpu.concatenate %55, %56, %57, %58, %59, %60, %61, %62, %63 in 0 : vector<8x1152xbf16>, vector<8x1152xbf16>, vector<8x1152xbf16>, vector<8x1152xbf16>, vector<8x1152xbf16>, vector<8x1152xbf16>, vector<8x1152xbf16>, vector<8x1152xbf16>, vector<8x1152xbf16> -> vector<72x1152xbf16>
    %c0_17 = arith.constant 0 : index
    %c0_18 = arith.constant 0 : index
    %65 = vector.load %arg4[%c0_17, %c0_18] : memref<4x72xbf16, #tpu.memory_space<vmem>>, vector<4x72xbf16>
    %cst_19 = arith.constant dense<0.000000e+00> : vector<4x1152xf32>
    %66 = tpu.matmul %65, %64, %cst_19 {dimension_numbers = #tpu.dot_dimension_numbers<[1], [0], [0], [1], [0, 0, 1, 1], [], []>} : vector<4x72xbf16>, vector<72x1152xbf16>, vector<4x1152xf32> -> vector<4x1152xf32>
    %c0_20 = arith.constant 0 : index
    %c0_21 = arith.constant 0 : index
    %67 = vector.load %arg5[%c0_20, %c0_21] : memref<4x1xf32, #tpu.memory_space<vmem>>, vector<4x1xf32>
    %68 = vector.broadcast %67 : vector<4x1xf32> to vector<4x1152xf32>
    %69 = arith.addf %66, %68 : vector<4x1152xf32>
    %cst_22 = arith.constant 0.000000e+00 : f32
    %70 = vector.broadcast %cst_22 : f32 to vector<4x1152xf32>
    %71 = arith.maximumf %69, %70 : vector<4x1152xf32>
    %72 = tpu.concatenate %71, %38 in 0 : vector<4x1152xf32>, vector<4x1152xf32> -> vector<8x1152xf32>
    %cst_23 = arith.constant 0.000000e+00 : f32
    %73 = vector.broadcast %cst_23 : f32 to vector<8x35xf32>
    %74 = vector.broadcast %23 : vector<1x1152xf32> to vector<8x1152xf32>
    %75 = arith.mulf %72, %74 : vector<8x1152xf32>
    %cst_24 = arith.constant 0.000000e+00 : f32
    %76 = vector.broadcast %cst_24 : f32 to vector<8x93xf32>
    %77 = tpu.concatenate %73, %75, %76 in 1 : vector<8x35xf32>, vector<8x1152xf32>, vector<8x93xf32> -> vector<8x1280xf32>
    %78 = arith.truncf %77 : vector<8x1280xf32> to vector<8x1280xbf16>
    %c0_25 = arith.constant 0 : index
    %c0_26 = arith.constant 0 : index
    %79 = vector.load %arg9[%c0_25, %c0_26] : memref<8x1280xbf16, #tpu.memory_space<vmem>>, vector<8x1280xbf16>
    tpu.vector_store %arg9[%c0_25, %c0_26], %78 {strides = array<i32>} : memref<8x1280xbf16, #tpu.memory_space<vmem>>, vector<8x1280xbf16>,
    %c0_27 = arith.constant 0 : index
    %c0_28 = arith.constant 0 : index
    %80 = vector.load %arg9[%c0_27, %c0_28] : memref<8x1280xbf16, #tpu.memory_space<vmem>>, vector<8x1280xbf16>
    %81 = vector.extract_strided_slice %80 {offsets = [0, 0], sizes = [8, 1152], strides = [1, 1]} : vector<8x1280xbf16> to vector<8x1152xbf16>
    %82 = vector.extract_strided_slice %80 {offsets = [0, 1], sizes = [8, 1152], strides = [1, 1]} : vector<8x1280xbf16> to vector<8x1152xbf16>
    %83 = vector.extract_strided_slice %80 {offsets = [0, 2], sizes = [8, 1152], strides = [1, 1]} : vector<8x1280xbf16> to vector<8x1152xbf16>
    %84 = vector.extract_strided_slice %80 {offsets = [0, 34], sizes = [8, 1152], strides = [1, 1]} : vector<8x1280xbf16> to vector<8x1152xbf16>
    %85 = vector.extract_strided_slice %80 {offsets = [0, 35], sizes = [8, 1152], strides = [1, 1]} : vector<8x1280xbf16> to vector<8x1152xbf16>
    %86 = vector.extract_strided_slice %80 {offsets = [0, 36], sizes = [8, 1152], strides = [1, 1]} : vector<8x1280xbf16> to vector<8x1152xbf16>
    %87 = vector.extract_strided_slice %80 {offsets = [0, 68], sizes = [8, 1152], strides = [1, 1]} : vector<8x1280xbf16> to vector<8x1152xbf16>
    %88 = vector.extract_strided_slice %80 {offsets = [0, 69], sizes = [8, 1152], strides = [1, 1]} : vector<8x1280xbf16> to vector<8x1152xbf16>
    %89 = vector.extract_strided_slice %80 {offsets = [0, 70], sizes = [8, 1152], strides = [1, 1]} : vector<8x1280xbf16> to vector<8x1152xbf16>
    %90 = tpu.concatenate %81, %82, %83, %84, %85, %86, %87, %88, %89 in 0 : vector<8x1152xbf16>, vector<8x1152xbf16>, vector<8x1152xbf16>, vector<8x1152xbf16>, vector<8x1152xbf16>, vector<8x1152xbf16>, vector<8x1152xbf16>, vector<8x1152xbf16>, vector<8x1152xbf16> -> vector<72x1152xbf16>
    %c0_29 = arith.constant 0 : index
    %c0_30 = arith.constant 0 : index
    %91 = vector.load %arg6[%c0_29, %c0_30] : memref<4x72xbf16, #tpu.memory_space<vmem>>, vector<4x72xbf16>
    %cst_31 = arith.constant dense<0.000000e+00> : vector<4x1152xf32>
    %92 = tpu.matmul %91, %90, %cst_31 {dimension_numbers = #tpu.dot_dimension_numbers<[1], [0], [0], [1], [0, 0, 1, 1], [], []>} : vector<4x72xbf16>, vector<72x1152xbf16>, vector<4x1152xf32> -> vector<4x1152xf32>
    %c0_32 = arith.constant 0 : index
    %c0_33 = arith.constant 0 : index
    %c0_34 = arith.constant 0 : index
    %93 = vector.load %arg7[%c0_32, %c0_33, %c0_34] : memref<1x4x1152xf32, #tpu.memory_space<vmem>>, vector<1x4x1152xf32>
    %94 = vector.shape_cast %93 : vector<1x4x1152xf32> to vector<4x1152xf32>
    %95 = vector.shape_cast %92 : vector<4x1152xf32> to vector<1x4x1152xf32>
    tpu.vector_store %arg7[%c0_32, %c0_33, %c0_34], %95 {strides = array<i32>} : memref<1x4x1152xf32, #tpu.memory_space<vmem>>, vector<1x4x1152xf32>,
    return
  }
  func.func @transform_0(%arg0: i32) -> (i32, i32, i32) {
    %c0_i32 = arith.constant 0 : i32
    %c0_i32_0 = arith.constant 0 : i32
    %c0_i32_1 = arith.constant 0 : i32
    return %arg0, %c0_i32, %c0_i32_0 : i32, i32, i32
  }
  func.func @transform_1(%arg0: i32) -> (i32, i32) {
    %c0_i32 = arith.constant 0 : i32
    %c0_i32_0 = arith.constant 0 : i32
    %c0_i32_1 = arith.constant 0 : i32
    return %c0_i32, %c0_i32_0 : i32, i32
  }
  func.func @transform_2(%arg0: i32) -> (i32, i32) {
    %c0_i32 = arith.constant 0 : i32
    %c0_i32_0 = arith.constant 0 : i32
    %c0_i32_1 = arith.constant 0 : i32
    return %c0_i32, %c0_i32_0 : i32, i32
  }
  func.func @transform_3(%arg0: i32) -> (i32, i32) {
    %c0_i32 = arith.constant 0 : i32
    %c0_i32_0 = arith.constant 0 : i32
    %c0_i32_1 = arith.constant 0 : i32
    return %c0_i32, %c0_i32_0 : i32, i32
  }
  func.func @transform_4(%arg0: i32) -> (i32, i32) {
    %c0_i32 = arith.constant 0 : i32
    %c0_i32_0 = arith.constant 0 : i32
    %c0_i32_1 = arith.constant 0 : i32
    return %c0_i32, %c0_i32_0 : i32, i32
  }
  func.func @transform_5(%arg0: i32) -> (i32, i32) {
    %c0_i32 = arith.constant 0 : i32
    %c0_i32_0 = arith.constant 0 : i32
    %c0_i32_1 = arith.constant 0 : i32
    return %c0_i32, %c0_i32_0 : i32, i32
  }
  func.func @transform_6(%arg0: i32) -> (i32, i32, i32) {
    %c0_i32 = arith.constant 0 : i32
    %c0_i32_0 = arith.constant 0 : i32
    %c0_i32_1 = arith.constant 0 : i32
    return %arg0, %c0_i32, %c0_i32_0 : i32, i32, i32
  }
}

</mosaic_0001>

<llo_original>
// kernel: jup_concat_forward.2
$region0: #{jup_concat_forward.2}
  #allocation0 [shape = 'u32[]', space=smem, size = 0x4, offset = 0x4, fixed_abs, tag = 'smem constant byte address 0x4 - core index']
  #allocation1 [shape = 'u32[144,128]{1,0:T(1,128)}', space=vmem, size = 0x12000, scoped, tag = 'internal scratch']
  #allocation2 [shape = 'f32[1]{0:T(128)S(6)}', space=smem, size = 0x200, scoped, tag = 'scoped memory for jup_concat_forward.2']
  %s0 = inlined_call_operand.<no memory space> [shape: f32[1], index: 0, kind: input, shape index: {}]
  %s1 = inlined_call_operand.vmem [shape: bf16[2,8,512], index: 1, kind: input, shape index: {}]
  %s2 = inlined_call_operand.vmem [shape: bf16[16,72], index: 2, kind: input, shape index: {}]
  %s3 = inlined_call_operand.vmem [shape: f32[16,1], index: 3, kind: input, shape index: {}]
  %s4 = inlined_call_operand.vmem [shape: bf16[2,16,384], index: 4, kind: output, shape index: {}]
  %s5 = sld [smem:[#allocation0]]
  $region49: #{jup_concat_forward.2} parent=0
    _
  %s7 = ssub.s32 1, %s5
  %s8 = scalar_select 0, %s7, %s5
  %9 = sst [smem:[#allocation2]] %s0
  loop: start=0, step=1, limit=4
  $region2: #{jup_concat_forward.2} parent=0 // loop_pre_header
    _
  $region3: #{jup_concat_forward.2} parent=0 // loop_header
    %s11 = sphi 0, %s15
    %p12 = scmp.ge.s32.totalorder %s11, 4
    %s19 = sphi 0, %s19
    %s21 = sphi 0, %s19
    %s22 = sphi 0, %s21
    %s36 = sphi 0, %s22
    %s42 = sphi 0, %s44
    %s45 = sphi 0, %s42
    %s46 = sphi 0, %s45
    %s62 = sphi 0, %s46
    %s66 = sphi 0, %s66
    %s68 = sphi 0, %s66
    %s69 = sphi 0, %s68
    %s83 = sphi 0, %s69
    %s87 = sphi 0, %s87
    %s89 = sphi 0, %s87
    %s90 = sphi 0, %s89
    %s104 = sphi 0, %s90
    %s110 = sphi 0, %s112
    %s113 = sphi 0, %s110
    %s114 = sphi 0, %s113
    %s130 = sphi 0, %s114
  $region4: #{jup_concat_forward.2} parent=0 // loop_header_branch
    %14 = sbr.rel (%p12) target = $region8
  $region5: #{jup_concat_forward.2} parent=0 // loop_body
    %s16 = ssub.s32 %s11, 1
    %s17 = ssub.s32 %s11, 2
    %s18 = sadd.s32 %s11, 1
    %s20 = sadd.s32 %s19, 1
    %p23 = scmp.eq.s32.totalorder %s11, 1
    %p24 = scmp.ne.s32.totalorder %s19, %s21
    %p25 = scmp.eq.s32.totalorder %s11, 0
    %p26 = por %p24, %p25
    %p27 = scmp.ne.s32.totalorder %s19, %s21
    %p28 = scmp.eq.s32.totalorder %s16, 1
    %p29 = por %p27, %p28
    %p30 = scmp.ne.s32.totalorder %s21, %s22
    %p31 = scmp.eq.s32.totalorder %s16, 0
    %p32 = por %p30, %p31
    %p33 = scmp.ne.s32.totalorder %s21, %s22
    %p34 = scmp.eq.s32.totalorder %s17, 1
    %p35 = por %p33, %p34
    %p37 = scmp.ne.s32.totalorder %s22, %s36
    %p38 = scmp.eq.s32.totalorder %s17, 0
    %p39 = por %p37, %p38
    %s40 = ssub.s32 %s11, %s18
    %p41 = scmp.eq.s32.totalorder %s40, 0
    %s43 = sadd.s32 %s42, 1
    %s44 = scalar_select %p41, %s42, %s43
    %p47 = pneg %p41
    %p48 = scmp.eq.s32.totalorder %s11, 1
    %p49 = por %p47, %p48
    %p50 = scmp.ne.s32.totalorder %s42, %s45
    %p51 = scmp.eq.s32.totalorder %s11, 0
    %p52 = por %p50, %p51
    %p53 = scmp.ne.s32.totalorder %s42, %s45
    %p54 = scmp.eq.s32.totalorder %s16, 1
    %p55 = por %p53, %p54
    %p56 = scmp.ne.s32.totalorder %s45, %s46
    %p57 = scmp.eq.s32.totalorder %s16, 0
    %p58 = por %p56, %p57
    %p59 = scmp.ne.s32.totalorder %s45, %s46
    %p60 = scmp.eq.s32.totalorder %s17, 1
    %p61 = por %p59, %p60
    %p63 = scmp.ne.s32.totalorder %s46, %s62
    %p64 = scmp.eq.s32.totalorder %s17, 0
    %p65 = por %p63, %p64
    %s67 = sadd.s32 %s66, 1
    %p70 = scmp.eq.s32.totalorder %s11, 1
    %p71 = scmp.ne.s32.totalorder %s66, %s68
    %p72 = scmp.eq.s32.totalorder %s11, 0
    %p73 = por %p71, %p72
    %p74 = scmp.ne.s32.totalorder %s66, %s68
    %p75 = scmp.eq.s32.totalorder %s16, 1
    %p76 = por %p74, %p75
    %p77 = scmp.ne.s32.totalorder %s68, %s69
    %p78 = scmp.eq.s32.totalorder %s16, 0
    %p79 = por %p77, %p78
    %p80 = scmp.ne.s32.totalorder %s68, %s69
    %p81 = scmp.eq.s32.totalorder %s17, 1
    %p82 = por %p80, %p81
    %p84 = scmp.ne.s32.totalorder %s69, %s83
    %p85 = scmp.eq.s32.totalorder %s17, 0
    %p86 = por %p84, %p85
    %s88 = sadd.s32 %s87, 1
    %p91 = scmp.eq.s32.totalorder %s11, 1
    %p92 = scmp.ne.s32.totalorder %s87, %s89
    %p93 = scmp.eq.s32.totalorder %s11, 0
    %p94 = por %p92, %p93
    %p95 = scmp.ne.s32.totalorder %s87, %s89
    %p96 = scmp.eq.s32.totalorder %s16, 1
    %p97 = por %p95, %p96
    %p98 = scmp.ne.s32.totalorder %s89, %s90
    %p99 = scmp.eq.s32.totalorder %s16, 0
    %p100 = por %p98, %p99
    %p101 = scmp.ne.s32.totalorder %s89, %s90
    %p102 = scmp.eq.s32.totalorder %s17, 1
    %p103 = por %p101, %p102
    %p105 = scmp.ne.s32.totalorder %s90, %s104
    %p106 = scmp.eq.s32.totalorder %s17, 0
    %p107 = por %p105, %p106
    %s108 = ssub.s32 %s11, %s18
    %p109 = scmp.eq.s32.totalorder %s108, 0
    %s111 = sadd.s32 %s110, 1
    %s112 = scalar_select %p109, %s110, %s111
    %p115 = pneg %p109
    %p116 = scmp.eq.s32.totalorder %s11, 1
    %p117 = por %p115, %p116
    %p118 = scmp.ne.s32.totalorder %s110, %s113
    %p119 = scmp.eq.s32.totalorder %s11, 0
    %p120 = por %p118, %p119
    %p121 = scmp.ne.s32.totalorder %s110, %s113
    %p122 = scmp.eq.s32.totalorder %s16, 1
    %p123 = por %p121, %p122
    %p124 = scmp.ne.s32.totalorder %s113, %s114
    %p125 = scmp.eq.s32.totalorder %s16, 0
    %p126 = por %p124, %p125
    %p127 = scmp.ne.s32.totalorder %s113, %s114
    %p128 = scmp.eq.s32.totalorder %s17, 1
    %p129 = por %p127, %p128
    %p131 = scmp.ne.s32.totalorder %s114, %s130
    %p132 = scmp.eq.s32.totalorder %s17, 0
    %p133 = por %p131, %p132
    %p134 = scmp.le.s32.totalorder 1, %s11
    %p135 = scmp.lt.s32.totalorder %s11, 3
    %p136 = pnand %p134, %p135
    %p137 = pneg %p136
    // Predicated region
    $region9: #{jup_concat_forward.2} parent=5 // pred_check
      _
    $region10: #{jup_concat_forward.2} parent=5 // pred_check_branch
      %139 = sbr.rel (%p136) target = $region12
    $region11: #{jup_concat_forward.2} parent=5 // pred_region
      %s140 = ssub.s32 %s11, 1
      // Predicated region
      $region13: #{jup_concat_forward.2} parent=11 // pred_check
        %p141 = pneg %p32
      $region14: #{jup_concat_forward.2} parent=11 // pred_check_branch
        %143 = sbr.rel (%p141) target = $region16
      $region15: #{jup_concat_forward.2} parent=11 // pred_region
        _
      $region16: #{jup_concat_forward.2} parent=11 // pred_fallthru
        _
      // Predicated region
      $region17: #{jup_concat_forward.2} parent=11 // pred_check
        %p144 = pneg %p79
      $region18: #{jup_concat_forward.2} parent=11 // pred_check_branch
        %146 = sbr.rel (%p144) target = $region20
      $region19: #{jup_concat_forward.2} parent=11 // pred_region
        _
      $region20: #{jup_concat_forward.2} parent=11 // pred_fallthru
        _
      // Predicated region
      $region21: #{jup_concat_forward.2} parent=11 // pred_check
        %p147 = pneg %p100
      $region22: #{jup_concat_forward.2} parent=11 // pred_check_branch
        %149 = sbr.rel (%p147) target = $region24
      $region23: #{jup_concat_forward.2} parent=11 // pred_region
        _
      $region24: #{jup_concat_forward.2} parent=11 // pred_fallthru
        _
    $region12: #{jup_concat_forward.2} parent=5 // pred_fallthru
      _
    %p150 = scmp.lt.s32.totalorder %s11, 2
    // Predicated region
    $region25: #{jup_concat_forward.2} parent=5 // pred_check
      %p151 = pneg %p150
    $region26: #{jup_concat_forward.2} parent=5 // pred_check_branch
      %153 = sbr.rel (%p151) target = $region28
    $region27: #{jup_concat_forward.2} parent=5 // pred_region
      // Predicated region
      $region29: #{jup_concat_forward.2} parent=27 // pred_check
        %p154 = pneg %p52
      $region30: #{jup_concat_forward.2} parent=27 // pred_check_branch
        %156 = sbr.rel (%p154) target = $region32
      $region31: #{jup_concat_forward.2} parent=27 // pred_region
        %p157 = scmp.lt.s32.totalorder %s11, 1
        %s158 = scalar_select %p157, %s11, 1
        %s159 = smul.addr %s158, 4
        %s160 = smul.addr %s159, 4
        %s161 = scalar_lea.vmem %s1, %s160
      $region32: #{jup_concat_forward.2} parent=27 // pred_fallthru
        _
    $region28: #{jup_concat_forward.2} parent=5 // pred_fallthru
      _
    %p162 = scmp.le.s32.totalorder 1, %s11
    %p163 = scmp.lt.s32.totalorder %s11, 3
    %p164 = pnand %p162, %p163
    %p165 = pneg %p164
    // Predicated region
    $region33: #{jup_concat_forward.2} parent=5 // pred_check
      _
    $region34: #{jup_concat_forward.2} parent=5 // pred_check_branch
      %167 = sbr.rel (%p164) target = $region36
    $region35: #{jup_concat_forward.2} parent=5 // pred_region
      %s168 = ssub.s32 %s11, 1
      %p169 = pneg %p32
      %p170 = pneg %p29
      %p171 = scmp.lt.s32.totalorder %s16, 1
      %s172 = scalar_select %p171, %s16, 1
      %s173 = smul.addr %s172, 4
      %s174 = smul.addr %s173, 4
      %s175 = scalar_lea.vmem %s1, %s174
      %p176 = pneg %p58
      %p177 = pneg %p55
      %p178 = pneg %p79
      %p179 = pneg %p76
      %p180 = pneg %p100
      %p181 = pneg %p97
      %p182 = pneg %p126
      %p183 = pneg %p123
      %p184 = scmp.lt.s32.totalorder %s16, 1
      %s185 = scalar_select %p184, %s16, 1
      %s186 = smul.addr %s185, 6
      %s187 = smul.addr %s186, 4
      %s188 = scalar_lea.vmem %s4, %s187
      %p189 = scmp.lt.s32.totalorder %s16, 1
      %s190 = scalar_select %p189, %s16, 1
      %s191 = smul.addr %s190, 4
      %s192 = smul.addr %s191, 4
      %s193 = scalar_lea.vmem %s1, %s192
      %p194 = scmp.lt.s32.totalorder %s16, 1
      %s195 = scalar_select %p194, %s16, 1
      %s196 = smul.addr %s195, 6
      %s197 = smul.addr %s196, 4
      %s198 = scalar_lea.vmem %s4, %s197
      %v200 = vld [vmem:[%s193] sm:$0xff]
      %v201 = vld [vmem:[%s193 + $0x8] sm:$0xff]
      %v204 = vunpack.c.l.b16 %v200
      %v205 = vunpack.c.h.b16 %v200
      %v206 = vunpack.c.l.b16 %v201
      %v207 = vpack.c.b16 %v204, %v204
      %v208 = vpack.c.b16 %v205, %v205
      %v209 = vpack.c.b16 %v206, %v206
      %v210 = vunpack.c.h.b16 %v201
      %v211 = vpack.c.b16 %v210, %v210
      %212 = vrot.lane.b32.xlu0 %v207, 127
      %v213 = vpop.permute.xlu0 %212
      %214 = vrot.lane.b32.xlu0 %v208, 127
      %v215 = vpop.permute.xlu0 %214
      %216 = vrot.lane.b32.xlu0 %v209, 127
      %v217 = vpop.permute.xlu0 %216
      %218 = vrot.lane.b32.xlu0 %v211, 127
      %v219 = vpop.permute.xlu0 %218
      %vm220 = vcmask 1039360
      %v221 = vsel %vm220, %v213, %v215
      %v222 = vsel %vm220, %v215, %v217
      %v223 = vsel %vm220, %v217, %v219
      %224 = vrot.lane.b32.xlu0 %v207, 126
      %v225 = vpop.permute.xlu0 %224
      %226 = vrot.lane.b32.xlu0 %v208, 126
      %v227 = vpop.permute.xlu0 %226
      %228 = vrot.lane.b32.xlu0 %v209, 126
      %v229 = vpop.permute.xlu0 %228
      %230 = vrot.lane.b32.xlu0 %v211, 126
      %v231 = vpop.permute.xlu0 %230
      %vm232 = vcmask 1031168
      %v233 = vsel %vm232, %v225, %v227
      %v234 = vsel %vm232, %v227, %v229
      %v235 = vsel %vm232, %v229, %v231
      %236 = vrot.lane.b32.xlu0 %v207, 110
      %v237 = vpop.permute.xlu0 %236
      %238 = vrot.lane.b32.xlu0 %v208, 110
      %v239 = vpop.permute.xlu0 %238
      %240 = vrot.lane.b32.xlu0 %v209, 110
      %v241 = vpop.permute.xlu0 %240
      %242 = vrot.lane.b32.xlu0 %v211, 110
      %v243 = vpop.permute.xlu0 %242
      %vm244 = vcmask 900096
      %v245 = vsel %vm244, %v237, %v239
      %v246 = vsel %vm244, %v239, %v241
      %v247 = vsel %vm244, %v241, %v243
      %248 = vrot.lane.b32.xlu0 %v207, 109
      %v249 = vpop.permute.xlu0 %248
      %250 = vrot.lane.b32.xlu0 %v208, 109
      %v251 = vpop.permute.xlu0 %250
      %252 = vrot.lane.b32.xlu0 %v209, 109
      %v253 = vpop.permute.xlu0 %252
      %254 = vrot.lane.b32.xlu0 %v211, 109
      %v255 = vpop.permute.xlu0 %254
      %vm256 = vcmask 891904
      %v257 = vsel %vm256, %v249, %v251
      %v258 = vsel %vm256, %v251, %v253
      %v259 = vsel %vm256, %v253, %v255
      %260 = vrot.lane.b32.xlu0 %v207, 108
      %v261 = vpop.permute.xlu0 %260
      %262 = vrot.lane.b32.xlu0 %v208, 108
      %v263 = vpop.permute.xlu0 %262
      %264 = vrot.lane.b32.xlu0 %v209, 108
      %v265 = vpop.permute.xlu0 %264
      %266 = vrot.lane.b32.xlu0 %v211, 108
      %v267 = vpop.permute.xlu0 %266
      %vm268 = vcmask 883712
      %v269 = vsel %vm268, %v261, %v263
      %v270 = vsel %vm268, %v263, %v265
      %v271 = vsel %vm268, %v265, %v267
      %272 = vrot.lane.b32.xlu0 %v207, 92
      %v273 = vpop.permute.xlu0 %272
      %274 = vrot.lane.b32.xlu0 %v208, 92
      %v275 = vpop.permute.xlu0 %274
      %276 = vrot.lane.b32.xlu0 %v209, 92
      %v277 = vpop.permute.xlu0 %276
      %278 = vrot.lane.b32.xlu0 %v211, 92
      %v279 = vpop.permute.xlu0 %278
      %vm280 = vcmask 752640
      %v281 = vsel %vm280, %v273, %v275
      %v282 = vsel %vm280, %v275, %v277
      %v283 = vsel %vm280, %v277, %v279
      %284 = vrot.lane.b32.xlu0 %v207, 91
      %v285 = vpop.permute.xlu0 %284
      %286 = vrot.lane.b32.xlu0 %v208, 91
      %v287 = vpop.permute.xlu0 %286
      %288 = vrot.lane.b32.xlu0 %v209, 91
      %v289 = vpop.permute.xlu0 %288
      %290 = vrot.lane.b32.xlu0 %v211, 91
      %v291 = vpop.permute.xlu0 %290
      %vm292 = vcmask 744448
      %v293 = vsel %vm292, %v285, %v287
      %v294 = vsel %vm292, %v287, %v289
      %v295 = vsel %vm292, %v289, %v291
      %296 = vrot.lane.b32.xlu0 %v207, 90
      %v297 = vpop.permute.xlu0 %296
      %298 = vrot.lane.b32.xlu0 %v208, 90
      %v299 = vpop.permute.xlu0 %298
      %300 = vrot.lane.b32.xlu0 %v209, 90
      %v301 = vpop.permute.xlu0 %300
      %302 = vrot.lane.b32.xlu0 %v211, 90
      %v303 = vpop.permute.xlu0 %302
      %vm304 = vcmask 736256
      %v305 = vsel %vm304, %v297, %v299
      %v306 = vsel %vm304, %v299, %v301
      %v307 = vsel %vm304, %v301, %v303
      %vm308 = vcmask 1043456
      %v311 = vsel %vm308, %v207, %v221
      %v315 = vsel %vm308, %v208, %v222
      %v319 = vsel %vm308, %v209, %v223
      %v323 = vsel %vm308, %v233, %v245
      %v327 = vsel %vm308, %v234, %v246
      %v331 = vsel %vm308, %v235, %v247
      %v335 = vsel %vm308, %v257, %v269
      %v339 = vsel %vm308, %v258, %v270
      %v343 = vsel %vm308, %v259, %v271
      %v347 = vsel %vm308, %v281, %v293
      %v351 = vsel %vm308, %v282, %v294
      %v355 = vsel %vm308, %v283, %v295
      %v357 = vld [vmem:[%s2] sm:$0xf]
      %v358 = vld [vmem:[%s2 + $0x4] sm:$0xf]
      %v359 = vld [vmem:[%s3] sm:$0xff]
      %v360 = vld [vmem:[%s3 + $0x8] sm:$0xff]
      %362 = vset.pattern.permute.xlu0 0
      %363 = vperm.xlu0 %362, %v359
      %v364 = vpop.permute.xlu0 %363
      %367 = vset.pattern.permute.xlu0 0
      %368 = vperm.xlu0 %367, %v360
      %v369 = vpop.permute.xlu0 %368
      %v373 = vunpack.c.l.b16 %v357
      %v374 = vunpack.c.l.b16 %v358
      %v375 = vpack.c.b16 %v374, %v373
      %vm376 = vcmask 588800
      %v378 = vsel %vm376, %v375, 0
      %v381 = vsel %vm308, %v305, 0
      %v384 = vsel %vm308, %v306, 0
      %v387 = vsel %vm308, %v307, 0
      %389 = vmatprep.subr.bf16.mxu0 0
      %390 = vmatpush1.bf16.msra.mxu0 0
      %391 = vmatprep.subr.bf16.mxu0 0
      %392 = vmatpush1.bf16.msra.mxu0 0
      %393 = vmatprep.subr.bf16.mxu0 0
      %394 = vmatpush1.bf16.msra.mxu0 0
      %395 = vmatprep.subr.bf16.mxu0 %v384
      %396 = vmatpush1.bf16.msra.mxu0 %v381
      %397 = vmatprep.subr.bf16.mxu0 %v351
      %398 = vmatpush1.bf16.msra.mxu0 %v347
      %399 = vmatprep.subr.bf16.mxu0 %v339
      %400 = vmatpush1.bf16.msra.mxu0 %v335
      %401 = vmatprep.subr.bf16.mxu0 %v327
      %402 = vmatpush1.bf16.msra.mxu0 %v323
      %403 = vmatprep.subr.bf16.mxu0 %v315
      %404 = vmatpush1.bf16.msra.mxu0 %v311
      %405 = vmatprep.subr.bf16.mxu0 0
      %406 = vmatpush2.bf16.msra.mxu0 0
      %407 = vmatprep.subr.bf16.mxu0 0
      %408 = vmatpush2.bf16.msra.mxu0 0
      %409 = vmatprep.subr.bf16.mxu0 0
      %410 = vmatpush2.bf16.msra.mxu0 0
      %411 = vmatprep.subr.bf16.mxu0 0
      %412 = vmatpush2.bf16.msra.mxu0 0
      %413 = vmatprep.subr.bf16.mxu0 0
      %414 = vmatpush2.bf16.msra.mxu0 0
      %415 = vmatprep.subr.bf16.mxu0 0
      %416 = vmatpush2.bf16.msra.mxu0 0
      %417 = vmatprep.subr.bf16.mxu0 0
      %418 = vmatpush2.bf16.msra.mxu0 0
      %419 = vmatprep.subr.bf16.mxu0 0
      %420 = vmatpush2.bf16.msra.mxu0 0
      %421 = vmatprep.mubr.bf16.mxu0 0
      %422 = vmatmul.mubr.bf16.gmra.mxu0 %v378
      %v423 = vpop.f32.mrf.mxu0
      %v424 = vadd.f32 %v364, %v423
      %v425 = vpop.f32.mrf.mxu0
      %v426 = vadd.f32 %v364, %v425
      %v427 = vpop.f32.mrf.mxu0
      %v428 = vadd.f32 %v369, %v427
      %v429 = vpop.f32.mrf.mxu0
      %v430 = vadd.f32 %v369, %v429
      %431 = vdwg.mxu0
      %432 = vmatprep.subr.bf16.mxu0 0
      %433 = vmatpush1.bf16.msra.mxu0 0
      %434 = vmatprep.subr.bf16.mxu0 0
      %435 = vmatpush1.bf16.msra.mxu0 0
      %436 = vmatprep.subr.bf16.mxu0 0
      %437 = vmatpush1.bf16.msra.mxu0 0
      %438 = vmatprep.subr.bf16.mxu0 0
      %439 = vmatpush1.bf16.msra.mxu0 %v387
      %440 = vmatprep.subr.bf16.mxu0 0
      %441 = vmatpush1.bf16.msra.mxu0 %v355
      %442 = vmatprep.subr.bf16.mxu0 0
      %443 = vmatpush1.bf16.msra.mxu0 %v343
      %444 = vmatprep.subr.bf16.mxu0 0
      %445 = vmatpush1.bf16.msra.mxu0 %v331
      %446 = vmatprep.subr.bf16.mxu0 0
      %447 = vmatpush1.bf16.msra.mxu0 %v319
      %448 = vmatprep.subr.bf16.mxu0 0
      %449 = vmatpush2.bf16.msra.mxu0 0
      %450 = vmatprep.subr.bf16.mxu0 0
      %451 = vmatpush2.bf16.msra.mxu0 0
      %452 = vmatprep.subr.bf16.mxu0 0
      %453 = vmatpush2.bf16.msra.mxu0 0
      %454 = vmatprep.subr.bf16.mxu0 0
      %455 = vmatpush2.bf16.msra.mxu0 0
      %456 = vmatprep.subr.bf16.mxu0 0
      %457 = vmatpush2.bf16.msra.mxu0 0
      %458 = vmatprep.subr.bf16.mxu0 0
      %459 = vmatpush2.bf16.msra.mxu0 0
      %460 = vmatprep.subr.bf16.mxu0 0
      %461 = vmatpush2.bf16.msra.mxu0 0
      %462 = vmatprep.subr.bf16.mxu0 0
      %463 = vmatpush2.bf16.msra.mxu0 0
      %464 = vmatprep.mubr.bf16.mxu0 0
      %465 = vmatmul.mubr.bf16.gmra.mxu0 %v378
      %v466 = vpop.f32.mrf.mxu0
      %v467 = vadd.f32 %v364, %v466
      %v468 = vpop.f32.mrf.mxu0
      %v469 = vpop.f32.mrf.mxu0
      %v470 = vadd.f32 %v369, %v469
      %v471 = vpop.f32.mrf.mxu0
      %472 = vdwg.mxu0
      %s473 = sld [smem:[#allocation2]]
      %vm474 = vcmp.ge.f32.partialorder %v424, 0.0
      %vm475 = vcmp.ge.f32.partialorder %v426, 0.0
      %vm476 = vcmp.ge.f32.partialorder %v467, 0.0
      %vm477 = vcmp.ge.f32.partialorder %v428, 0.0
      %vm478 = vcmp.ge.f32.partialorder %v430, 0.0
      %vm479 = vcmp.ge.f32.partialorder %v470, 0.0
      %v480 = vstv %s473
      %v481 = vmul.f32 %v480, %v424
      %v482 = vmul.f32 %v480, %v426
      %v483 = vmul.f32 %v480, %v467
      %v484 = vmul.f32 %v480, %v428
      %v485 = vmul.f32 %v480, %v430
      %v486 = vmul.f32 %v480, %v470
      %v487 = vsel %vm474, %v424, %v481
      %v488 = vsel %vm475, %v426, %v482
      %v489 = vsel %vm476, %v467, %v483
      %v490 = vsel %vm477, %v428, %v484
      %v491 = vsel %vm478, %v430, %v485
      %v492 = vsel %vm479, %v470, %v486
      %v493 = vpack.c.bf16 %v490, %v487
      %v494 = vpack.c.bf16 %v491, %v488
      %v495 = vpack.c.bf16 %v492, %v489
      %v499 = vunpack.c.l.b16 %v493
      %v500 = vunpack.c.l.b16 %v494
      %v501 = vunpack.c.l.b16 %v495
      %v502 = vunpack.c.h.b16 %v493
      %v503 = vunpack.c.h.b16 %v494
      %v504 = vunpack.c.h.b16 %v495
      %v505 = vpack.c.b16 %v500, %v499
      %v506 = vpack.c.b16 %v501, %v501
      %v507 = vpack.c.b16 %v503, %v502
      %v508 = vpack.c.b16 %v504, %v504
      %513 = vst [vmem:[%s198] sm:$0xff] %v505
      %514 = vst [vmem:[%s198 + $0x8] sm:$0xf] %v506
      %515 = vst [vmem:[%s198 + $0xc] sm:$0xff] %v507
      %516 = vst [vmem:[%s198 + $0x14] sm:$0xf] %v508
      %p517 = scmp.lt.s32.totalorder %s16, 1
      %s518 = scalar_select %p517, %s16, 1
      %s519 = smul.addr %s518, 6
      %s520 = smul.addr %s519, 4
      %s521 = scalar_lea.vmem %s4, %s520
      // Predicated region
      $region37: #{jup_concat_forward.2} parent=35 // pred_check
        %p522 = pneg %p123
      $region38: #{jup_concat_forward.2} parent=35 // pred_check_branch
        %524 = sbr.rel (%p522) target = $region40
      $region39: #{jup_concat_forward.2} parent=35 // pred_region
        _
      $region40: #{jup_concat_forward.2} parent=35 // pred_fallthru
        _
    $region36: #{jup_concat_forward.2} parent=5 // pred_fallthru
      _
    %p525 = scmp.le.s32.totalorder 2, %s11
    // Predicated region
    $region41: #{jup_concat_forward.2} parent=5 // pred_check
      %p526 = pneg %p525
    $region42: #{jup_concat_forward.2} parent=5 // pred_check_branch
      %528 = sbr.rel (%p526) target = $region44
    $region43: #{jup_concat_forward.2} parent=5 // pred_region
      %s529 = ssub.s32 %s11, 2
      // Predicated region
      $region45: #{jup_concat_forward.2} parent=43 // pred_check
        %p530 = pneg %p129
      $region46: #{jup_concat_forward.2} parent=43 // pred_check_branch
        %532 = sbr.rel (%p530) target = $region48
      $region47: #{jup_concat_forward.2} parent=43 // pred_region
        %p533 = scmp.lt.s32.totalorder %s17, 1
        %s534 = scalar_select %p533, %s17, 1
        %s535 = smul.addr %s534, 6
        %s536 = smul.addr %s535, 4
        %s537 = scalar_lea.vmem %s4, %s536
      $region48: #{jup_concat_forward.2} parent=43 // pred_fallthru
        _
    $region44: #{jup_concat_forward.2} parent=5 // pred_fallthru
      _
  $region6: #{jup_concat_forward.2} parent=0 // loop_footer
    %s15 = sadd.s32 1, %s11
  $region7: #{jup_concat_forward.2} parent=0 // loop_footer_branch
    %10 = sbr.rel target = $region3
  $region8: #{jup_concat_forward.2} parent=0 // loop_exit
    _

// kernel: jup_concat_forward.3
$region0: #{jup_concat_forward.3}
  #allocation0 [shape = 'u32[]', space=smem, size = 0x4, offset = 0x4, fixed_abs, tag = 'smem constant byte address 0x4 - core index']
  #allocation1 [shape = 'u32[144,128]{1,0:T(1,128)}', space=vmem, size = 0x12000, scoped, tag = 'internal scratch']
  #allocation2 [shape = 'bf16[8,1280]{1,0:T(8,128)(2,1)}', space=vmem, size = 0x5000, scoped, tag = 'scratch operand']
  #allocation3 [shape = 'bf16[8,1280]{1,0:T(8,128)(2,1)}', space=vmem, size = 0x5000, scoped, tag = 'scratch operand']
  %s0 = inlined_call_operand.vmem [shape: bf16[2,8,1280], index: 0, kind: input, shape index: {}]
  %s1 = inlined_call_operand.vmem [shape: bf16[8,72], index: 1, kind: input, shape index: {}]
  %s2 = inlined_call_operand.vmem [shape: f32[4,1], index: 2, kind: input, shape index: {}]
  %s3 = inlined_call_operand.vmem [shape: bf16[4,72], index: 3, kind: input, shape index: {}]
  %s4 = inlined_call_operand.vmem [shape: f32[4,1], index: 4, kind: input, shape index: {}]
  %s5 = inlined_call_operand.vmem [shape: bf16[4,72], index: 5, kind: input, shape index: {}]
  %s6 = inlined_call_operand.vmem [shape: f32[2,4,1152], index: 6, kind: output, shape index: {}]
  %s7 = sld [smem:[#allocation0]]
  $region57: #{jup_concat_forward.3} parent=0
    _
  %s9 = ssub.s32 1, %s7
  %s10 = scalar_select 0, %s9, %s7
  loop: start=0, step=1, limit=4
  $region2: #{jup_concat_forward.3} parent=0 // loop_pre_header
    _
  $region3: #{jup_concat_forward.3} parent=0 // loop_header
    %s12 = sphi 0, %s16
    %p13 = scmp.ge.s32.totalorder %s12, 4
    %s22 = sphi 0, %s24
    %s25 = sphi 0, %s22
    %s26 = sphi 0, %s25
    %s42 = sphi 0, %s26
    %s46 = sphi 0, %s46
    %s48 = sphi 0, %s46
    %s49 = sphi 0, %s48
    %s63 = sphi 0, %s49
    %s67 = sphi 0, %s67
    %s69 = sphi 0, %s67
    %s70 = sphi 0, %s69
    %s84 = sphi 0, %s70
    %s88 = sphi 0, %s88
    %s90 = sphi 0, %s88
    %s91 = sphi 0, %s90
    %s105 = sphi 0, %s91
    %s109 = sphi 0, %s109
    %s111 = sphi 0, %s109
    %s112 = sphi 0, %s111
    %s126 = sphi 0, %s112
    %s130 = sphi 0, %s130
    %s132 = sphi 0, %s130
    %s133 = sphi 0, %s132
    %s147 = sphi 0, %s133
    %s153 = sphi 0, %s155
    %s156 = sphi 0, %s153
    %s157 = sphi 0, %s156
    %s173 = sphi 0, %s157
  $region4: #{jup_concat_forward.3} parent=0 // loop_header_branch
    %15 = sbr.rel (%p13) target = $region8
  $region5: #{jup_concat_forward.3} parent=0 // loop_body
    %s17 = ssub.s32 %s12, 1
    %s18 = ssub.s32 %s12, 2
    %s19 = sadd.s32 %s12, 1
    %s20 = ssub.s32 %s12, %s19
    %p21 = scmp.eq.s32.totalorder %s20, 0
    %s23 = sadd.s32 %s22, 1
    %s24 = scalar_select %p21, %s22, %s23
    %p27 = pneg %p21
    %p28 = scmp.eq.s32.totalorder %s12, 1
    %p29 = por %p27, %p28
    %p30 = scmp.ne.s32.totalorder %s22, %s25
    %p31 = scmp.eq.s32.totalorder %s12, 0
    %p32 = por %p30, %p31
    %p33 = scmp.ne.s32.totalorder %s22, %s25
    %p34 = scmp.eq.s32.totalorder %s17, 1
    %p35 = por %p33, %p34
    %p36 = scmp.ne.s32.totalorder %s25, %s26
    %p37 = scmp.eq.s32.totalorder %s17, 0
    %p38 = por %p36, %p37
    %p39 = scmp.ne.s32.totalorder %s25, %s26
    %p40 = scmp.eq.s32.totalorder %s18, 1
    %p41 = por %p39, %p40
    %p43 = scmp.ne.s32.totalorder %s26, %s42
    %p44 = scmp.eq.s32.totalorder %s18, 0
    %p45 = por %p43, %p44
    %s47 = sadd.s32 %s46, 1
    %p50 = scmp.eq.s32.totalorder %s12, 1
    %p51 = scmp.ne.s32.totalorder %s46, %s48
    %p52 = scmp.eq.s32.totalorder %s12, 0
    %p53 = por %p51, %p52
    %p54 = scmp.ne.s32.totalorder %s46, %s48
    %p55 = scmp.eq.s32.totalorder %s17, 1
    %p56 = por %p54, %p55
    %p57 = scmp.ne.s32.totalorder %s48, %s49
    %p58 = scmp.eq.s32.totalorder %s17, 0
    %p59 = por %p57, %p58
    %p60 = scmp.ne.s32.totalorder %s48, %s49
    %p61 = scmp.eq.s32.totalorder %s18, 1
    %p62 = por %p60, %p61
    %p64 = scmp.ne.s32.totalorder %s49, %s63
    %p65 = scmp.eq.s32.totalorder %s18, 0
    %p66 = por %p64, %p65
    %s68 = sadd.s32 %s67, 1
    %p71 = scmp.eq.s32.totalorder %s12, 1
    %p72 = scmp.ne.s32.totalorder %s67, %s69
    %p73 = scmp.eq.s32.totalorder %s12, 0
    %p74 = por %p72, %p73
    %p75 = scmp.ne.s32.totalorder %s67, %s69
    %p76 = scmp.eq.s32.totalorder %s17, 1
    %p77 = por %p75, %p76
    %p78 = scmp.ne.s32.totalorder %s69, %s70
    %p79 = scmp.eq.s32.totalorder %s17, 0
    %p80 = por %p78, %p79
    %p81 = scmp.ne.s32.totalorder %s69, %s70
    %p82 = scmp.eq.s32.totalorder %s18, 1
    %p83 = por %p81, %p82
    %p85 = scmp.ne.s32.totalorder %s70, %s84
    %p86 = scmp.eq.s32.totalorder %s18, 0
    %p87 = por %p85, %p86
    %s89 = sadd.s32 %s88, 1
    %p92 = scmp.eq.s32.totalorder %s12, 1
    %p93 = scmp.ne.s32.totalorder %s88, %s90
    %p94 = scmp.eq.s32.totalorder %s12, 0
    %p95 = por %p93, %p94
    %p96 = scmp.ne.s32.totalorder %s88, %s90
    %p97 = scmp.eq.s32.totalorder %s17, 1
    %p98 = por %p96, %p97
    %p99 = scmp.ne.s32.totalorder %s90, %s91
    %p100 = scmp.eq.s32.totalorder %s17, 0
    %p101 = por %p99, %p100
    %p102 = scmp.ne.s32.totalorder %s90, %s91
    %p103 = scmp.eq.s32.totalorder %s18, 1
    %p104 = por %p102, %p103
    %p106 = scmp.ne.s32.totalorder %s91, %s105
    %p107 = scmp.eq.s32.totalorder %s18, 0
    %p108 = por %p106, %p107
    %s110 = sadd.s32 %s109, 1
    %p113 = scmp.eq.s32.totalorder %s12, 1
    %p114 = scmp.ne.s32.totalorder %s109, %s111
    %p115 = scmp.eq.s32.totalorder %s12, 0
    %p116 = por %p114, %p115
    %p117 = scmp.ne.s32.totalorder %s109, %s111
    %p118 = scmp.eq.s32.totalorder %s17, 1
    %p119 = por %p117, %p118
    %p120 = scmp.ne.s32.totalorder %s111, %s112
    %p121 = scmp.eq.s32.totalorder %s17, 0
    %p122 = por %p120, %p121
    %p123 = scmp.ne.s32.totalorder %s111, %s112
    %p124 = scmp.eq.s32.totalorder %s18, 1
    %p125 = por %p123, %p124
    %p127 = scmp.ne.s32.totalorder %s112, %s126
    %p128 = scmp.eq.s32.totalorder %s18, 0
    %p129 = por %p127, %p128
    %s131 = sadd.s32 %s130, 1
    %p134 = scmp.eq.s32.totalorder %s12, 1
    %p135 = scmp.ne.s32.totalorder %s130, %s132
    %p136 = scmp.eq.s32.totalorder %s12, 0
    %p137 = por %p135, %p136
    %p138 = scmp.ne.s32.totalorder %s130, %s132
    %p139 = scmp.eq.s32.totalorder %s17, 1
    %p140 = por %p138, %p139
    %p141 = scmp.ne.s32.totalorder %s132, %s133
    %p142 = scmp.eq.s32.totalorder %s17, 0
    %p143 = por %p141, %p142
    %p144 = scmp.ne.s32.totalorder %s132, %s133
    %p145 = scmp.eq.s32.totalorder %s18, 1
    %p146 = por %p144, %p145
    %p148 = scmp.ne.s32.totalorder %s133, %s147
    %p149 = scmp.eq.s32.totalorder %s18, 0
    %p150 = por %p148, %p149
    %s151 = ssub.s32 %s12, %s19
    %p152 = scmp.eq.s32.totalorder %s151, 0
    %s154 = sadd.s32 %s153, 1
    %s155 = scalar_select %p152, %s153, %s154
    %p158 = pneg %p152
    %p159 = scmp.eq.s32.totalorder %s12, 1
    %p160 = por %p158, %p159
    %p161 = scmp.ne.s32.totalorder %s153, %s156
    %p162 = scmp.eq.s32.totalorder %s12, 0
    %p163 = por %p161, %p162
    %p164 = scmp.ne.s32.totalorder %s153, %s156
    %p165 = scmp.eq.s32.totalorder %s17, 1
    %p166 = por %p164, %p165
    %p167 = scmp.ne.s32.totalorder %s156, %s157
    %p168 = scmp.eq.s32.totalorder %s17, 0
    %p169 = por %p167, %p168
    %p170 = scmp.ne.s32.totalorder %s156, %s157
    %p171 = scmp.eq.s32.totalorder %s18, 1
    %p172 = por %p170, %p171
    %p174 = scmp.ne.s32.totalorder %s157, %s173
    %p175 = scmp.eq.s32.totalorder %s18, 0
    %p176 = por %p174, %p175
    %p177 = scmp.le.s32.totalorder 1, %s12
    %p178 = scmp.lt.s32.totalorder %s12, 3
    %p179 = pnand %p177, %p178
    %p180 = pneg %p179
    // Predicated region
    $region9: #{jup_concat_forward.3} parent=5 // pred_check
      _
    $region10: #{jup_concat_forward.3} parent=5 // pred_check_branch
      %182 = sbr.rel (%p179) target = $region12
    $region11: #{jup_concat_forward.3} parent=5 // pred_region
      %s183 = ssub.s32 %s12, 1
      // Predicated region
      $region13: #{jup_concat_forward.3} parent=11 // pred_check
        %p184 = pneg %p59
      $region14: #{jup_concat_forward.3} parent=11 // pred_check_branch
        %186 = sbr.rel (%p184) target = $region16
      $region15: #{jup_concat_forward.3} parent=11 // pred_region
        _
      $region16: #{jup_concat_forward.3} parent=11 // pred_fallthru
        _
      // Predicated region
      $region17: #{jup_concat_forward.3} parent=11 // pred_check
        %p187 = pneg %p80
      $region18: #{jup_concat_forward.3} parent=11 // pred_check_branch
        %189 = sbr.rel (%p187) target = $region20
      $region19: #{jup_concat_forward.3} parent=11 // pred_region
        _
      $region20: #{jup_concat_forward.3} parent=11 // pred_fallthru
        _
      // Predicated region
      $region21: #{jup_concat_forward.3} parent=11 // pred_check
        %p190 = pneg %p101
      $region22: #{jup_concat_forward.3} parent=11 // pred_check_branch
        %192 = sbr.rel (%p190) target = $region24
      $region23: #{jup_concat_forward.3} parent=11 // pred_region
        _
      $region24: #{jup_concat_forward.3} parent=11 // pred_fallthru
        _
      // Predicated region
      $region25: #{jup_concat_forward.3} parent=11 // pred_check
        %p193 = pneg %p122
      $region26: #{jup_concat_forward.3} parent=11 // pred_check_branch
        %195 = sbr.rel (%p193) target = $region28
      $region27: #{jup_concat_forward.3} parent=11 // pred_region
        _
      $region28: #{jup_concat_forward.3} parent=11 // pred_fallthru
        _
      // Predicated region
      $region29: #{jup_concat_forward.3} parent=11 // pred_check
        %p196 = pneg %p143
      $region30: #{jup_concat_forward.3} parent=11 // pred_check_branch
        %198 = sbr.rel (%p196) target = $region32
      $region31: #{jup_concat_forward.3} parent=11 // pred_region
        _
      $region32: #{jup_concat_forward.3} parent=11 // pred_fallthru
        _
    $region12: #{jup_concat_forward.3} parent=5 // pred_fallthru
      _
    %p199 = scmp.lt.s32.totalorder %s12, 2
    // Predicated region
    $region33: #{jup_concat_forward.3} parent=5 // pred_check
      %p200 = pneg %p199
    $region34: #{jup_concat_forward.3} parent=5 // pred_check_branch
      %202 = sbr.rel (%p200) target = $region36
    $region35: #{jup_concat_forward.3} parent=5 // pred_region
      // Predicated region
      $region37: #{jup_concat_forward.3} parent=35 // pred_check
        %p203 = pneg %p32
      $region38: #{jup_concat_forward.3} parent=35 // pred_check_branch
        %205 = sbr.rel (%p203) target = $region40
      $region39: #{jup_concat_forward.3} parent=35 // pred_region
        %p206 = scmp.lt.s32.totalorder %s12, 1
        %s207 = scalar_select %p206, %s12, 1
        %s208 = smul.addr %s207, 10
        %s209 = smul.addr %s208, 4
        %s210 = scalar_lea.vmem %s0, %s209
      $region40: #{jup_concat_forward.3} parent=35 // pred_fallthru
        _
    $region36: #{jup_concat_forward.3} parent=5 // pred_fallthru
      _
    %p211 = scmp.le.s32.totalorder 1, %s12
    %p212 = scmp.lt.s32.totalorder %s12, 3
    %p213 = pnand %p211, %p212
    %p214 = pneg %p213
    // Predicated region
    $region41: #{jup_concat_forward.3} parent=5 // pred_check
      _
    $region42: #{jup_concat_forward.3} parent=5 // pred_check_branch
      %216 = sbr.rel (%p213) target = $region44
    $region43: #{jup_concat_forward.3} parent=5 // pred_region
      %s217 = ssub.s32 %s12, 1
      %p218 = scmp.lt.s32.totalorder %s17, 1
      %s219 = scalar_select %p218, %s17, 1
      %s220 = smul.addr %s219, 10
      %s221 = smul.addr %s220, 4
      %s222 = scalar_lea.vmem %s0, %s221
      %p223 = pneg %p38
      %p224 = pneg %p35
      %p225 = pneg %p59
      %p226 = pneg %p56
      %p227 = pneg %p80
      %p228 = pneg %p77
      %p229 = pneg %p101
      %p230 = pneg %p98
      %p231 = pneg %p122
      %p232 = pneg %p119
      %p233 = pneg %p143
      %p234 = pneg %p140
      %p235 = pneg %p169
      %p236 = pneg %p166
      %p237 = scmp.lt.s32.totalorder %s17, 1
      %s238 = scalar_select %p237, %s17, 1
      %s239 = smul.addr %s238, 9
      %s240 = smul.addr %s239, 4
      %s241 = scalar_lea.vmem %s6, %s240
      %p242 = scmp.lt.s32.totalorder %s17, 1
      %s243 = scalar_select %p242, %s17, 1
      %s244 = smul.addr %s243, 10
      %s245 = smul.addr %s244, 4
      %s246 = scalar_lea.vmem %s0, %s245
      %p247 = scmp.lt.s32.totalorder %s17, 1
      %s248 = scalar_select %p247, %s17, 1
      %s249 = smul.addr %s248, 9
      %s250 = smul.addr %s249, 4
      %s251 = scalar_lea.vmem %s6, %s250
      %v253 = vlaneseq
      %v254 = vand.u32 %v253, 127
      %v255 = vadd.s32 %v254, 128
      %v256 = vadd.s32 %v254, 256
      %v257 = vadd.s32 %v254, 384
      %v258 = vadd.s32 %v254, 512
      %v259 = vadd.s32 %v254, 640
      %v260 = vadd.s32 %v254, 768
      %v261 = vadd.s32 %v254, 896
      %v262 = vadd.s32 %v254, 1024
      %vm263 = vcmp.lt.s32.totalorder %v254, 0
      %v264 = vsub.s32 0, %v254
      %v265 = vsel %vm263, %v264, %v254
      %v266 = vmul.u32.u64.compose %v265, 4042322161
      %v267 = vextract.low.u32 %v266
      %v268 = vextract.high.u32 %v266
      %v269 = vshrl.u32 %v268, 5
      %v270 = vmul.u32 %v269, 34
      %v271 = vsub.s32 %v265, %v270
      %v272 = vsub.s32 0, %v271
      %v273 = vsel %vm263, %v272, %v271
      %vm274 = vcmp.lt.s32.totalorder %v255, 0
      %v275 = vsub.s32 0, %v255
      %v276 = vsel %vm274, %v275, %v255
      %v277 = vmul.u32.u64.compose %v276, 4042322161
      %v278 = vextract.low.u32 %v277
      %v279 = vextract.high.u32 %v277
      %v280 = vshrl.u32 %v279, 5
      %v281 = vmul.u32 %v280, 34
      %v282 = vsub.s32 %v276, %v281
      %v283 = vsub.s32 0, %v282
      %v284 = vsel %vm274, %v283, %v282
      %vm285 = vcmp.lt.s32.totalorder %v256, 0
      %v286 = vsub.s32 0, %v256
      %v287 = vsel %vm285, %v286, %v256
      %v288 = vmul.u32.u64.compose %v287, 4042322161
      %v289 = vextract.low.u32 %v288
      %v290 = vextract.high.u32 %v288
      %v291 = vshrl.u32 %v290, 5
      %v292 = vmul.u32 %v291, 34
      %v293 = vsub.s32 %v287, %v292
      %v294 = vsub.s32 0, %v293
      %v295 = vsel %vm285, %v294, %v293
      %vm296 = vcmp.lt.s32.totalorder %v257, 0
      %v297 = vsub.s32 0, %v257
      %v298 = vsel %vm296, %v297, %v257
      %v299 = vmul.u32.u64.compose %v298, 4042322161
      %v300 = vextract.low.u32 %v299
      %v301 = vextract.high.u32 %v299
      %v302 = vshrl.u32 %v301, 5
      %v303 = vmul.u32 %v302, 34
      %v304 = vsub.s32 %v298, %v303
      %v305 = vsub.s32 0, %v304
      %v306 = vsel %vm296, %v305, %v304
      %vm307 = vcmp.lt.s32.totalorder %v258, 0
      %v308 = vsub.s32 0, %v258
      %v309 = vsel %vm307, %v308, %v258
      %v310 = vmul.u32.u64.compose %v309, 4042322161
      %v311 = vextract.low.u32 %v310
      %v312 = vextract.high.u32 %v310
      %v313 = vshrl.u32 %v312, 5
      %v314 = vmul.u32 %v313, 34
      %v315 = vsub.s32 %v309, %v314
      %v316 = vsub.s32 0, %v315
      %v317 = vsel %vm307, %v316, %v315
      %vm318 = vcmp.lt.s32.totalorder %v259, 0
      %v319 = vsub.s32 0, %v259
      %v320 = vsel %vm318, %v319, %v259
      %v321 = vmul.u32.u64.compose %v320, 4042322161
      %v322 = vextract.low.u32 %v321
      %v323 = vextract.high.u32 %v321
      %v324 = vshrl.u32 %v323, 5
      %v325 = vmul.u32 %v324, 34
      %v326 = vsub.s32 %v320, %v325
      %v327 = vsub.s32 0, %v326
      %v328 = vsel %vm318, %v327, %v326
      %vm329 = vcmp.lt.s32.totalorder %v260, 0
      %v330 = vsub.s32 0, %v260
      %v331 = vsel %vm329, %v330, %v260
      %v332 = vmul.u32.u64.compose %v331, 4042322161
      %v333 = vextract.low.u32 %v332
      %v334 = vextract.high.u32 %v332
      %v335 = vshrl.u32 %v334, 5
      %v336 = vmul.u32 %v335, 34
      %v337 = vsub.s32 %v331, %v336
      %v338 = vsub.s32 0, %v337
      %v339 = vsel %vm329, %v338, %v337
      %vm340 = vcmp.lt.s32.totalorder %v261, 0
      %v341 = vsub.s32 0, %v261
      %v342 = vsel %vm340, %v341, %v261
      %v343 = vmul.u32.u64.compose %v342, 4042322161
      %v344 = vextract.low.u32 %v343
      %v345 = vextract.high.u32 %v343
      %v346 = vshrl.u32 %v345, 5
      %v347 = vmul.u32 %v346, 34
      %v348 = vsub.s32 %v342, %v347
      %v349 = vsub.s32 0, %v348
      %v350 = vsel %vm340, %v349, %v348
      %vm351 = vcmp.lt.s32.totalorder %v262, 0
      %v352 = vsub.s32 0, %v262
      %v353 = vsel %vm351, %v352, %v262
      %v354 = vmul.u32.u64.compose %v353, 4042322161
      %v355 = vextract.low.u32 %v354
      %v356 = vextract.high.u32 %v354
      %v357 = vshrl.u32 %v356, 5
      %v358 = vmul.u32 %v357, 34
      %v359 = vsub.s32 %v353, %v358
      %v360 = vsub.s32 0, %v359
      %v361 = vsel %vm351, %v360, %v359
      %vm362 = vcmp.ne.s32.totalorder %v273, 0
      %vm363 = vcmp.ne.s32.totalorder %v284, 0
      %vm364 = vcmp.ne.s32.totalorder %v295, 0
      %vm365 = vcmp.ne.s32.totalorder %v306, 0
      %vm366 = vcmp.ne.s32.totalorder %v317, 0
      %vm367 = vcmp.ne.s32.totalorder %v328, 0
      %vm368 = vcmp.ne.s32.totalorder %v339, 0
      %vm369 = vcmp.ne.s32.totalorder %v350, 0
      %vm370 = vcmp.ne.s32.totalorder %v361, 0
      %vm371 = vcmp.lt.s32.totalorder %v273, 0
      %vm372 = vcmp.lt.s32.totalorder %v284, 0
      %vm373 = vcmp.lt.s32.totalorder %v295, 0
      %vm374 = vcmp.lt.s32.totalorder %v306, 0
      %vm375 = vcmp.lt.s32.totalorder %v317, 0
      %vm376 = vcmp.lt.s32.totalorder %v328, 0
      %vm377 = vcmp.lt.s32.totalorder %v339, 0
      %vm378 = vcmp.lt.s32.totalorder %v350, 0
      %vm379 = vcmp.lt.s32.totalorder %v361, 0
      %vm380 = vmand %vm371, %vm362
      %vm381 = vmand %vm372, %vm363
      %vm382 = vmand %vm373, %vm364
      %vm383 = vmand %vm374, %vm365
      %vm384 = vmand %vm375, %vm366
      %vm385 = vmand %vm376, %vm367
      %vm386 = vmand %vm377, %vm368
      %vm387 = vmand %vm378, %vm369
      %vm388 = vmand %vm379, %vm370
      %v389 = vadd.s32 %v273, 34
      %v390 = vadd.s32 %v284, 34
      %v391 = vadd.s32 %v295, 34
      %v392 = vadd.s32 %v306, 34
      %v393 = vadd.s32 %v317, 34
      %v394 = vadd.s32 %v328, 34
      %v395 = vadd.s32 %v339, 34
      %v396 = vadd.s32 %v350, 34
      %v397 = vadd.s32 %v361, 34
      %v398 = vsel %vm380, %v389, %v273
      %v399 = vsel %vm381, %v390, %v284
      %v400 = vsel %vm382, %v391, %v295
      %v401 = vsel %vm383, %v392, %v306
      %v402 = vsel %vm384, %v393, %v317
      %v403 = vsel %vm385, %v394, %v328
      %v404 = vsel %vm386, %v395, %v339
      %v405 = vsel %vm387, %v396, %v350
      %v406 = vsel %vm388, %v397, %v361
      %vm407 = vcmp.lt.s32.totalorder %v398, 32
      %vm408 = vcmp.lt.s32.totalorder %v399, 32
      %vm409 = vcmp.lt.s32.totalorder %v400, 32
      %vm410 = vcmp.lt.s32.totalorder %v401, 32
      %vm411 = vcmp.lt.s32.totalorder %v402, 32
      %vm412 = vcmp.lt.s32.totalorder %v403, 32
      %vm413 = vcmp.lt.s32.totalorder %v404, 32
      %vm414 = vcmp.lt.s32.totalorder %v405, 32
      %vm415 = vcmp.lt.s32.totalorder %v406, 32
      %vm416 = vcmp.lt.s32.totalorder %v254, 1088
      %vm417 = vcmp.lt.s32.totalorder %v255, 1088
      %vm418 = vcmp.lt.s32.totalorder %v256, 1088
      %vm419 = vcmp.lt.s32.totalorder %v257, 1088
      %vm420 = vcmp.lt.s32.totalorder %v258, 1088
      %vm421 = vcmp.lt.s32.totalorder %v259, 1088
      %vm422 = vcmp.lt.s32.totalorder %v260, 1088
      %vm423 = vcmp.lt.s32.totalorder %v261, 1088
      %vm424 = vcmp.lt.s32.totalorder %v262, 1088
      %vm425 = vmand %vm407, %vm416
      %vm426 = vmand %vm408, %vm417
      %vm427 = vmand %vm409, %vm418
      %vm428 = vmand %vm410, %vm419
      %vm429 = vmand %vm411, %vm420
      %vm430 = vmand %vm412, %vm421
      %vm431 = vmand %vm413, %vm422
      %vm432 = vmand %vm414, %vm423
      %vm433 = vmand %vm415, %vm424
      %v434 = vsel %vm425, 1, 0
      %v435 = vsel %vm426, 1, 0
      %v436 = vsel %vm427, 1, 0
      %v437 = vsel %vm428, 1, 0
      %v438 = vsel %vm429, 1, 0
      %v439 = vsel %vm430, 1, 0
      %v440 = vsel %vm431, 1, 0
      %v441 = vsel %vm432, 1, 0
      %v442 = vsel %vm433, 1, 0
      %v443 = vcvt.s32.f32 %v434
      %v444 = vcvt.s32.f32 %v435
      %v445 = vcvt.s32.f32 %v436
      %v446 = vcvt.s32.f32 %v437
      %v447 = vcvt.s32.f32 %v438
      %v448 = vcvt.s32.f32 %v439
      %v449 = vcvt.s32.f32 %v440
      %v450 = vcvt.s32.f32 %v441
      %v451 = vcvt.s32.f32 %v442
      %v452 = vld [vmem:[%s246] sm:$0xff]
      %v453 = vld [vmem:[%s246 + $0x8] sm:$0xff]
      %v454 = vld [vmem:[%s246 + $0x10] sm:$0xff]
      %v455 = vld [vmem:[%s246 + $0x18] sm:$0xff]
      %v456 = vld [vmem:[%s246 + $0x20] sm:$0xff]
      %v462 = vunpack.c.l.b16 %v452
      %v463 = vunpack.c.h.b16 %v452
      %v464 = vunpack.c.l.b16 %v453
      %v465 = vunpack.c.h.b16 %v453
      %v466 = vunpack.c.l.b16 %v454
      %v467 = vunpack.c.h.b16 %v454
      %v468 = vunpack.c.l.b16 %v455
      %v469 = vunpack.c.h.b16 %v455
      %v470 = vunpack.c.l.b16 %v456
      %v471 = vpack.c.b16 %v462, %v462
      %v472 = vpack.c.b16 %v463, %v463
      %v473 = vpack.c.b16 %v464, %v464
      %v474 = vpack.c.b16 %v465, %v465
      %v475 = vpack.c.b16 %v466, %v466
      %v476 = vpack.c.b16 %v467, %v467
      %v477 = vpack.c.b16 %v468, %v468
      %v478 = vpack.c.b16 %v469, %v469
      %v479 = vpack.c.b16 %v470, %v470
      %v480 = vunpack.c.h.b16 %v456
      %v481 = vpack.c.b16 %v480, %v480
      %482 = vrot.lane.b32.xlu0 %v471, 127
      %v483 = vpop.permute.xlu0 %482
      %484 = vrot.lane.b32.xlu0 %v472, 127
      %v485 = vpop.permute.xlu0 %484
      %486 = vrot.lane.b32.xlu0 %v473, 127
      %v487 = vpop.permute.xlu0 %486
      %488 = vrot.lane.b32.xlu0 %v474, 127
      %v489 = vpop.permute.xlu0 %488
      %490 = vrot.lane.b32.xlu0 %v475, 127
      %v491 = vpop.permute.xlu0 %490
      %492 = vrot.lane.b32.xlu0 %v476, 127
      %v493 = vpop.permute.xlu0 %492
      %494 = vrot.lane.b32.xlu0 %v477, 127
      %v495 = vpop.permute.xlu0 %494
      %496 = vrot.lane.b32.xlu0 %v478, 127
      %v497 = vpop.permute.xlu0 %496
      %498 = vrot.lane.b32.xlu0 %v479, 127
      %v499 = vpop.permute.xlu0 %498
      %500 = vrot.lane.b32.xlu0 %v481, 127
      %v501 = vpop.permute.xlu0 %500
      %vm502 = vcmask 1039360
      %v503 = vsel %vm502, %v483, %v485
      %v504 = vsel %vm502, %v485, %v487
      %v505 = vsel %vm502, %v487, %v489
      %v506 = vsel %vm502, %v489, %v491
      %v507 = vsel %vm502, %v491, %v493
      %v508 = vsel %vm502, %v493, %v495
      %v509 = vsel %vm502, %v495, %v497
      %v510 = vsel %vm502, %v497, %v499
      %v511 = vsel %vm502, %v499, %v501
      %512 = vrot.lane.b32.xlu0 %v471, 126
      %v513 = vpop.permute.xlu0 %512
      %514 = vrot.lane.b32.xlu0 %v472, 126
      %v515 = vpop.permute.xlu0 %514
      %516 = vrot.lane.b32.xlu0 %v473, 126
      %v517 = vpop.permute.xlu0 %516
      %518 = vrot.lane.b32.xlu0 %v474, 126
      %v519 = vpop.permute.xlu0 %518
      %520 = vrot.lane.b32.xlu0 %v475, 126
      %v521 = vpop.permute.xlu0 %520
      %522 = vrot.lane.b32.xlu0 %v476, 126
      %v523 = vpop.permute.xlu0 %522
      %524 = vrot.lane.b32.xlu0 %v477, 126
      %v525 = vpop.permute.xlu0 %524
      %526 = vrot.lane.b32.xlu0 %v478, 126
      %v527 = vpop.permute.xlu0 %526
      %528 = vrot.lane.b32.xlu0 %v479, 126
      %v529 = vpop.permute.xlu0 %528
      %530 = vrot.lane.b32.xlu0 %v481, 126
      %v531 = vpop.permute.xlu0 %530
      %vm532 = vcmask 1031168
      %v533 = vsel %vm532, %v513, %v515
      %v534 = vsel %vm532, %v515, %v517
      %v535 = vsel %vm532, %v517, %v519
      %v536 = vsel %vm532, %v519, %v521
      %v537 = vsel %vm532, %v521, %v523
      %v538 = vsel %vm532, %v523, %v525
      %v539 = vsel %vm532, %v525, %v527
      %v540 = vsel %vm532, %v527, %v529
      %v541 = vsel %vm532, %v529, %v531
      %542 = vrot.lane.b32.xlu0 %v471, 94
      %v543 = vpop.permute.xlu0 %542
      %544 = vrot.lane.b32.xlu0 %v472, 94
      %v545 = vpop.permute.xlu0 %544
      %546 = vrot.lane.b32.xlu0 %v473, 94
      %v547 = vpop.permute.xlu0 %546
      %548 = vrot.lane.b32.xlu0 %v474, 94
      %v549 = vpop.permute.xlu0 %548
      %550 = vrot.lane.b32.xlu0 %v475, 94
      %v551 = vpop.permute.xlu0 %550
      %552 = vrot.lane.b32.xlu0 %v476, 94
      %v553 = vpop.permute.xlu0 %552
      %554 = vrot.lane.b32.xlu0 %v477, 94
      %v555 = vpop.permute.xlu0 %554
      %556 = vrot.lane.b32.xlu0 %v478, 94
      %v557 = vpop.permute.xlu0 %556
      %558 = vrot.lane.b32.xlu0 %v479, 94
      %v559 = vpop.permute.xlu0 %558
      %560 = vrot.lane.b32.xlu0 %v481, 94
      %v561 = vpop.permute.xlu0 %560
      %vm562 = vcmask 769024
      %v563 = vsel %vm562, %v543, %v545
      %v564 = vsel %vm562, %v545, %v547
      %v565 = vsel %vm562, %v547, %v549
      %v566 = vsel %vm562, %v549, %v551
      %v567 = vsel %vm562, %v551, %v553
      %v568 = vsel %vm562, %v553, %v555
      %v569 = vsel %vm562, %v555, %v557
      %v570 = vsel %vm562, %v557, %v559
      %v571 = vsel %vm562, %v559, %v561
      %572 = vrot.lane.b32.xlu0 %v471, 93
      %v573 = vpop.permute.xlu0 %572
      %574 = vrot.lane.b32.xlu0 %v472, 93
      %v575 = vpop.permute.xlu0 %574
      %576 = vrot.lane.b32.xlu0 %v473, 93
      %v577 = vpop.permute.xlu0 %576
      %578 = vrot.lane.b32.xlu0 %v474, 93
      %v579 = vpop.permute.xlu0 %578
      %580 = vrot.lane.b32.xlu0 %v475, 93
      %v581 = vpop.permute.xlu0 %580
      %582 = vrot.lane.b32.xlu0 %v476, 93
      %v583 = vpop.permute.xlu0 %582
      %584 = vrot.lane.b32.xlu0 %v477, 93
      %v585 = vpop.permute.xlu0 %584
      %586 = vrot.lane.b32.xlu0 %v478, 93
      %v587 = vpop.permute.xlu0 %586
      %588 = vrot.lane.b32.xlu0 %v479, 93
      %v589 = vpop.permute.xlu0 %588
      %590 = vrot.lane.b32.xlu0 %v481, 93
      %v591 = vpop.permute.xlu0 %590
      %vm592 = vcmask 760832
      %v593 = vsel %vm592, %v573, %v575
      %v594 = vsel %vm592, %v575, %v577
      %v595 = vsel %vm592, %v577, %v579
      %v596 = vsel %vm592, %v579, %v581
      %v597 = vsel %vm592, %v581, %v583
      %v598 = vsel %vm592, %v583, %v585
      %v599 = vsel %vm592, %v585, %v587
      %v600 = vsel %vm592, %v587, %v589
      %v601 = vsel %vm592, %v589, %v591
      %602 = vrot.lane.b32.xlu0 %v471, 92
      %v603 = vpop.permute.xlu0 %602
      %604 = vrot.lane.b32.xlu0 %v472, 92
      %v605 = vpop.permute.xlu0 %604
      %606 = vrot.lane.b32.xlu0 %v473, 92
      %v607 = vpop.permute.xlu0 %606
      %608 = vrot.lane.b32.xlu0 %v474, 92
      %v609 = vpop.permute.xlu0 %608
      %610 = vrot.lane.b32.xlu0 %v475, 92
      %v611 = vpop.permute.xlu0 %610
      %612 = vrot.lane.b32.xlu0 %v476, 92
      %v613 = vpop.permute.xlu0 %612
      %614 = vrot.lane.b32.xlu0 %v477, 92
      %v615 = vpop.permute.xlu0 %614
      %616 = vrot.lane.b32.xlu0 %v478, 92
      %v617 = vpop.permute.xlu0 %616
      %618 = vrot.lane.b32.xlu0 %v479, 92
      %v619 = vpop.permute.xlu0 %618
      %620 = vrot.lane.b32.xlu0 %v481, 92
      %v621 = vpop.permute.xlu0 %620
      %vm622 = vcmask 752640
      %v623 = vsel %vm622, %v603, %v605
      %v624 = vsel %vm622, %v605, %v607
      %v625 = vsel %vm622, %v607, %v609
      %v626 = vsel %vm622, %v609, %v611
      %v627 = vsel %vm622, %v611, %v613
      %v628 = vsel %vm622, %v613, %v615
      %v629 = vsel %vm622, %v615, %v617
      %v630 = vsel %vm622, %v617, %v619
      %v631 = vsel %vm622, %v619, %v621
      %632 = vrot.lane.b32.xlu0 %v471, 60
      %v633 = vpop.permute.xlu0 %632
      %634 = vrot.lane.b32.xlu0 %v472, 60
      %v635 = vpop.permute.xlu0 %634
      %636 = vrot.lane.b32.xlu0 %v473, 60
      %v637 = vpop.permute.xlu0 %636
      %638 = vrot.lane.b32.xlu0 %v474, 60
      %v639 = vpop.permute.xlu0 %638
      %640 = vrot.lane.b32.xlu0 %v475, 60
      %v641 = vpop.permute.xlu0 %640
      %642 = vrot.lane.b32.xlu0 %v476, 60
      %v643 = vpop.permute.xlu0 %642
      %644 = vrot.lane.b32.xlu0 %v477, 60
      %v645 = vpop.permute.xlu0 %644
      %646 = vrot.lane.b32.xlu0 %v478, 60
      %v647 = vpop.permute.xlu0 %646
      %648 = vrot.lane.b32.xlu0 %v479, 60
      %v649 = vpop.permute.xlu0 %648
      %650 = vrot.lane.b32.xlu0 %v481, 60
      %v651 = vpop.permute.xlu0 %650
      %vm652 = vcmask 490496
      %v653 = vsel %vm652, %v633, %v635
      %v654 = vsel %vm652, %v635, %v637
      %v655 = vsel %vm652, %v637, %v639
      %v656 = vsel %vm652, %v639, %v641
      %v657 = vsel %vm652, %v641, %v643
      %v658 = vsel %vm652, %v643, %v645
      %v659 = vsel %vm652, %v645, %v647
      %v660 = vsel %vm652, %v647, %v649
      %v661 = vsel %vm652, %v649, %v651
      %662 = vrot.lane.b32.xlu0 %v471, 59
      %v663 = vpop.permute.xlu0 %662
      %664 = vrot.lane.b32.xlu0 %v472, 59
      %v665 = vpop.permute.xlu0 %664
      %666 = vrot.lane.b32.xlu0 %v473, 59
      %v667 = vpop.permute.xlu0 %666
      %668 = vrot.lane.b32.xlu0 %v474, 59
      %v669 = vpop.permute.xlu0 %668
      %670 = vrot.lane.b32.xlu0 %v475, 59
      %v671 = vpop.permute.xlu0 %670
      %672 = vrot.lane.b32.xlu0 %v476, 59
      %v673 = vpop.permute.xlu0 %672
      %674 = vrot.lane.b32.xlu0 %v477, 59
      %v675 = vpop.permute.xlu0 %674
      %676 = vrot.lane.b32.xlu0 %v478, 59
      %v677 = vpop.permute.xlu0 %676
      %678 = vrot.lane.b32.xlu0 %v479, 59
      %v679 = vpop.permute.xlu0 %678
      %680 = vrot.lane.b32.xlu0 %v481, 59
      %v681 = vpop.permute.xlu0 %680
      %vm682 = vcmask 482304
      %v683 = vsel %vm682, %v663, %v665
      %v684 = vsel %vm682, %v665, %v667
      %v685 = vsel %vm682, %v667, %v669
      %v686 = vsel %vm682, %v669, %v671
      %v687 = vsel %vm682, %v671, %v673
      %v688 = vsel %vm682, %v673, %v675
      %v689 = vsel %vm682, %v675, %v677
      %v690 = vsel %vm682, %v677, %v679
      %v691 = vsel %vm682, %v679, %v681
      %692 = vrot.lane.b32.xlu0 %v471, 58
      %v693 = vpop.permute.xlu0 %692
      %694 = vrot.lane.b32.xlu0 %v472, 58
      %v695 = vpop.permute.xlu0 %694
      %696 = vrot.lane.b32.xlu0 %v473, 58
      %v697 = vpop.permute.xlu0 %696
      %698 = vrot.lane.b32.xlu0 %v474, 58
      %v699 = vpop.permute.xlu0 %698
      %700 = vrot.lane.b32.xlu0 %v475, 58
      %v701 = vpop.permute.xlu0 %700
      %702 = vrot.lane.b32.xlu0 %v476, 58
      %v703 = vpop.permute.xlu0 %702
      %704 = vrot.lane.b32.xlu0 %v477, 58
      %v705 = vpop.permute.xlu0 %704
      %706 = vrot.lane.b32.xlu0 %v478, 58
      %v707 = vpop.permute.xlu0 %706
      %708 = vrot.lane.b32.xlu0 %v479, 58
      %v709 = vpop.permute.xlu0 %708
      %710 = vrot.lane.b32.xlu0 %v481, 58
      %v711 = vpop.permute.xlu0 %710
      %vm712 = vcmask 474112
      %v713 = vsel %vm712, %v693, %v695
      %v714 = vsel %vm712, %v695, %v697
      %v715 = vsel %vm712, %v697, %v699
      %v716 = vsel %vm712, %v699, %v701
      %v717 = vsel %vm712, %v701, %v703
      %v718 = vsel %vm712, %v703, %v705
      %v719 = vsel %vm712, %v705, %v707
      %v720 = vsel %vm712, %v707, %v709
      %v721 = vsel %vm712, %v709, %v711
      %vm722 = vcmask 1043456
      %v725 = vsel %vm722, %v471, %v503
      %v729 = vsel %vm722, %v472, %v504
      %v733 = vsel %vm722, %v473, %v505
      %v737 = vsel %vm722, %v474, %v506
      %v741 = vsel %vm722, %v475, %v507
      %v745 = vsel %vm722, %v476, %v508
      %v749 = vsel %vm722, %v477, %v509
      %v753 = vsel %vm722, %v478, %v510
      %v757 = vsel %vm722, %v479, %v511
      %v761 = vsel %vm722, %v533, %v563
      %v765 = vsel %vm722, %v534, %v564
      %v769 = vsel %vm722, %v535, %v565
      %v773 = vsel %vm722, %v536, %v566
      %v777 = vsel %vm722, %v537, %v567
      %v781 = vsel %vm722, %v538, %v568
      %v785 = vsel %vm722, %v539, %v569
      %v789 = vsel %vm722, %v540, %v570
      %v793 = vsel %vm722, %v541, %v571
      %v797 = vsel %vm722, %v593, %v623
      %v801 = vsel %vm722, %v594, %v624
      %v805 = vsel %vm722, %v595, %v625
      %v809 = vsel %vm722, %v596, %v626
      %v813 = vsel %vm722, %v597, %v627
      %v817 = vsel %vm722, %v598, %v628
      %v821 = vsel %vm722, %v599, %v629
      %v825 = vsel %vm722, %v600, %v630
      %v829 = vsel %vm722, %v601, %v631
      %v833 = vsel %vm722, %v653, %v683
      %v837 = vsel %vm722, %v654, %v684
      %v841 = vsel %vm722, %v655, %v685
      %v845 = vsel %vm722, %v656, %v686
      %v849 = vsel %vm722, %v657, %v687
      %v853 = vsel %vm722, %v658, %v688
      %v857 = vsel %vm722, %v659, %v689
      %v861 = vsel %vm722, %v660, %v690
      %v865 = vsel %vm722, %v661, %v691
      %v867 = vld [vmem:[%s1] sm:$0xf]
      %vm868 = vcmask 588800
      %v870 = vsel %vm868, %v867, 0
      %v873 = vsel %vm722, %v713, 0
      %v876 = vsel %vm722, %v714, 0
      %v879 = vsel %vm722, %v715, 0
      %v882 = vsel %vm722, %v716, 0
      %v885 = vsel %vm722, %v717, 0
      %v888 = vsel %vm722, %v718, 0
      %v891 = vsel %vm722, %v719, 0
      %v894 = vsel %vm722, %v720, 0
      %v897 = vsel %vm722, %v721, 0
      %899 = vmatprep.subr.bf16.mxu0 0
      %900 = vmatpush1.bf16.msra.mxu0 0
      %901 = vmatprep.subr.bf16.mxu0 0
      %902 = vmatpush1.bf16.msra.mxu0 0
      %903 = vmatprep.subr.bf16.mxu0 0
      %904 = vmatpush1.bf16.msra.mxu0 0
      %905 = vmatprep.subr.bf16.mxu0 %v876
      %906 = vmatpush1.bf16.msra.mxu0 %v873
      %907 = vmatprep.subr.bf16.mxu0 %v837
      %908 = vmatpush1.bf16.msra.mxu0 %v833
      %909 = vmatprep.subr.bf16.mxu0 %v801
      %910 = vmatpush1.bf16.msra.mxu0 %v797
      %911 = vmatprep.subr.bf16.mxu0 %v765
      %912 = vmatpush1.bf16.msra.mxu0 %v761
      %913 = vmatprep.subr.bf16.mxu0 %v729
      %914 = vmatpush1.bf16.msra.mxu0 %v725
      %915 = vmatprep.subr.bf16.mxu0 0
      %916 = vmatpush2.bf16.msra.mxu0 0
      %917 = vmatprep.subr.bf16.mxu0 0
      %918 = vmatpush2.bf16.msra.mxu0 0
      %919 = vmatprep.subr.bf16.mxu0 0
      %920 = vmatpush2.bf16.msra.mxu0 0
      %921 = vmatprep.subr.bf16.mxu0 0
      %922 = vmatpush2.bf16.msra.mxu0 0
      %923 = vmatprep.subr.bf16.mxu0 0
      %924 = vmatpush2.bf16.msra.mxu0 0
      %925 = vmatprep.subr.bf16.mxu0 0
      %926 = vmatpush2.bf16.msra.mxu0 0
      %927 = vmatprep.subr.bf16.mxu0 0
      %928 = vmatpush2.bf16.msra.mxu0 0
      %929 = vmatprep.subr.bf16.mxu0 0
      %930 = vmatpush2.bf16.msra.mxu0 0
      %931 = vmatprep.mubr.bf16.mxu0 0
      %932 = vmatmul.mubr.bf16.gmra.mxu0 %v870
      %v933 = vpop.f32.mrf.mxu0
      %v934 = vadd.f32 0.0, %v933
      %v935 = vpop.f32.mrf.mxu0
      %v936 = vadd.f32 0.0, %v935
      %v937 = vpop.f32.mrf.mxu0
      %v938 = vpop.f32.mrf.mxu0
      %939 = vdwg.mxu0
      %940 = vmatprep.subr.bf16.mxu0 0
      %941 = vmatpush1.bf16.msra.mxu0 0
      %942 = vmatprep.subr.bf16.mxu0 0
      %943 = vmatpush1.bf16.msra.mxu0 0
      %944 = vmatprep.subr.bf16.mxu0 0
      %945 = vmatpush1.bf16.msra.mxu0 0
      %946 = vmatprep.subr.bf16.mxu0 %v882
      %947 = vmatpush1.bf16.msra.mxu0 %v879
      %948 = vmatprep.subr.bf16.mxu0 %v845
      %949 = vmatpush1.bf16.msra.mxu0 %v841
      %950 = vmatprep.subr.bf16.mxu0 %v809
      %951 = vmatpush1.bf16.msra.mxu0 %v805
      %952 = vmatprep.subr.bf16.mxu0 %v773
      %953 = vmatpush1.bf16.msra.mxu0 %v769
      %954 = vmatprep.subr.bf16.mxu0 %v737
      %955 = vmatpush1.bf16.msra.mxu0 %v733
      %956 = vmatprep.subr.bf16.mxu0 0
      %957 = vmatpush2.bf16.msra.mxu0 0
      %958 = vmatprep.subr.bf16.mxu0 0
      %959 = vmatpush2.bf16.msra.mxu0 0
      %960 = vmatprep.subr.bf16.mxu0 0
      %961 = vmatpush2.bf16.msra.mxu0 0
      %962 = vmatprep.subr.bf16.mxu0 0
      %963 = vmatpush2.bf16.msra.mxu0 0
      %964 = vmatprep.subr.bf16.mxu0 0
      %965 = vmatpush2.bf16.msra.mxu0 0
      %966 = vmatprep.subr.bf16.mxu0 0
      %967 = vmatpush2.bf16.msra.mxu0 0
      %968 = vmatprep.subr.bf16.mxu0 0
      %969 = vmatpush2.bf16.msra.mxu0 0
      %970 = vmatprep.subr.bf16.mxu0 0
      %971 = vmatpush2.bf16.msra.mxu0 0
      %972 = vmatprep.mubr.bf16.mxu0 0
      %973 = vmatmul.mubr.bf16.gmra.mxu0 %v870
      %v974 = vpop.f32.mrf.mxu0
      %v975 = vadd.f32 0.0, %v974
      %v976 = vpop.f32.mrf.mxu0
      %v977 = vadd.f32 0.0, %v976
      %v978 = vpop.f32.mrf.mxu0
      %v979 = vpop.f32.mrf.mxu0
      %980 = vdwg.mxu0
      %981 = vmatprep.subr.bf16.mxu0 0
      %982 = vmatpush1.bf16.msra.mxu0 0
      %983 = vmatprep.subr.bf16.mxu0 0
      %984 = vmatpush1.bf16.msra.mxu0 0
      %985 = vmatprep.subr.bf16.mxu0 0
      %986 = vmatpush1.bf16.msra.mxu0 0
      %987 = vmatprep.subr.bf16.mxu0 %v888
      %988 = vmatpush1.bf16.msra.mxu0 %v885
      %989 = vmatprep.subr.bf16.mxu0 %v853
      %990 = vmatpush1.bf16.msra.mxu0 %v849
      %991 = vmatprep.subr.bf16.mxu0 %v817
      %992 = vmatpush1.bf16.msra.mxu0 %v813
      %993 = vmatprep.subr.bf16.mxu0 %v781
      %994 = vmatpush1.bf16.msra.mxu0 %v777
      %995 = vmatprep.subr.bf16.mxu0 %v745
      %996 = vmatpush1.bf16.msra.mxu0 %v741
      %997 = vmatprep.subr.bf16.mxu0 0
      %998 = vmatpush2.bf16.msra.mxu0 0
      %999 = vmatprep.subr.bf16.mxu0 0
      %1000 = vmatpush2.bf16.msra.mxu0 0
      %1001 = vmatprep.subr.bf16.mxu0 0
      %1002 = vmatpush2.bf16.msra.mxu0 0
      %1003 = vmatprep.subr.bf16.mxu0 0
      %1004 = vmatpush2.bf16.msra.mxu0 0
      %1005 = vmatprep.subr.bf16.mxu0 0
      %1006 = vmatpush2.bf16.msra.mxu0 0
      %1007 = vmatprep.subr.bf16.mxu0 0
      %1008 = vmatpush2.bf16.msra.mxu0 0
      %1009 = vmatprep.subr.bf16.mxu0 0
      %1010 = vmatpush2.bf16.msra.mxu0 0
      %1011 = vmatprep.subr.bf16.mxu0 0
      %1012 = vmatpush2.bf16.msra.mxu0 0
      %1013 = vmatprep.mubr.bf16.mxu0 0
      %1014 = vmatmul.mubr.bf16.gmra.mxu0 %v870
      %v1015 = vpop.f32.mrf.mxu0
      %v1016 = vadd.f32 0.0, %v1015
      %v1017 = vpop.f32.mrf.mxu0
      %v1018 = vadd.f32 0.0, %v1017
      %v1019 = vpop.f32.mrf.mxu0
      %v1020 = vpop.f32.mrf.mxu0
      %1021 = vdwg.mxu0
      %1022 = vmatprep.subr.bf16.mxu0 0
      %1023 = vmatpush1.bf16.msra.mxu0 0
      %1024 = vmatprep.subr.bf16.mxu0 0
      %1025 = vmatpush1.bf16.msra.mxu0 0
      %1026 = vmatprep.subr.bf16.mxu0 0
      %1027 = vmatpush1.bf16.msra.mxu0 0
      %1028 = vmatprep.subr.bf16.mxu0 %v894
      %1029 = vmatpush1.bf16.msra.mxu0 %v891
      %1030 = vmatprep.subr.bf16.mxu0 %v861
      %1031 = vmatpush1.bf16.msra.mxu0 %v857
      %1032 = vmatprep.subr.bf16.mxu0 %v825
      %1033 = vmatpush1.bf16.msra.mxu0 %v821
      %1034 = vmatprep.subr.bf16.mxu0 %v789
      %1035 = vmatpush1.bf16.msra.mxu0 %v785
      %1036 = vmatprep.subr.bf16.mxu0 %v753
      %1037 = vmatpush1.bf16.msra.mxu0 %v749
      %1038 = vmatprep.subr.bf16.mxu0 0
      %1039 = vmatpush2.bf16.msra.mxu0 0
      %1040 = vmatprep.subr.bf16.mxu0 0
      %1041 = vmatpush2.bf16.msra.mxu0 0
      %1042 = vmatprep.subr.bf16.mxu0 0
      %1043 = vmatpush2.bf16.msra.mxu0 0
      %1044 = vmatprep.subr.bf16.mxu0 0
      %1045 = vmatpush2.bf16.msra.mxu0 0
      %1046 = vmatprep.subr.bf16.mxu0 0
      %1047 = vmatpush2.bf16.msra.mxu0 0
      %1048 = vmatprep.subr.bf16.mxu0 0
      %1049 = vmatpush2.bf16.msra.mxu0 0
      %1050 = vmatprep.subr.bf16.mxu0 0
      %1051 = vmatpush2.bf16.msra.mxu0 0
      %1052 = vmatprep.subr.bf16.mxu0 0
      %1053 = vmatpush2.bf16.msra.mxu0 0
      %1054 = vmatprep.mubr.bf16.mxu0 0
      %1055 = vmatmul.mubr.bf16.gmra.mxu0 %v870
      %v1056 = vpop.f32.mrf.mxu0
      %v1057 = vadd.f32 0.0, %v1056
      %v1058 = vpop.f32.mrf.mxu0
      %v1059 = vadd.f32 0.0, %v1058
      %v1060 = vpop.f32.mrf.mxu0
      %v1061 = vpop.f32.mrf.mxu0
      %1062 = vdwg.mxu0
      %1063 = vmatprep.subr.bf16.mxu0 0
      %1064 = vmatpush1.bf16.msra.mxu0 0
      %1065 = vmatprep.subr.bf16.mxu0 0
      %1066 = vmatpush1.bf16.msra.mxu0 0
      %1067 = vmatprep.subr.bf16.mxu0 0
      %1068 = vmatpush1.bf16.msra.mxu0 0
      %1069 = vmatprep.subr.bf16.mxu0 0
      %1070 = vmatpush1.bf16.msra.mxu0 %v897
      %1071 = vmatprep.subr.bf16.mxu0 0
      %1072 = vmatpush1.bf16.msra.mxu0 %v865
      %1073 = vmatprep.subr.bf16.mxu0 0
      %1074 = vmatpush1.bf16.msra.mxu0 %v829
      %1075 = vmatprep.subr.bf16.mxu0 0
      %1076 = vmatpush1.bf16.msra.mxu0 %v793
      %1077 = vmatprep.subr.bf16.mxu0 0
      %1078 = vmatpush1.bf16.msra.mxu0 %v757
      %1079 = vmatprep.subr.bf16.mxu0 0
      %1080 = vmatpush2.bf16.msra.mxu0 0
      %1081 = vmatprep.subr.bf16.mxu0 0
      %1082 = vmatpush2.bf16.msra.mxu0 0
      %1083 = vmatprep.subr.bf16.mxu0 0
      %1084 = vmatpush2.bf16.msra.mxu0 0
      %1085 = vmatprep.subr.bf16.mxu0 0
      %1086 = vmatpush2.bf16.msra.mxu0 0
      %1087 = vmatprep.subr.bf16.mxu0 0
      %1088 = vmatpush2.bf16.msra.mxu0 0
      %1089 = vmatprep.subr.bf16.mxu0 0
      %1090 = vmatpush2.bf16.msra.mxu0 0
      %1091 = vmatprep.subr.bf16.mxu0 0
      %1092 = vmatpush2.bf16.msra.mxu0 0
      %1093 = vmatprep.subr.bf16.mxu0 0
      %1094 = vmatpush2.bf16.msra.mxu0 0
      %1095 = vmatprep.mubr.bf16.mxu0 0
      %1096 = vmatmul.mubr.bf16.gmra.mxu0 %v870
      %v1097 = vpop.f32.mrf.mxu0
      %v1098 = vadd.f32 0.0, %v1097
      %v1099 = vpop.f32.mrf.mxu0
      %v1100 = vpop.f32.mrf.mxu0
      %v1101 = vpop.f32.mrf.mxu0
      %1102 = vdwg.mxu0
      %v1103 = vld [vmem:[%s2] sm:$0xf]
      %1105 = vset.pattern.permute.xlu0 0
      %1106 = vperm.xlu0 %1105, %v1103
      %v1107 = vpop.permute.xlu0 %1106
      %v1108 = vrot.slane %v1107, 4
      %v1110 = vadd.f32 %v934, %v1108
      %v1111 = vadd.f32 %v936, %v1108
      %v1112 = vadd.f32 %v975, %v1108
      %v1113 = vadd.f32 %v977, %v1108
      %v1114 = vadd.f32 %v1016, %v1108
      %v1115 = vadd.f32 %v1018, %v1108
      %v1116 = vadd.f32 %v1057, %v1108
      %v1117 = vadd.f32 %v1059, %v1108
      %v1118 = vadd.f32 %v1098, %v1108
      %v1119 = vmax.f32 %v1110, 0.0
      %v1120 = vmax.f32 %v1111, 0.0
      %v1121 = vmax.f32 %v1112, 0.0
      %v1122 = vmax.f32 %v1113, 0.0
      %v1123 = vmax.f32 %v1114, 0.0
      %v1124 = vmax.f32 %v1115, 0.0
      %v1125 = vmax.f32 %v1116, 0.0
      %v1126 = vmax.f32 %v1117, 0.0
      %v1127 = vmax.f32 %v1118, 0.0
      %v1128 = vmul.f32 %v1119, %v443
      %v1129 = vmul.f32 %v1120, %v444
      %v1130 = vmul.f32 %v1121, %v445
      %v1131 = vmul.f32 %v1122, %v446
      %v1132 = vmul.f32 %v1123, %v447
      %v1133 = vmul.f32 %v1124, %v448
      %v1134 = vmul.f32 %v1125, %v449
      %v1135 = vmul.f32 %v1126, %v450
      %v1136 = vmul.f32 %v1127, %v451
      %v1146 = vrot.slane %v1128, 4
      %v1147 = vrot.slane %v1129, 4
      %v1148 = vrot.slane %v1130, 4
      %v1149 = vrot.slane %v1131, 4
      %v1150 = vrot.slane %v1132, 4
      %v1151 = vrot.slane %v1133, 4
      %v1152 = vrot.slane %v1134, 4
      %v1153 = vrot.slane %v1135, 4
      %v1154 = vrot.slane %v1136, 4
      %1155 = vrot.lane.b32.xlu0 %v1146, 35
      %v1156 = vpop.permute.xlu0 %1155
      %1157 = vrot.lane.b32.xlu0 %v1147, 35
      %v1158 = vpop.permute.xlu0 %1157
      %1159 = vrot.lane.b32.xlu0 %v1148, 35
      %v1160 = vpop.permute.xlu0 %1159
      %1161 = vrot.lane.b32.xlu0 %v1149, 35
      %v1162 = vpop.permute.xlu0 %1161
      %1163 = vrot.lane.b32.xlu0 %v1150, 35
      %v1164 = vpop.permute.xlu0 %1163
      %1165 = vrot.lane.b32.xlu0 %v1151, 35
      %v1166 = vpop.permute.xlu0 %1165
      %1167 = vrot.lane.b32.xlu0 %v1152, 35
      %v1168 = vpop.permute.xlu0 %1167
      %1169 = vrot.lane.b32.xlu0 %v1153, 35
      %v1170 = vpop.permute.xlu0 %1169
      %1171 = vrot.lane.b32.xlu0 %v1154, 35
      %v1172 = vpop.permute.xlu0 %1171
      %vm1173 = vcmask 285696
      %v1174 = vsel %vm1173, %v1156, %v1158
      %v1175 = vsel %vm1173, %v1158, %v1160
      %v1176 = vsel %vm1173, %v1160, %v1162
      %v1177 = vsel %vm1173, %v1162, %v1164
      %v1178 = vsel %vm1173, %v1164, %v1166
      %v1179 = vsel %vm1173, %v1166, %v1168
      %v1180 = vsel %vm1173, %v1168, %v1170
      %v1181 = vsel %vm1173, %v1170, %v1172
      %v1192 = vsel %vm1173, 0.0, %v1156
      %v1193 = vsel %vm1173, %v1172, 0.0
      %v1194 = vsel %vm722, %v1192, 0.0
      %v1195 = vsel %vm722, %v1174, 0.0
      %v1196 = vsel %vm722, %v1175, 0.0
      %v1197 = vsel %vm722, %v1176, 0.0
      %v1198 = vsel %vm722, %v1177, 0.0
      %v1199 = vsel %vm722, %v1178, 0.0
      %v1200 = vsel %vm722, %v1179, 0.0
      %v1201 = vsel %vm722, %v1180, 0.0
      %v1202 = vsel %vm722, %v1181, 0.0
      %v1203 = vsel %vm722, %v1193, 0.0
      %v1204 = vpack.c.bf16 %v1194, %v1194
      %v1205 = vpack.c.bf16 %v1195, %v1195
      %v1206 = vpack.c.bf16 %v1196, %v1196
      %v1207 = vpack.c.bf16 %v1197, %v1197
      %v1208 = vpack.c.bf16 %v1198, %v1198
      %v1209 = vpack.c.bf16 %v1199, %v1199
      %v1210 = vpack.c.bf16 %v1200, %v1200
      %v1211 = vpack.c.bf16 %v1201, %v1201
      %v1212 = vpack.c.bf16 %v1202, %v1202
      %v1213 = vpack.c.bf16 %v1203, %v1203
      %v1224 = vunpack.c.l.b16 %v1204
      %v1225 = vunpack.c.l.b16 %v1205
      %v1226 = vunpack.c.l.b16 %v1206
      %v1227 = vunpack.c.l.b16 %v1207
      %v1228 = vunpack.c.l.b16 %v1208
      %v1229 = vunpack.c.l.b16 %v1209
      %v1230 = vunpack.c.l.b16 %v1210
      %v1231 = vunpack.c.l.b16 %v1211
      %v1232 = vunpack.c.l.b16 %v1212
      %v1233 = vunpack.c.l.b16 %v1213
      %v1234 = vpack.c.b16 %v1225, %v1224
      %v1235 = vpack.c.b16 %v1227, %v1226
      %v1236 = vpack.c.b16 %v1229, %v1228
      %v1237 = vpack.c.b16 %v1231, %v1230
      %v1238 = vpack.c.b16 %v1233, %v1232
      %1244 = vst [vmem:[#allocation2] sm:$0xff] %v1234
      %1245 = vst [vmem:[#allocation2 + $0x8] sm:$0xff] %v1235
      %1246 = vst [vmem:[#allocation2 + $0x10] sm:$0xff] %v1236
      %1247 = vst [vmem:[#allocation2 + $0x18] sm:$0xff] %v1237
      %1248 = vst [vmem:[#allocation2 + $0x20] sm:$0xff] %v1238
      %v1249 = vld [vmem:[#allocation2] sm:$0xff]
      %v1250 = vld [vmem:[#allocation2 + $0x8] sm:$0xff]
      %v1251 = vld [vmem:[#allocation2 + $0x10] sm:$0xff]
      %v1252 = vld [vmem:[#allocation2 + $0x18] sm:$0xff]
      %v1253 = vld [vmem:[#allocation2 + $0x20] sm:$0xff]
      %v1259 = vunpack.c.l.b16 %v1249
      %v1260 = vunpack.c.h.b16 %v1249
      %v1261 = vunpack.c.l.b16 %v1250
      %v1262 = vunpack.c.h.b16 %v1250
      %v1263 = vunpack.c.l.b16 %v1251
      %v1264 = vunpack.c.h.b16 %v1251
      %v1265 = vunpack.c.l.b16 %v1252
      %v1266 = vunpack.c.h.b16 %v1252
      %v1267 = vunpack.c.l.b16 %v1253
      %v1268 = vpack.c.b16 %v1259, %v1259
      %v1269 = vpack.c.b16 %v1260, %v1260
      %v1270 = vpack.c.b16 %v1261, %v1261
      %v1271 = vpack.c.b16 %v1262, %v1262
      %v1272 = vpack.c.b16 %v1263, %v1263
      %v1273 = vpack.c.b16 %v1264, %v1264
      %v1274 = vpack.c.b16 %v1265, %v1265
      %v1275 = vpack.c.b16 %v1266, %v1266
      %v1276 = vpack.c.b16 %v1267, %v1267
      %v1277 = vunpack.c.h.b16 %v1253
      %v1278 = vpack.c.b16 %v1277, %v1277
      %1279 = vrot.lane.b32.xlu0 %v1268, 127
      %v1280 = vpop.permute.xlu0 %1279
      %1281 = vrot.lane.b32.xlu0 %v1269, 127
      %v1282 = vpop.permute.xlu0 %1281
      %1283 = vrot.lane.b32.xlu0 %v1270, 127
      %v1284 = vpop.permute.xlu0 %1283
      %1285 = vrot.lane.b32.xlu0 %v1271, 127
      %v1286 = vpop.permute.xlu0 %1285
      %1287 = vrot.lane.b32.xlu0 %v1272, 127
      %v1288 = vpop.permute.xlu0 %1287
      %1289 = vrot.lane.b32.xlu0 %v1273, 127
      %v1290 = vpop.permute.xlu0 %1289
      %1291 = vrot.lane.b32.xlu0 %v1274, 127
      %v1292 = vpop.permute.xlu0 %1291
      %1293 = vrot.lane.b32.xlu0 %v1275, 127
      %v1294 = vpop.permute.xlu0 %1293
      %1295 = vrot.lane.b32.xlu0 %v1276, 127
      %v1296 = vpop.permute.xlu0 %1295
      %1297 = vrot.lane.b32.xlu0 %v1278, 127
      %v1298 = vpop.permute.xlu0 %1297
      %v1299 = vsel %vm502, %v1280, %v1282
      %v1300 = vsel %vm502, %v1282, %v1284
      %v1301 = vsel %vm502, %v1284, %v1286
      %v1302 = vsel %vm502, %v1286, %v1288
      %v1303 = vsel %vm502, %v1288, %v1290
      %v1304 = vsel %vm502, %v1290, %v1292
      %v1305 = vsel %vm502, %v1292, %v1294
      %v1306 = vsel %vm502, %v1294, %v1296
      %v1307 = vsel %vm502, %v1296, %v1298
      %1308 = vrot.lane.b32.xlu0 %v1268, 126
      %v1309 = vpop.permute.xlu0 %1308
      %1310 = vrot.lane.b32.xlu0 %v1269, 126
      %v1311 = vpop.permute.xlu0 %1310
      %1312 = vrot.lane.b32.xlu0 %v1270, 126
      %v1313 = vpop.permute.xlu0 %1312
      %1314 = vrot.lane.b32.xlu0 %v1271, 126
      %v1315 = vpop.permute.xlu0 %1314
      %1316 = vrot.lane.b32.xlu0 %v1272, 126
      %v1317 = vpop.permute.xlu0 %1316
      %1318 = vrot.lane.b32.xlu0 %v1273, 126
      %v1319 = vpop.permute.xlu0 %1318
      %1320 = vrot.lane.b32.xlu0 %v1274, 126
      %v1321 = vpop.permute.xlu0 %1320
      %1322 = vrot.lane.b32.xlu0 %v1275, 126
      %v1323 = vpop.permute.xlu0 %1322
      %1324 = vrot.lane.b32.xlu0 %v1276, 126
      %v1325 = vpop.permute.xlu0 %1324
      %1326 = vrot.lane.b32.xlu0 %v1278, 126
      %v1327 = vpop.permute.xlu0 %1326
      %v1328 = vsel %vm532, %v1309, %v1311
      %v1329 = vsel %vm532, %v1311, %v1313
      %v1330 = vsel %vm532, %v1313, %v1315
      %v1331 = vsel %vm532, %v1315, %v1317
      %v1332 = vsel %vm532, %v1317, %v1319
      %v1333 = vsel %vm532, %v1319, %v1321
      %v1334 = vsel %vm532, %v1321, %v1323
      %v1335 = vsel %vm532, %v1323, %v1325
      %v1336 = vsel %vm532, %v1325, %v1327
      %1337 = vrot.lane.b32.xlu0 %v1268, 94
      %v1338 = vpop.permute.xlu0 %1337
      %1339 = vrot.lane.b32.xlu0 %v1269, 94
      %v1340 = vpop.permute.xlu0 %1339
      %1341 = vrot.lane.b32.xlu0 %v1270, 94
      %v1342 = vpop.permute.xlu0 %1341
      %1343 = vrot.lane.b32.xlu0 %v1271, 94
      %v1344 = vpop.permute.xlu0 %1343
      %1345 = vrot.lane.b32.xlu0 %v1272, 94
      %v1346 = vpop.permute.xlu0 %1345
      %1347 = vrot.lane.b32.xlu0 %v1273, 94
      %v1348 = vpop.permute.xlu0 %1347
      %1349 = vrot.lane.b32.xlu0 %v1274, 94
      %v1350 = vpop.permute.xlu0 %1349
      %1351 = vrot.lane.b32.xlu0 %v1275, 94
      %v1352 = vpop.permute.xlu0 %1351
      %1353 = vrot.lane.b32.xlu0 %v1276, 94
      %v1354 = vpop.permute.xlu0 %1353
      %1355 = vrot.lane.b32.xlu0 %v1278, 94
      %v1356 = vpop.permute.xlu0 %1355
      %v1357 = vsel %vm562, %v1338, %v1340
      %v1358 = vsel %vm562, %v1340, %v1342
      %v1359 = vsel %vm562, %v1342, %v1344
      %v1360 = vsel %vm562, %v1344, %v1346
      %v1361 = vsel %vm562, %v1346, %v1348
      %v1362 = vsel %vm562, %v1348, %v1350
      %v1363 = vsel %vm562, %v1350, %v1352
      %v1364 = vsel %vm562, %v1352, %v1354
      %v1365 = vsel %vm562, %v1354, %v1356
      %1366 = vrot.lane.b32.xlu0 %v1268, 93
      %v1367 = vpop.permute.xlu0 %1366
      %1368 = vrot.lane.b32.xlu0 %v1269, 93
      %v1369 = vpop.permute.xlu0 %1368
      %1370 = vrot.lane.b32.xlu0 %v1270, 93
      %v1371 = vpop.permute.xlu0 %1370
      %1372 = vrot.lane.b32.xlu0 %v1271, 93
      %v1373 = vpop.permute.xlu0 %1372
      %1374 = vrot.lane.b32.xlu0 %v1272, 93
      %v1375 = vpop.permute.xlu0 %1374
      %1376 = vrot.lane.b32.xlu0 %v1273, 93
      %v1377 = vpop.permute.xlu0 %1376
      %1378 = vrot.lane.b32.xlu0 %v1274, 93
      %v1379 = vpop.permute.xlu0 %1378
      %1380 = vrot.lane.b32.xlu0 %v1275, 93
      %v1381 = vpop.permute.xlu0 %1380
      %1382 = vrot.lane.b32.xlu0 %v1276, 93
      %v1383 = vpop.permute.xlu0 %1382
      %1384 = vrot.lane.b32.xlu0 %v1278, 93
      %v1385 = vpop.permute.xlu0 %1384
      %v1386 = vsel %vm592, %v1367, %v1369
      %v1387 = vsel %vm592, %v1369, %v1371
      %v1388 = vsel %vm592, %v1371, %v1373
      %v1389 = vsel %vm592, %v1373, %v1375
      %v1390 = vsel %vm592, %v1375, %v1377
      %v1391 = vsel %vm592, %v1377, %v1379
      %v1392 = vsel %vm592, %v1379, %v1381
      %v1393 = vsel %vm592, %v1381, %v1383
      %v1394 = vsel %vm592, %v1383, %v1385
      %1395 = vrot.lane.b32.xlu0 %v1268, 92
      %v1396 = vpop.permute.xlu0 %1395
      %1397 = vrot.lane.b32.xlu0 %v1269, 92
      %v1398 = vpop.permute.xlu0 %1397
      %1399 = vrot.lane.b32.xlu0 %v1270, 92
      %v1400 = vpop.permute.xlu0 %1399
      %1401 = vrot.lane.b32.xlu0 %v1271, 92
      %v1402 = vpop.permute.xlu0 %1401
      %1403 = vrot.lane.b32.xlu0 %v1272, 92
      %v1404 = vpop.permute.xlu0 %1403
      %1405 = vrot.lane.b32.xlu0 %v1273, 92
      %v1406 = vpop.permute.xlu0 %1405
      %1407 = vrot.lane.b32.xlu0 %v1274, 92
      %v1408 = vpop.permute.xlu0 %1407
      %1409 = vrot.lane.b32.xlu0 %v1275, 92
      %v1410 = vpop.permute.xlu0 %1409
      %1411 = vrot.lane.b32.xlu0 %v1276, 92
      %v1412 = vpop.permute.xlu0 %1411
      %1413 = vrot.lane.b32.xlu0 %v1278, 92
      %v1414 = vpop.permute.xlu0 %1413
      %v1415 = vsel %vm622, %v1396, %v1398
      %v1416 = vsel %vm622, %v1398, %v1400
      %v1417 = vsel %vm622, %v1400, %v1402
      %v1418 = vsel %vm622, %v1402, %v1404
      %v1419 = vsel %vm622, %v1404, %v1406
      %v1420 = vsel %vm622, %v1406, %v1408
      %v1421 = vsel %vm622, %v1408, %v1410
      %v1422 = vsel %vm622, %v1410, %v1412
      %v1423 = vsel %vm622, %v1412, %v1414
      %1424 = vrot.lane.b32.xlu0 %v1268, 60
      %v1425 = vpop.permute.xlu0 %1424
      %1426 = vrot.lane.b32.xlu0 %v1269, 60
      %v1427 = vpop.permute.xlu0 %1426
      %1428 = vrot.lane.b32.xlu0 %v1270, 60
      %v1429 = vpop.permute.xlu0 %1428
      %1430 = vrot.lane.b32.xlu0 %v1271, 60
      %v1431 = vpop.permute.xlu0 %1430
      %1432 = vrot.lane.b32.xlu0 %v1272, 60
      %v1433 = vpop.permute.xlu0 %1432
      %1434 = vrot.lane.b32.xlu0 %v1273, 60
      %v1435 = vpop.permute.xlu0 %1434
      %1436 = vrot.lane.b32.xlu0 %v1274, 60
      %v1437 = vpop.permute.xlu0 %1436
      %1438 = vrot.lane.b32.xlu0 %v1275, 60
      %v1439 = vpop.permute.xlu0 %1438
      %1440 = vrot.lane.b32.xlu0 %v1276, 60
      %v1441 = vpop.permute.xlu0 %1440
      %1442 = vrot.lane.b32.xlu0 %v1278, 60
      %v1443 = vpop.permute.xlu0 %1442
      %v1444 = vsel %vm652, %v1425, %v1427
      %v1445 = vsel %vm652, %v1427, %v1429
      %v1446 = vsel %vm652, %v1429, %v1431
      %v1447 = vsel %vm652, %v1431, %v1433
      %v1448 = vsel %vm652, %v1433, %v1435
      %v1449 = vsel %vm652, %v1435, %v1437
      %v1450 = vsel %vm652, %v1437, %v1439
      %v1451 = vsel %vm652, %v1439, %v1441
      %v1452 = vsel %vm652, %v1441, %v1443
      %1453 = vrot.lane.b32.xlu0 %v1268, 59
      %v1454 = vpop.permute.xlu0 %1453
      %1455 = vrot.lane.b32.xlu0 %v1269, 59
      %v1456 = vpop.permute.xlu0 %1455
      %1457 = vrot.lane.b32.xlu0 %v1270, 59
      %v1458 = vpop.permute.xlu0 %1457
      %1459 = vrot.lane.b32.xlu0 %v1271, 59
      %v1460 = vpop.permute.xlu0 %1459
      %1461 = vrot.lane.b32.xlu0 %v1272, 59
      %v1462 = vpop.permute.xlu0 %1461
      %1463 = vrot.lane.b32.xlu0 %v1273, 59
      %v1464 = vpop.permute.xlu0 %1463
      %1465 = vrot.lane.b32.xlu0 %v1274, 59
      %v1466 = vpop.permute.xlu0 %1465
      %1467 = vrot.lane.b32.xlu0 %v1275, 59
      %v1468 = vpop.permute.xlu0 %1467
      %1469 = vrot.lane.b32.xlu0 %v1276, 59
      %v1470 = vpop.permute.xlu0 %1469
      %1471 = vrot.lane.b32.xlu0 %v1278, 59
      %v1472 = vpop.permute.xlu0 %1471
      %v1473 = vsel %vm682, %v1454, %v1456
      %v1474 = vsel %vm682, %v1456, %v1458
      %v1475 = vsel %vm682, %v1458, %v1460
      %v1476 = vsel %vm682, %v1460, %v1462
      %v1477 = vsel %vm682, %v1462, %v1464
      %v1478 = vsel %vm682, %v1464, %v1466
      %v1479 = vsel %vm682, %v1466, %v1468
      %v1480 = vsel %vm682, %v1468, %v1470
      %v1481 = vsel %vm682, %v1470, %v1472
      %1482 = vrot.lane.b32.xlu0 %v1268, 58
      %v1483 = vpop.permute.xlu0 %1482
      %1484 = vrot.lane.b32.xlu0 %v1269, 58
      %v1485 = vpop.permute.xlu0 %1484
      %1486 = vrot.lane.b32.xlu0 %v1270, 58
      %v1487 = vpop.permute.xlu0 %1486
      %1488 = vrot.lane.b32.xlu0 %v1271, 58
      %v1489 = vpop.permute.xlu0 %1488
      %1490 = vrot.lane.b32.xlu0 %v1272, 58
      %v1491 = vpop.permute.xlu0 %1490
      %1492 = vrot.lane.b32.xlu0 %v1273, 58
      %v1493 = vpop.permute.xlu0 %1492
      %1494 = vrot.lane.b32.xlu0 %v1274, 58
      %v1495 = vpop.permute.xlu0 %1494
      %1496 = vrot.lane.b32.xlu0 %v1275, 58
      %v1497 = vpop.permute.xlu0 %1496
      %1498 = vrot.lane.b32.xlu0 %v1276, 58
      %v1499 = vpop.permute.xlu0 %1498
      %1500 = vrot.lane.b32.xlu0 %v1278, 58
      %v1501 = vpop.permute.xlu0 %1500
      %v1502 = vsel %vm712, %v1483, %v1485
      %v1503 = vsel %vm712, %v1485, %v1487
      %v1504 = vsel %vm712, %v1487, %v1489
      %v1505 = vsel %vm712, %v1489, %v1491
      %v1506 = vsel %vm712, %v1491, %v1493
      %v1507 = vsel %vm712, %v1493, %v1495
      %v1508 = vsel %vm712, %v1495, %v1497
      %v1509 = vsel %vm712, %v1497, %v1499
      %v1510 = vsel %vm712, %v1499, %v1501
      %v1513 = vsel %vm722, %v1268, %v1299
      %v1517 = vsel %vm722, %v1269, %v1300
      %v1521 = vsel %vm722, %v1270, %v1301
      %v1525 = vsel %vm722, %v1271, %v1302
      %v1529 = vsel %vm722, %v1272, %v1303
      %v1533 = vsel %vm722, %v1273, %v1304
      %v1537 = vsel %vm722, %v1274, %v1305
      %v1541 = vsel %vm722, %v1275, %v1306
      %v1545 = vsel %vm722, %v1276, %v1307
      %v1549 = vsel %vm722, %v1328, %v1357
      %v1553 = vsel %vm722, %v1329, %v1358
      %v1557 = vsel %vm722, %v1330, %v1359
      %v1561 = vsel %vm722, %v1331, %v1360
      %v1565 = vsel %vm722, %v1332, %v1361
      %v1569 = vsel %vm722, %v1333, %v1362
      %v1573 = vsel %vm722, %v1334, %v1363
      %v1577 = vsel %vm722, %v1335, %v1364
      %v1581 = vsel %vm722, %v1336, %v1365
      %v1585 = vsel %vm722, %v1386, %v1415
      %v1589 = vsel %vm722, %v1387, %v1416
      %v1593 = vsel %vm722, %v1388, %v1417
      %v1597 = vsel %vm722, %v1389, %v1418
      %v1601 = vsel %vm722, %v1390, %v1419
      %v1605 = vsel %vm722, %v1391, %v1420
      %v1609 = vsel %vm722, %v1392, %v1421
      %v1613 = vsel %vm722, %v1393, %v1422
      %v1617 = vsel %vm722, %v1394, %v1423
      %v1621 = vsel %vm722, %v1444, %v1473
      %v1625 = vsel %vm722, %v1445, %v1474
      %v1629 = vsel %vm722, %v1446, %v1475
      %v1633 = vsel %vm722, %v1447, %v1476
      %v1637 = vsel %vm722, %v1448, %v1477
      %v1641 = vsel %vm722, %v1449, %v1478
      %v1645 = vsel %vm722, %v1450, %v1479
      %v1649 = vsel %vm722, %v1451, %v1480
      %v1653 = vsel %vm722, %v1452, %v1481
      %v1655 = vld [vmem:[%s3] sm:$0x3]
      %v1656 = vld [vmem:[%s4] sm:$0xf]
      %1658 = vset.pattern.permute.xlu0 0
      %1659 = vperm.xlu0 %1658, %v1656
      %v1660 = vpop.permute.xlu0 %1659
      %v1663 = vsel %vm868, %v1655, 0
      %v1666 = vsel %vm722, %v1502, 0
      %v1669 = vsel %vm722, %v1503, 0
      %v1672 = vsel %vm722, %v1504, 0
      %v1675 = vsel %vm722, %v1505, 0
      %v1678 = vsel %vm722, %v1506, 0
      %v1681 = vsel %vm722, %v1507, 0
      %v1684 = vsel %vm722, %v1508, 0
      %v1687 = vsel %vm722, %v1509, 0
      %v1690 = vsel %vm722, %v1510, 0
      %1692 = vmatprep.subr.bf16.mxu0 0
      %1693 = vmatpush1.bf16.msra.mxu0 0
      %1694 = vmatprep.subr.bf16.mxu0 0
      %1695 = vmatpush1.bf16.msra.mxu0 0
      %1696 = vmatprep.subr.bf16.mxu0 0
      %1697 = vmatpush1.bf16.msra.mxu0 0
      %1698 = vmatprep.subr.bf16.mxu0 %v1669
      %1699 = vmatpush1.bf16.msra.mxu0 %v1666
      %1700 = vmatprep.subr.bf16.mxu0 %v1625
      %1701 = vmatpush1.bf16.msra.mxu0 %v1621
      %1702 = vmatprep.subr.bf16.mxu0 %v1589
      %1703 = vmatpush1.bf16.msra.mxu0 %v1585
      %1704 = vmatprep.subr.bf16.mxu0 %v1553
      %1705 = vmatpush1.bf16.msra.mxu0 %v1549
      %1706 = vmatprep.subr.bf16.mxu0 %v1517
      %1707 = vmatpush1.bf16.msra.mxu0 %v1513
      %1708 = vmatprep.subr.bf16.mxu0 0
      %1709 = vmatpush2.bf16.msra.mxu0 0
      %1710 = vmatprep.subr.bf16.mxu0 0
      %1711 = vmatpush2.bf16.msra.mxu0 0
      %1712 = vmatprep.subr.bf16.mxu0 0
      %1713 = vmatpush2.bf16.msra.mxu0 0
      %1714 = vmatprep.subr.bf16.mxu0 0
      %1715 = vmatpush2.bf16.msra.mxu0 0
      %1716 = vmatprep.subr.bf16.mxu0 0
      %1717 = vmatpush2.bf16.msra.mxu0 0
      %1718 = vmatprep.subr.bf16.mxu0 0
      %1719 = vmatpush2.bf16.msra.mxu0 0
      %1720 = vmatprep.subr.bf16.mxu0 0
      %1721 = vmatpush2.bf16.msra.mxu0 0
      %1722 = vmatprep.subr.bf16.mxu0 0
      %1723 = vmatpush2.bf16.msra.mxu0 0
      %1724 = vmatprep.mubr.bf16.mxu0 0
      %1725 = vmatmul.mubr.bf16.gmra.mxu0 %v1663
      %v1726 = vpop.f32.mrf.mxu0
      %v1727 = vadd.f32 %v1660, %v1726
      %v1728 = vpop.f32.mrf.mxu0
      %v1729 = vadd.f32 %v1660, %v1728
      %v1730 = vpop.f32.mrf.mxu0
      %v1731 = vpop.f32.mrf.mxu0
      %1732 = vdwg.mxu0
      %1733 = vmatprep.subr.bf16.mxu0 0
      %1734 = vmatpush1.bf16.msra.mxu0 0
      %1735 = vmatprep.subr.bf16.mxu0 0
      %1736 = vmatpush1.bf16.msra.mxu0 0
      %1737 = vmatprep.subr.bf16.mxu0 0
      %1738 = vmatpush1.bf16.msra.mxu0 0
      %1739 = vmatprep.subr.bf16.mxu0 %v1675
      %1740 = vmatpush1.bf16.msra.mxu0 %v1672
      %1741 = vmatprep.subr.bf16.mxu0 %v1633
      %1742 = vmatpush1.bf16.msra.mxu0 %v1629
      %1743 = vmatprep.subr.bf16.mxu0 %v1597
      %1744 = vmatpush1.bf16.msra.mxu0 %v1593
      %1745 = vmatprep.subr.bf16.mxu0 %v1561
      %1746 = vmatpush1.bf16.msra.mxu0 %v1557
      %1747 = vmatprep.subr.bf16.mxu0 %v1525
      %1748 = vmatpush1.bf16.msra.mxu0 %v1521
      %1749 = vmatprep.subr.bf16.mxu0 0
      %1750 = vmatpush2.bf16.msra.mxu0 0
      %1751 = vmatprep.subr.bf16.mxu0 0
      %1752 = vmatpush2.bf16.msra.mxu0 0
      %1753 = vmatprep.subr.bf16.mxu0 0
      %1754 = vmatpush2.bf16.msra.mxu0 0
      %1755 = vmatprep.subr.bf16.mxu0 0
      %1756 = vmatpush2.bf16.msra.mxu0 0
      %1757 = vmatprep.subr.bf16.mxu0 0
      %1758 = vmatpush2.bf16.msra.mxu0 0
      %1759 = vmatprep.subr.bf16.mxu0 0
      %1760 = vmatpush2.bf16.msra.mxu0 0
      %1761 = vmatprep.subr.bf16.mxu0 0
      %1762 = vmatpush2.bf16.msra.mxu0 0
      %1763 = vmatprep.subr.bf16.mxu0 0
      %1764 = vmatpush2.bf16.msra.mxu0 0
      %1765 = vmatprep.mubr.bf16.mxu0 0
      %1766 = vmatmul.mubr.bf16.gmra.mxu0 %v1663
      %v1767 = vpop.f32.mrf.mxu0
      %v1768 = vadd.f32 %v1660, %v1767
      %v1769 = vpop.f32.mrf.mxu0
      %v1770 = vadd.f32 %v1660, %v1769
      %v1771 = vpop.f32.mrf.mxu0
      %v1772 = vpop.f32.mrf.mxu0
      %1773 = vdwg.mxu0
      %1774 = vmatprep.subr.bf16.mxu0 0
      %1775 = vmatpush1.bf16.msra.mxu0 0
      %1776 = vmatprep.subr.bf16.mxu0 0
      %1777 = vmatpush1.bf16.msra.mxu0 0
      %1778 = vmatprep.subr.bf16.mxu0 0
      %1779 = vmatpush1.bf16.msra.mxu0 0
      %1780 = vmatprep.subr.bf16.mxu0 %v1681
      %1781 = vmatpush1.bf16.msra.mxu0 %v1678
      %1782 = vmatprep.subr.bf16.mxu0 %v1641
      %1783 = vmatpush1.bf16.msra.mxu0 %v1637
      %1784 = vmatprep.subr.bf16.mxu0 %v1605
      %1785 = vmatpush1.bf16.msra.mxu0 %v1601
      %1786 = vmatprep.subr.bf16.mxu0 %v1569
      %1787 = vmatpush1.bf16.msra.mxu0 %v1565
      %1788 = vmatprep.subr.bf16.mxu0 %v1533
      %1789 = vmatpush1.bf16.msra.mxu0 %v1529
      %1790 = vmatprep.subr.bf16.mxu0 0
      %1791 = vmatpush2.bf16.msra.mxu0 0
      %1792 = vmatprep.subr.bf16.mxu0 0
      %1793 = vmatpush2.bf16.msra.mxu0 0
      %1794 = vmatprep.subr.bf16.mxu0 0
      %1795 = vmatpush2.bf16.msra.mxu0 0
      %1796 = vmatprep.subr.bf16.mxu0 0
      %1797 = vmatpush2.bf16.msra.mxu0 0
      %1798 = vmatprep.subr.bf16.mxu0 0
      %1799 = vmatpush2.bf16.msra.mxu0 0
      %1800 = vmatprep.subr.bf16.mxu0 0
      %1801 = vmatpush2.bf16.msra.mxu0 0
      %1802 = vmatprep.subr.bf16.mxu0 0
      %1803 = vmatpush2.bf16.msra.mxu0 0
      %1804 = vmatprep.subr.bf16.mxu0 0
      %1805 = vmatpush2.bf16.msra.mxu0 0
      %1806 = vmatprep.mubr.bf16.mxu0 0
      %1807 = vmatmul.mubr.bf16.gmra.mxu0 %v1663
      %v1808 = vpop.f32.mrf.mxu0
      %v1809 = vadd.f32 %v1660, %v1808
      %v1810 = vpop.f32.mrf.mxu0
      %v1811 = vadd.f32 %v1660, %v1810
      %v1812 = vpop.f32.mrf.mxu0
      %v1813 = vpop.f32.mrf.mxu0
      %1814 = vdwg.mxu0
      %1815 = vmatprep.subr.bf16.mxu0 0
      %1816 = vmatpush1.bf16.msra.mxu0 0
      %1817 = vmatprep.subr.bf16.mxu0 0
      %1818 = vmatpush1.bf16.msra.mxu0 0
      %1819 = vmatprep.subr.bf16.mxu0 0
      %1820 = vmatpush1.bf16.msra.mxu0 0
      %1821 = vmatprep.subr.bf16.mxu0 %v1687
      %1822 = vmatpush1.bf16.msra.mxu0 %v1684
      %1823 = vmatprep.subr.bf16.mxu0 %v1649
      %1824 = vmatpush1.bf16.msra.mxu0 %v1645
      %1825 = vmatprep.subr.bf16.mxu0 %v1613
      %1826 = vmatpush1.bf16.msra.mxu0 %v1609
      %1827 = vmatprep.subr.bf16.mxu0 %v1577
      %1828 = vmatpush1.bf16.msra.mxu0 %v1573
      %1829 = vmatprep.subr.bf16.mxu0 %v1541
      %1830 = vmatpush1.bf16.msra.mxu0 %v1537
      %1831 = vmatprep.subr.bf16.mxu0 0
      %1832 = vmatpush2.bf16.msra.mxu0 0
      %1833 = vmatprep.subr.bf16.mxu0 0
      %1834 = vmatpush2.bf16.msra.mxu0 0
      %1835 = vmatprep.subr.bf16.mxu0 0
      %1836 = vmatpush2.bf16.msra.mxu0 0
      %1837 = vmatprep.subr.bf16.mxu0 0
      %1838 = vmatpush2.bf16.msra.mxu0 0
      %1839 = vmatprep.subr.bf16.mxu0 0
      %1840 = vmatpush2.bf16.msra.mxu0 0
      %1841 = vmatprep.subr.bf16.mxu0 0
      %1842 = vmatpush2.bf16.msra.mxu0 0
      %1843 = vmatprep.subr.bf16.mxu0 0
      %1844 = vmatpush2.bf16.msra.mxu0 0
      %1845 = vmatprep.subr.bf16.mxu0 0
      %1846 = vmatpush2.bf16.msra.mxu0 0
      %1847 = vmatprep.mubr.bf16.mxu0 0
      %1848 = vmatmul.mubr.bf16.gmra.mxu0 %v1663
      %v1849 = vpop.f32.mrf.mxu0
      %v1850 = vadd.f32 %v1660, %v1849
      %v1851 = vpop.f32.mrf.mxu0
      %v1852 = vadd.f32 %v1660, %v1851
      %v1853 = vpop.f32.mrf.mxu0
      %v1854 = vpop.f32.mrf.mxu0
      %1855 = vdwg.mxu0
      %1856 = vmatprep.subr.bf16.mxu0 0
      %1857 = vmatpush1.bf16.msra.mxu0 0
      %1858 = vmatprep.subr.bf16.mxu0 0
      %1859 = vmatpush1.bf16.msra.mxu0 0
      %1860 = vmatprep.subr.bf16.mxu0 0
      %1861 = vmatpush1.bf16.msra.mxu0 0
      %1862 = vmatprep.subr.bf16.mxu0 0
      %1863 = vmatpush1.bf16.msra.mxu0 %v1690
      %1864 = vmatprep.subr.bf16.mxu0 0
      %1865 = vmatpush1.bf16.msra.mxu0 %v1653
      %1866 = vmatprep.subr.bf16.mxu0 0
      %1867 = vmatpush1.bf16.msra.mxu0 %v1617
      %1868 = vmatprep.subr.bf16.mxu0 0
      %1869 = vmatpush1.bf16.msra.mxu0 %v1581
      %1870 = vmatprep.subr.bf16.mxu0 0
      %1871 = vmatpush1.bf16.msra.mxu0 %v1545
      %1872 = vmatprep.subr.bf16.mxu0 0
      %1873 = vmatpush2.bf16.msra.mxu0 0
      %1874 = vmatprep.subr.bf16.mxu0 0
      %1875 = vmatpush2.bf16.msra.mxu0 0
      %1876 = vmatprep.subr.bf16.mxu0 0
      %1877 = vmatpush2.bf16.msra.mxu0 0
      %1878 = vmatprep.subr.bf16.mxu0 0
      %1879 = vmatpush2.bf16.msra.mxu0 0
      %1880 = vmatprep.subr.bf16.mxu0 0
      %1881 = vmatpush2.bf16.msra.mxu0 0
      %1882 = vmatprep.subr.bf16.mxu0 0
      %1883 = vmatpush2.bf16.msra.mxu0 0
      %1884 = vmatprep.subr.bf16.mxu0 0
      %1885 = vmatpush2.bf16.msra.mxu0 0
      %1886 = vmatprep.subr.bf16.mxu0 0
      %1887 = vmatpush2.bf16.msra.mxu0 0
      %1888 = vmatprep.mubr.bf16.mxu0 0
      %1889 = vmatmul.mubr.bf16.gmra.mxu0 %v1663
      %v1890 = vpop.f32.mrf.mxu0
      %v1891 = vadd.f32 %v1660, %v1890
      %v1892 = vpop.f32.mrf.mxu0
      %v1893 = vpop.f32.mrf.mxu0
      %v1894 = vpop.f32.mrf.mxu0
      %1895 = vdwg.mxu0
      %v1896 = vmax.f32 %v1727, 0.0
      %v1897 = vmax.f32 %v1729, 0.0
      %v1898 = vmax.f32 %v1768, 0.0
      %v1899 = vmax.f32 %v1770, 0.0
      %v1900 = vmax.f32 %v1809, 0.0
      %v1901 = vmax.f32 %v1811, 0.0
      %v1902 = vmax.f32 %v1850, 0.0
      %v1903 = vmax.f32 %v1852, 0.0
      %v1904 = vmax.f32 %v1891, 0.0
      %v1914 = vrot.slane %v934, 4
      %v1915 = vrot.slane %v936, 4
      %v1916 = vrot.slane %v975, 4
      %v1917 = vrot.slane %v977, 4
      %v1918 = vrot.slane %v1016, 4
      %v1919 = vrot.slane %v1018, 4
      %v1920 = vrot.slane %v1057, 4
      %v1921 = vrot.slane %v1059, 4
      %v1922 = vrot.slane %v1098, 4
      %v1932 = vsel %vm722, %v1896, %v1914
      %v1933 = vsel %vm722, %v1897, %v1915
      %v1934 = vsel %vm722, %v1898, %v1916
      %v1935 = vsel %vm722, %v1899, %v1917
      %v1936 = vsel %vm722, %v1900, %v1918
      %v1937 = vsel %vm722, %v1901, %v1919
      %v1938 = vsel %vm722, %v1902, %v1920
      %v1939 = vsel %vm722, %v1903, %v1921
      %v1940 = vsel %vm722, %v1904, %v1922
      %v1941 = vmul.f32 %v1932, %v443
      %v1942 = vmul.f32 %v1933, %v444
      %v1943 = vmul.f32 %v1934, %v445
      %v1944 = vmul.f32 %v1935, %v446
      %v1945 = vmul.f32 %v1936, %v447
      %v1946 = vmul.f32 %v1937, %v448
      %v1947 = vmul.f32 %v1938, %v449
      %v1948 = vmul.f32 %v1939, %v450
      %v1949 = vmul.f32 %v1940, %v451
      %1959 = vrot.lane.b32.xlu0 %v1941, 35
      %v1960 = vpop.permute.xlu0 %1959
      %1961 = vrot.lane.b32.xlu0 %v1942, 35
      %v1962 = vpop.permute.xlu0 %1961
      %1963 = vrot.lane.b32.xlu0 %v1943, 35
      %v1964 = vpop.permute.xlu0 %1963
      %1965 = vrot.lane.b32.xlu0 %v1944, 35
      %v1966 = vpop.permute.xlu0 %1965
      %1967 = vrot.lane.b32.xlu0 %v1945, 35
      %v1968 = vpop.permute.xlu0 %1967
      %1969 = vrot.lane.b32.xlu0 %v1946, 35
      %v1970 = vpop.permute.xlu0 %1969
      %1971 = vrot.lane.b32.xlu0 %v1947, 35
      %v1972 = vpop.permute.xlu0 %1971
      %1973 = vrot.lane.b32.xlu0 %v1948, 35
      %v1974 = vpop.permute.xlu0 %1973
      %1975 = vrot.lane.b32.xlu0 %v1949, 35
      %v1976 = vpop.permute.xlu0 %1975
      %v1977 = vsel %vm1173, %v1960, %v1962
      %v1978 = vsel %vm1173, %v1962, %v1964
      %v1979 = vsel %vm1173, %v1964, %v1966
      %v1980 = vsel %vm1173, %v1966, %v1968
      %v1981 = vsel %vm1173, %v1968, %v1970
      %v1982 = vsel %vm1173, %v1970, %v1972
      %v1983 = vsel %vm1173, %v1972, %v1974
      %v1984 = vsel %vm1173, %v1974, %v1976
      %v1995 = vsel %vm1173, 0.0, %v1960
      %v1996 = vsel %vm1173, %v1976, 0.0
      %v1997 = vpack.c.bf16 %v1995, %v1995
      %v1998 = vpack.c.bf16 %v1977, %v1977
      %v1999 = vpack.c.bf16 %v1978, %v1978
      %v2000 = vpack.c.bf16 %v1979, %v1979
      %v2001 = vpack.c.bf16 %v1980, %v1980
      %v2002 = vpack.c.bf16 %v1981, %v1981
      %v2003 = vpack.c.bf16 %v1982, %v1982
      %v2004 = vpack.c.bf16 %v1983, %v1983
      %v2005 = vpack.c.bf16 %v1984, %v1984
      %v2006 = vpack.c.bf16 %v1996, %v1996
      %v2017 = vunpack.c.l.b16 %v1997
      %v2018 = vunpack.c.l.b16 %v1998
      %v2019 = vunpack.c.l.b16 %v1999
      %v2020 = vunpack.c.l.b16 %v2000
      %v2021 = vunpack.c.l.b16 %v2001
      %v2022 = vunpack.c.l.b16 %v2002
      %v2023 = vunpack.c.l.b16 %v2003
      %v2024 = vunpack.c.l.b16 %v2004
      %v2025 = vunpack.c.l.b16 %v2005
      %v2026 = vunpack.c.l.b16 %v2006
      %v2027 = vpack.c.b16 %v2018, %v2017
      %v2028 = vpack.c.b16 %v2020, %v2019
      %v2029 = vpack.c.b16 %v2022, %v2021
      %v2030 = vpack.c.b16 %v2024, %v2023
      %v2031 = vpack.c.b16 %v2026, %v2025
      %2037 = vst [vmem:[#allocation3] sm:$0xff] %v2027
      %2038 = vst [vmem:[#allocation3 + $0x8] sm:$0xff] %v2028
      %2039 = vst [vmem:[#allocation3 + $0x10] sm:$0xff] %v2029
      %2040 = vst [vmem:[#allocation3 + $0x18] sm:$0xff] %v2030
      %2041 = vst [vmem:[#allocation3 + $0x20] sm:$0xff] %v2031
      %v2042 = vld [vmem:[#allocation3] sm:$0xff]
      %v2043 = vld [vmem:[#allocation3 + $0x8] sm:$0xff]
      %v2044 = vld [vmem:[#allocation3 + $0x10] sm:$0xff]
      %v2045 = vld [vmem:[#allocation3 + $0x18] sm:$0xff]
      %v2046 = vld [vmem:[#allocation3 + $0x20] sm:$0xff]
      %v2052 = vunpack.c.l.b16 %v2042
      %v2053 = vunpack.c.h.b16 %v2042
      %v2054 = vunpack.c.l.b16 %v2043
      %v2055 = vunpack.c.h.b16 %v2043
      %v2056 = vunpack.c.l.b16 %v2044
      %v2057 = vunpack.c.h.b16 %v2044
      %v2058 = vunpack.c.l.b16 %v2045
      %v2059 = vunpack.c.h.b16 %v2045
      %v2060 = vunpack.c.l.b16 %v2046
      %v2061 = vpack.c.b16 %v2052, %v2052
      %v2062 = vpack.c.b16 %v2053, %v2053
      %v2063 = vpack.c.b16 %v2054, %v2054
      %v2064 = vpack.c.b16 %v2055, %v2055
      %v2065 = vpack.c.b16 %v2056, %v2056
      %v2066 = vpack.c.b16 %v2057, %v2057
      %v2067 = vpack.c.b16 %v2058, %v2058
      %v2068 = vpack.c.b16 %v2059, %v2059
      %v2069 = vpack.c.b16 %v2060, %v2060
      %v2070 = vunpack.c.h.b16 %v2046
      %v2071 = vpack.c.b16 %v2070, %v2070
      %2072 = vrot.lane.b32.xlu0 %v2061, 127
      %v2073 = vpop.permute.xlu0 %2072
      %2074 = vrot.lane.b32.xlu0 %v2062, 127
      %v2075 = vpop.permute.xlu0 %2074
      %2076 = vrot.lane.b32.xlu0 %v2063, 127
      %v2077 = vpop.permute.xlu0 %2076
      %2078 = vrot.lane.b32.xlu0 %v2064, 127
      %v2079 = vpop.permute.xlu0 %2078
      %2080 = vrot.lane.b32.xlu0 %v2065, 127
      %v2081 = vpop.permute.xlu0 %2080
      %2082 = vrot.lane.b32.xlu0 %v2066, 127
      %v2083 = vpop.permute.xlu0 %2082
      %2084 = vrot.lane.b32.xlu0 %v2067, 127
      %v2085 = vpop.permute.xlu0 %2084
      %2086 = vrot.lane.b32.xlu0 %v2068, 127
      %v2087 = vpop.permute.xlu0 %2086
      %2088 = vrot.lane.b32.xlu0 %v2069, 127
      %v2089 = vpop.permute.xlu0 %2088
      %2090 = vrot.lane.b32.xlu0 %v2071, 127
      %v2091 = vpop.permute.xlu0 %2090
      %v2092 = vsel %vm502, %v2073, %v2075
      %v2093 = vsel %vm502, %v2075, %v2077
      %v2094 = vsel %vm502, %v2077, %v2079
      %v2095 = vsel %vm502, %v2079, %v2081
      %v2096 = vsel %vm502, %v2081, %v2083
      %v2097 = vsel %vm502, %v2083, %v2085
      %v2098 = vsel %vm502, %v2085, %v2087
      %v2099 = vsel %vm502, %v2087, %v2089
      %v2100 = vsel %vm502, %v2089, %v2091
      %2101 = vrot.lane.b32.xlu0 %v2061, 126
      %v2102 = vpop.permute.xlu0 %2101
      %2103 = vrot.lane.b32.xlu0 %v2062, 126
      %v2104 = vpop.permute.xlu0 %2103
      %2105 = vrot.lane.b32.xlu0 %v2063, 126
      %v2106 = vpop.permute.xlu0 %2105
      %2107 = vrot.lane.b32.xlu0 %v2064, 126
      %v2108 = vpop.permute.xlu0 %2107
      %2109 = vrot.lane.b32.xlu0 %v2065, 126
      %v2110 = vpop.permute.xlu0 %2109
      %2111 = vrot.lane.b32.xlu0 %v2066, 126
      %v2112 = vpop.permute.xlu0 %2111
      %2113 = vrot.lane.b32.xlu0 %v2067, 126
      %v2114 = vpop.permute.xlu0 %2113
      %2115 = vrot.lane.b32.xlu0 %v2068, 126
      %v2116 = vpop.permute.xlu0 %2115
      %2117 = vrot.lane.b32.xlu0 %v2069, 126
      %v2118 = vpop.permute.xlu0 %2117
      %2119 = vrot.lane.b32.xlu0 %v2071, 126
      %v2120 = vpop.permute.xlu0 %2119
      %v2121 = vsel %vm532, %v2102, %v2104
      %v2122 = vsel %vm532, %v2104, %v2106
      %v2123 = vsel %vm532, %v2106, %v2108
      %v2124 = vsel %vm532, %v2108, %v2110
      %v2125 = vsel %vm532, %v2110, %v2112
      %v2126 = vsel %vm532, %v2112, %v2114
      %v2127 = vsel %vm532, %v2114, %v2116
      %v2128 = vsel %vm532, %v2116, %v2118
      %v2129 = vsel %vm532, %v2118, %v2120
      %2130 = vrot.lane.b32.xlu0 %v2061, 94
      %v2131 = vpop.permute.xlu0 %2130
      %2132 = vrot.lane.b32.xlu0 %v2062, 94
      %v2133 = vpop.permute.xlu0 %2132
      %2134 = vrot.lane.b32.xlu0 %v2063, 94
      %v2135 = vpop.permute.xlu0 %2134
      %2136 = vrot.lane.b32.xlu0 %v2064, 94
      %v2137 = vpop.permute.xlu0 %2136
      %2138 = vrot.lane.b32.xlu0 %v2065, 94
      %v2139 = vpop.permute.xlu0 %2138
      %2140 = vrot.lane.b32.xlu0 %v2066, 94
      %v2141 = vpop.permute.xlu0 %2140
      %2142 = vrot.lane.b32.xlu0 %v2067, 94
      %v2143 = vpop.permute.xlu0 %2142
      %2144 = vrot.lane.b32.xlu0 %v2068, 94
      %v2145 = vpop.permute.xlu0 %2144
      %2146 = vrot.lane.b32.xlu0 %v2069, 94
      %v2147 = vpop.permute.xlu0 %2146
      %2148 = vrot.lane.b32.xlu0 %v2071, 94
      %v2149 = vpop.permute.xlu0 %2148
      %v2150 = vsel %vm562, %v2131, %v2133
      %v2151 = vsel %vm562, %v2133, %v2135
      %v2152 = vsel %vm562, %v2135, %v2137
      %v2153 = vsel %vm562, %v2137, %v2139
      %v2154 = vsel %vm562, %v2139, %v2141
      %v2155 = vsel %vm562, %v2141, %v2143
      %v2156 = vsel %vm562, %v2143, %v2145
      %v2157 = vsel %vm562, %v2145, %v2147
      %v2158 = vsel %vm562, %v2147, %v2149
      %2159 = vrot.lane.b32.xlu0 %v2061, 93
      %v2160 = vpop.permute.xlu0 %2159
      %2161 = vrot.lane.b32.xlu0 %v2062, 93
      %v2162 = vpop.permute.xlu0 %2161
      %2163 = vrot.lane.b32.xlu0 %v2063, 93
      %v2164 = vpop.permute.xlu0 %2163
      %2165 = vrot.lane.b32.xlu0 %v2064, 93
      %v2166 = vpop.permute.xlu0 %2165
      %2167 = vrot.lane.b32.xlu0 %v2065, 93
      %v2168 = vpop.permute.xlu0 %2167
      %2169 = vrot.lane.b32.xlu0 %v2066, 93
      %v2170 = vpop.permute.xlu0 %2169
      %2171 = vrot.lane.b32.xlu0 %v2067, 93
      %v2172 = vpop.permute.xlu0 %2171
      %2173 = vrot.lane.b32.xlu0 %v2068, 93
      %v2174 = vpop.permute.xlu0 %2173
      %2175 = vrot.lane.b32.xlu0 %v2069, 93
      %v2176 = vpop.permute.xlu0 %2175
      %2177 = vrot.lane.b32.xlu0 %v2071, 93
      %v2178 = vpop.permute.xlu0 %2177
      %v2179 = vsel %vm592, %v2160, %v2162
      %v2180 = vsel %vm592, %v2162, %v2164
      %v2181 = vsel %vm592, %v2164, %v2166
      %v2182 = vsel %vm592, %v2166, %v2168
      %v2183 = vsel %vm592, %v2168, %v2170
      %v2184 = vsel %vm592, %v2170, %v2172
      %v2185 = vsel %vm592, %v2172, %v2174
      %v2186 = vsel %vm592, %v2174, %v2176
      %v2187 = vsel %vm592, %v2176, %v2178
      %2188 = vrot.lane.b32.xlu0 %v2061, 92
      %v2189 = vpop.permute.xlu0 %2188
      %2190 = vrot.lane.b32.xlu0 %v2062, 92
      %v2191 = vpop.permute.xlu0 %2190
      %2192 = vrot.lane.b32.xlu0 %v2063, 92
      %v2193 = vpop.permute.xlu0 %2192
      %2194 = vrot.lane.b32.xlu0 %v2064, 92
      %v2195 = vpop.permute.xlu0 %2194
      %2196 = vrot.lane.b32.xlu0 %v2065, 92
      %v2197 = vpop.permute.xlu0 %2196
      %2198 = vrot.lane.b32.xlu0 %v2066, 92
      %v2199 = vpop.permute.xlu0 %2198
      %2200 = vrot.lane.b32.xlu0 %v2067, 92
      %v2201 = vpop.permute.xlu0 %2200
      %2202 = vrot.lane.b32.xlu0 %v2068, 92
      %v2203 = vpop.permute.xlu0 %2202
      %2204 = vrot.lane.b32.xlu0 %v2069, 92
      %v2205 = vpop.permute.xlu0 %2204
      %2206 = vrot.lane.b32.xlu0 %v2071, 92
      %v2207 = vpop.permute.xlu0 %2206
      %v2208 = vsel %vm622, %v2189, %v2191
      %v2209 = vsel %vm622, %v2191, %v2193
      %v2210 = vsel %vm622, %v2193, %v2195
      %v2211 = vsel %vm622, %v2195, %v2197
      %v2212 = vsel %vm622, %v2197, %v2199
      %v2213 = vsel %vm622, %v2199, %v2201
      %v2214 = vsel %vm622, %v2201, %v2203
      %v2215 = vsel %vm622, %v2203, %v2205
      %v2216 = vsel %vm622, %v2205, %v2207
      %2217 = vrot.lane.b32.xlu0 %v2061, 60
      %v2218 = vpop.permute.xlu0 %2217
      %2219 = vrot.lane.b32.xlu0 %v2062, 60
      %v2220 = vpop.permute.xlu0 %2219
      %2221 = vrot.lane.b32.xlu0 %v2063, 60
      %v2222 = vpop.permute.xlu0 %2221
      %2223 = vrot.lane.b32.xlu0 %v2064, 60
      %v2224 = vpop.permute.xlu0 %2223
      %2225 = vrot.lane.b32.xlu0 %v2065, 60
      %v2226 = vpop.permute.xlu0 %2225
      %2227 = vrot.lane.b32.xlu0 %v2066, 60
      %v2228 = vpop.permute.xlu0 %2227
      %2229 = vrot.lane.b32.xlu0 %v2067, 60
      %v2230 = vpop.permute.xlu0 %2229
      %2231 = vrot.lane.b32.xlu0 %v2068, 60
      %v2232 = vpop.permute.xlu0 %2231
      %2233 = vrot.lane.b32.xlu0 %v2069, 60
      %v2234 = vpop.permute.xlu0 %2233
      %2235 = vrot.lane.b32.xlu0 %v2071, 60
      %v2236 = vpop.permute.xlu0 %2235
      %v2237 = vsel %vm652, %v2218, %v2220
      %v2238 = vsel %vm652, %v2220, %v2222
      %v2239 = vsel %vm652, %v2222, %v2224
      %v2240 = vsel %vm652, %v2224, %v2226
      %v2241 = vsel %vm652, %v2226, %v2228
      %v2242 = vsel %vm652, %v2228, %v2230
      %v2243 = vsel %vm652, %v2230, %v2232
      %v2244 = vsel %vm652, %v2232, %v2234
      %v2245 = vsel %vm652, %v2234, %v2236
      %2246 = vrot.lane.b32.xlu0 %v2061, 59
      %v2247 = vpop.permute.xlu0 %2246
      %2248 = vrot.lane.b32.xlu0 %v2062, 59
      %v2249 = vpop.permute.xlu0 %2248
      %2250 = vrot.lane.b32.xlu0 %v2063, 59
      %v2251 = vpop.permute.xlu0 %2250
      %2252 = vrot.lane.b32.xlu0 %v2064, 59
      %v2253 = vpop.permute.xlu0 %2252
      %2254 = vrot.lane.b32.xlu0 %v2065, 59
      %v2255 = vpop.permute.xlu0 %2254
      %2256 = vrot.lane.b32.xlu0 %v2066, 59
      %v2257 = vpop.permute.xlu0 %2256
      %2258 = vrot.lane.b32.xlu0 %v2067, 59
      %v2259 = vpop.permute.xlu0 %2258
      %2260 = vrot.lane.b32.xlu0 %v2068, 59
      %v2261 = vpop.permute.xlu0 %2260
      %2262 = vrot.lane.b32.xlu0 %v2069, 59
      %v2263 = vpop.permute.xlu0 %2262
      %2264 = vrot.lane.b32.xlu0 %v2071, 59
      %v2265 = vpop.permute.xlu0 %2264
      %v2266 = vsel %vm682, %v2247, %v2249
      %v2267 = vsel %vm682, %v2249, %v2251
      %v2268 = vsel %vm682, %v2251, %v2253
      %v2269 = vsel %vm682, %v2253, %v2255
      %v2270 = vsel %vm682, %v2255, %v2257
      %v2271 = vsel %vm682, %v2257, %v2259
      %v2272 = vsel %vm682, %v2259, %v2261
      %v2273 = vsel %vm682, %v2261, %v2263
      %v2274 = vsel %vm682, %v2263, %v2265
      %2275 = vrot.lane.b32.xlu0 %v2061, 58
      %v2276 = vpop.permute.xlu0 %2275
      %2277 = vrot.lane.b32.xlu0 %v2062, 58
      %v2278 = vpop.permute.xlu0 %2277
      %2279 = vrot.lane.b32.xlu0 %v2063, 58
      %v2280 = vpop.permute.xlu0 %2279
      %2281 = vrot.lane.b32.xlu0 %v2064, 58
      %v2282 = vpop.permute.xlu0 %2281
      %2283 = vrot.lane.b32.xlu0 %v2065, 58
      %v2284 = vpop.permute.xlu0 %2283
      %2285 = vrot.lane.b32.xlu0 %v2066, 58
      %v2286 = vpop.permute.xlu0 %2285
      %2287 = vrot.lane.b32.xlu0 %v2067, 58
      %v2288 = vpop.permute.xlu0 %2287
      %2289 = vrot.lane.b32.xlu0 %v2068, 58
      %v2290 = vpop.permute.xlu0 %2289
      %2291 = vrot.lane.b32.xlu0 %v2069, 58
      %v2292 = vpop.permute.xlu0 %2291
      %2293 = vrot.lane.b32.xlu0 %v2071, 58
      %v2294 = vpop.permute.xlu0 %2293
      %v2295 = vsel %vm712, %v2276, %v2278
      %v2296 = vsel %vm712, %v2278, %v2280
      %v2297 = vsel %vm712, %v2280, %v2282
      %v2298 = vsel %vm712, %v2282, %v2284
      %v2299 = vsel %vm712, %v2284, %v2286
      %v2300 = vsel %vm712, %v2286, %v2288
      %v2301 = vsel %vm712, %v2288, %v2290
      %v2302 = vsel %vm712, %v2290, %v2292
      %v2303 = vsel %vm712, %v2292, %v2294
      %v2306 = vsel %vm722, %v2061, %v2092
      %v2310 = vsel %vm722, %v2062, %v2093
      %v2314 = vsel %vm722, %v2063, %v2094
      %v2318 = vsel %vm722, %v2064, %v2095
      %v2322 = vsel %vm722, %v2065, %v2096
      %v2326 = vsel %vm722, %v2066, %v2097
      %v2330 = vsel %vm722, %v2067, %v2098
      %v2334 = vsel %vm722, %v2068, %v2099
      %v2338 = vsel %vm722, %v2069, %v2100
      %v2342 = vsel %vm722, %v2121, %v2150
      %v2346 = vsel %vm722, %v2122, %v2151
      %v2350 = vsel %vm722, %v2123, %v2152
      %v2354 = vsel %vm722, %v2124, %v2153
      %v2358 = vsel %vm722, %v2125, %v2154
      %v2362 = vsel %vm722, %v2126, %v2155
      %v2366 = vsel %vm722, %v2127, %v2156
      %v2370 = vsel %vm722, %v2128, %v2157
      %v2374 = vsel %vm722, %v2129, %v2158
      %v2378 = vsel %vm722, %v2179, %v2208
      %v2382 = vsel %vm722, %v2180, %v2209
      %v2386 = vsel %vm722, %v2181, %v2210
      %v2390 = vsel %vm722, %v2182, %v2211
      %v2394 = vsel %vm722, %v2183, %v2212
      %v2398 = vsel %vm722, %v2184, %v2213
      %v2402 = vsel %vm722, %v2185, %v2214
      %v2406 = vsel %vm722, %v2186, %v2215
      %v2410 = vsel %vm722, %v2187, %v2216
      %v2414 = vsel %vm722, %v2237, %v2266
      %v2418 = vsel %vm722, %v2238, %v2267
      %v2422 = vsel %vm722, %v2239, %v2268
      %v2426 = vsel %vm722, %v2240, %v2269
      %v2430 = vsel %vm722, %v2241, %v2270
      %v2434 = vsel %vm722, %v2242, %v2271
      %v2438 = vsel %vm722, %v2243, %v2272
      %v2442 = vsel %vm722, %v2244, %v2273
      %v2446 = vsel %vm722, %v2245, %v2274
      %v2448 = vld [vmem:[%s5] sm:$0x3]
      %v2450 = vsel %vm868, %v2448, 0
      %v2453 = vsel %vm722, %v2295, 0
      %v2456 = vsel %vm722, %v2296, 0
      %v2459 = vsel %vm722, %v2297, 0
      %v2462 = vsel %vm722, %v2298, 0
      %v2465 = vsel %vm722, %v2299, 0
      %v2468 = vsel %vm722, %v2300, 0
      %v2471 = vsel %vm722, %v2301, 0
      %v2474 = vsel %vm722, %v2302, 0
      %v2477 = vsel %vm722, %v2303, 0
      %2479 = vmatprep.subr.bf16.mxu0 0
      %2480 = vmatpush1.bf16.msra.mxu0 0
      %2481 = vmatprep.subr.bf16.mxu0 0
      %2482 = vmatpush1.bf16.msra.mxu0 0
      %2483 = vmatprep.subr.bf16.mxu0 0
      %2484 = vmatpush1.bf16.msra.mxu0 0
      %2485 = vmatprep.subr.bf16.mxu0 %v2456
      %2486 = vmatpush1.bf16.msra.mxu0 %v2453
      %2487 = vmatprep.subr.bf16.mxu0 %v2418
      %2488 = vmatpush1.bf16.msra.mxu0 %v2414
      %2489 = vmatprep.subr.bf16.mxu0 %v2382
      %2490 = vmatpush1.bf16.msra.mxu0 %v2378
      %2491 = vmatprep.subr.bf16.mxu0 %v2346
      %2492 = vmatpush1.bf16.msra.mxu0 %v2342
      %2493 = vmatprep.subr.bf16.mxu0 %v2310
      %2494 = vmatpush1.bf16.msra.mxu0 %v2306
      %2495 = vmatprep.subr.bf16.mxu0 0
      %2496 = vmatpush2.bf16.msra.mxu0 0
      %2497 = vmatprep.subr.bf16.mxu0 0
      %2498 = vmatpush2.bf16.msra.mxu0 0
      %2499 = vmatprep.subr.bf16.mxu0 0
      %2500 = vmatpush2.bf16.msra.mxu0 0
      %2501 = vmatprep.subr.bf16.mxu0 0
      %2502 = vmatpush2.bf16.msra.mxu0 0
      %2503 = vmatprep.subr.bf16.mxu0 0
      %2504 = vmatpush2.bf16.msra.mxu0 0
      %2505 = vmatprep.subr.bf16.mxu0 0
      %2506 = vmatpush2.bf16.msra.mxu0 0
      %2507 = vmatprep.subr.bf16.mxu0 0
      %2508 = vmatpush2.bf16.msra.mxu0 0
      %2509 = vmatprep.subr.bf16.mxu0 0
      %2510 = vmatpush2.bf16.msra.mxu0 0
      %2511 = vmatprep.mubr.bf16.mxu0 0
      %2512 = vmatmul.mubr.bf16.gmra.mxu0 %v2450
      %v2513 = vpop.f32.mrf.mxu0
      %v2514 = vadd.f32 0.0, %v2513
      %v2515 = vpop.f32.mrf.mxu0
      %v2516 = vadd.f32 0.0, %v2515
      %v2517 = vpop.f32.mrf.mxu0
      %v2518 = vpop.f32.mrf.mxu0
      %2519 = vdwg.mxu0
      %2520 = vmatprep.subr.bf16.mxu0 0
      %2521 = vmatpush1.bf16.msra.mxu0 0
      %2522 = vmatprep.subr.bf16.mxu0 0
      %2523 = vmatpush1.bf16.msra.mxu0 0
      %2524 = vmatprep.subr.bf16.mxu0 0
      %2525 = vmatpush1.bf16.msra.mxu0 0
      %2526 = vmatprep.subr.bf16.mxu0 %v2462
      %2527 = vmatpush1.bf16.msra.mxu0 %v2459
      %2528 = vmatprep.subr.bf16.mxu0 %v2426
      %2529 = vmatpush1.bf16.msra.mxu0 %v2422
      %2530 = vmatprep.subr.bf16.mxu0 %v2390
      %2531 = vmatpush1.bf16.msra.mxu0 %v2386
      %2532 = vmatprep.subr.bf16.mxu0 %v2354
      %2533 = vmatpush1.bf16.msra.mxu0 %v2350
      %2534 = vmatprep.subr.bf16.mxu0 %v2318
      %2535 = vmatpush1.bf16.msra.mxu0 %v2314
      %2536 = vmatprep.subr.bf16.mxu0 0
      %2537 = vmatpush2.bf16.msra.mxu0 0
      %2538 = vmatprep.subr.bf16.mxu0 0
      %2539 = vmatpush2.bf16.msra.mxu0 0
      %2540 = vmatprep.subr.bf16.mxu0 0
      %2541 = vmatpush2.bf16.msra.mxu0 0
      %2542 = vmatprep.subr.bf16.mxu0 0
      %2543 = vmatpush2.bf16.msra.mxu0 0
      %2544 = vmatprep.subr.bf16.mxu0 0
      %2545 = vmatpush2.bf16.msra.mxu0 0
      %2546 = vmatprep.subr.bf16.mxu0 0
      %2547 = vmatpush2.bf16.msra.mxu0 0
      %2548 = vmatprep.subr.bf16.mxu0 0
      %2549 = vmatpush2.bf16.msra.mxu0 0
      %2550 = vmatprep.subr.bf16.mxu0 0
      %2551 = vmatpush2.bf16.msra.mxu0 0
      %2552 = vmatprep.mubr.bf16.mxu0 0
      %2553 = vmatmul.mubr.bf16.gmra.mxu0 %v2450
      %v2554 = vpop.f32.mrf.mxu0
      %v2555 = vadd.f32 0.0, %v2554
      %v2556 = vpop.f32.mrf.mxu0
      %v2557 = vadd.f32 0.0, %v2556
      %v2558 = vpop.f32.mrf.mxu0
      %v2559 = vpop.f32.mrf.mxu0
      %2560 = vdwg.mxu0
      %2561 = vmatprep.subr.bf16.mxu0 0
      %2562 = vmatpush1.bf16.msra.mxu0 0
      %2563 = vmatprep.subr.bf16.mxu0 0
      %2564 = vmatpush1.bf16.msra.mxu0 0
      %2565 = vmatprep.subr.bf16.mxu0 0
      %2566 = vmatpush1.bf16.msra.mxu0 0
      %2567 = vmatprep.subr.bf16.mxu0 %v2468
      %2568 = vmatpush1.bf16.msra.mxu0 %v2465
      %2569 = vmatprep.subr.bf16.mxu0 %v2434
      %2570 = vmatpush1.bf16.msra.mxu0 %v2430
      %2571 = vmatprep.subr.bf16.mxu0 %v2398
      %2572 = vmatpush1.bf16.msra.mxu0 %v2394
      %2573 = vmatprep.subr.bf16.mxu0 %v2362
      %2574 = vmatpush1.bf16.msra.mxu0 %v2358
      %2575 = vmatprep.subr.bf16.mxu0 %v2326
      %2576 = vmatpush1.bf16.msra.mxu0 %v2322
      %2577 = vmatprep.subr.bf16.mxu0 0
      %2578 = vmatpush2.bf16.msra.mxu0 0
      %2579 = vmatprep.subr.bf16.mxu0 0
      %2580 = vmatpush2.bf16.msra.mxu0 0
      %2581 = vmatprep.subr.bf16.mxu0 0
      %2582 = vmatpush2.bf16.msra.mxu0 0
      %2583 = vmatprep.subr.bf16.mxu0 0
      %2584 = vmatpush2.bf16.msra.mxu0 0
      %2585 = vmatprep.subr.bf16.mxu0 0
      %2586 = vmatpush2.bf16.msra.mxu0 0
      %2587 = vmatprep.subr.bf16.mxu0 0
      %2588 = vmatpush2.bf16.msra.mxu0 0
      %2589 = vmatprep.subr.bf16.mxu0 0
      %2590 = vmatpush2.bf16.msra.mxu0 0
      %2591 = vmatprep.subr.bf16.mxu0 0
      %2592 = vmatpush2.bf16.msra.mxu0 0
      %2593 = vmatprep.mubr.bf16.mxu0 0
      %2594 = vmatmul.mubr.bf16.gmra.mxu0 %v2450
      %v2595 = vpop.f32.mrf.mxu0
      %v2596 = vadd.f32 0.0, %v2595
      %v2597 = vpop.f32.mrf.mxu0
      %v2598 = vadd.f32 0.0, %v2597
      %v2599 = vpop.f32.mrf.mxu0
      %v2600 = vpop.f32.mrf.mxu0
      %2601 = vdwg.mxu0
      %2602 = vmatprep.subr.bf16.mxu0 0
      %2603 = vmatpush1.bf16.msra.mxu0 0
      %2604 = vmatprep.subr.bf16.mxu0 0
      %2605 = vmatpush1.bf16.msra.mxu0 0
      %2606 = vmatprep.subr.bf16.mxu0 0
      %2607 = vmatpush1.bf16.msra.mxu0 0
      %2608 = vmatprep.subr.bf16.mxu0 %v2474
      %2609 = vmatpush1.bf16.msra.mxu0 %v2471
      %2610 = vmatprep.subr.bf16.mxu0 %v2442
      %2611 = vmatpush1.bf16.msra.mxu0 %v2438
      %2612 = vmatprep.subr.bf16.mxu0 %v2406
      %2613 = vmatpush1.bf16.msra.mxu0 %v2402
      %2614 = vmatprep.subr.bf16.mxu0 %v2370
      %2615 = vmatpush1.bf16.msra.mxu0 %v2366
      %2616 = vmatprep.subr.bf16.mxu0 %v2334
      %2617 = vmatpush1.bf16.msra.mxu0 %v2330
      %2618 = vmatprep.subr.bf16.mxu0 0
      %2619 = vmatpush2.bf16.msra.mxu0 0
      %2620 = vmatprep.subr.bf16.mxu0 0
      %2621 = vmatpush2.bf16.msra.mxu0 0
      %2622 = vmatprep.subr.bf16.mxu0 0
      %2623 = vmatpush2.bf16.msra.mxu0 0
      %2624 = vmatprep.subr.bf16.mxu0 0
      %2625 = vmatpush2.bf16.msra.mxu0 0
      %2626 = vmatprep.subr.bf16.mxu0 0
      %2627 = vmatpush2.bf16.msra.mxu0 0
      %2628 = vmatprep.subr.bf16.mxu0 0
      %2629 = vmatpush2.bf16.msra.mxu0 0
      %2630 = vmatprep.subr.bf16.mxu0 0
      %2631 = vmatpush2.bf16.msra.mxu0 0
      %2632 = vmatprep.subr.bf16.mxu0 0
      %2633 = vmatpush2.bf16.msra.mxu0 0
      %2634 = vmatprep.mubr.bf16.mxu0 0
      %2635 = vmatmul.mubr.bf16.gmra.mxu0 %v2450
      %v2636 = vpop.f32.mrf.mxu0
      %v2637 = vadd.f32 0.0, %v2636
      %v2638 = vpop.f32.mrf.mxu0
      %v2639 = vadd.f32 0.0, %v2638
      %v2640 = vpop.f32.mrf.mxu0
      %v2641 = vpop.f32.mrf.mxu0
      %2642 = vdwg.mxu0
      %2643 = vmatprep.subr.bf16.mxu0 0
      %2644 = vmatpush1.bf16.msra.mxu0 0
      %2645 = vmatprep.subr.bf16.mxu0 0
      %2646 = vmatpush1.bf16.msra.mxu0 0
      %2647 = vmatprep.subr.bf16.mxu0 0
      %2648 = vmatpush1.bf16.msra.mxu0 0
      %2649 = vmatprep.subr.bf16.mxu0 0
      %2650 = vmatpush1.bf16.msra.mxu0 %v2477
      %2651 = vmatprep.subr.bf16.mxu0 0
      %2652 = vmatpush1.bf16.msra.mxu0 %v2446
      %2653 = vmatprep.subr.bf16.mxu0 0
      %2654 = vmatpush1.bf16.msra.mxu0 %v2410
      %2655 = vmatprep.subr.bf16.mxu0 0
      %2656 = vmatpush1.bf16.msra.mxu0 %v2374
      %2657 = vmatprep.subr.bf16.mxu0 0
      %2658 = vmatpush1.bf16.msra.mxu0 %v2338
      %2659 = vmatprep.subr.bf16.mxu0 0
      %2660 = vmatpush2.bf16.msra.mxu0 0
      %2661 = vmatprep.subr.bf16.mxu0 0
      %2662 = vmatpush2.bf16.msra.mxu0 0
      %2663 = vmatprep.subr.bf16.mxu0 0
      %2664 = vmatpush2.bf16.msra.mxu0 0
      %2665 = vmatprep.subr.bf16.mxu0 0
      %2666 = vmatpush2.bf16.msra.mxu0 0
      %2667 = vmatprep.subr.bf16.mxu0 0
      %2668 = vmatpush2.bf16.msra.mxu0 0
      %2669 = vmatprep.subr.bf16.mxu0 0
      %2670 = vmatpush2.bf16.msra.mxu0 0
      %2671 = vmatprep.subr.bf16.mxu0 0
      %2672 = vmatpush2.bf16.msra.mxu0 0
      %2673 = vmatprep.subr.bf16.mxu0 0
      %2674 = vmatpush2.bf16.msra.mxu0 0
      %2675 = vmatprep.mubr.bf16.mxu0 0
      %2676 = vmatmul.mubr.bf16.gmra.mxu0 %v2450
      %v2677 = vpop.f32.mrf.mxu0
      %v2678 = vadd.f32 0.0, %v2677
      %v2679 = vpop.f32.mrf.mxu0
      %v2680 = vpop.f32.mrf.mxu0
      %v2681 = vpop.f32.mrf.mxu0
      %2682 = vdwg.mxu0
      %v2691 = vcombine.low %v2514, %v2516
      %v2692 = vcombine.low %v2555, %v2557
      %v2693 = vcombine.low %v2596, %v2598
      %v2694 = vcombine.low %v2637, %v2639
      %2699 = vst [vmem:[%s251] sm:$0xff] %v2691
      %2700 = vst [vmem:[%s251 + $0x8] sm:$0xff] %v2692
      %2701 = vst [vmem:[%s251 + $0x10] sm:$0xff] %v2693
      %2702 = vst [vmem:[%s251 + $0x18] sm:$0xff] %v2694
      %2703 = vst [vmem:[%s251 + $0x20] sm:$0xf] %v2678
      %p2704 = scmp.lt.s32.totalorder %s17, 1
      %s2705 = scalar_select %p2704, %s17, 1
      %s2706 = smul.addr %s2705, 9
      %s2707 = smul.addr %s2706, 4
      %s2708 = scalar_lea.vmem %s6, %s2707
      // Predicated region
      $region45: #{jup_concat_forward.3} parent=43 // pred_check
        %p2709 = pneg %p166
      $region46: #{jup_concat_forward.3} parent=43 // pred_check_branch
        %2711 = sbr.rel (%p2709) target = $region48
      $region47: #{jup_concat_forward.3} parent=43 // pred_region
        _
      $region48: #{jup_concat_forward.3} parent=43 // pred_fallthru
        _
    $region44: #{jup_concat_forward.3} parent=5 // pred_fallthru
      _
    %p2712 = scmp.le.s32.totalorder 2, %s12
    // Predicated region
    $region49: #{jup_concat_forward.3} parent=5 // pred_check
      %p2713 = pneg %p2712
    $region50: #{jup_concat_forward.3} parent=5 // pred_check_branch
      %2715 = sbr.rel (%p2713) target = $region52
    $region51: #{jup_concat_forward.3} parent=5 // pred_region
      %s2716 = ssub.s32 %s12, 2
      // Predicated region
      $region53: #{jup_concat_forward.3} parent=51 // pred_check
        %p2717 = pneg %p172
      $region54: #{jup_concat_forward.3} parent=51 // pred_check_branch
        %2719 = sbr.rel (%p2717) target = $region56
      $region55: #{jup_concat_forward.3} parent=51 // pred_region
        %p2720 = scmp.lt.s32.totalorder %s18, 1
        %s2721 = scalar_select %p2720, %s18, 1
        %s2722 = smul.addr %s2721, 9
        %s2723 = smul.addr %s2722, 4
        %s2724 = scalar_lea.vmem %s6, %s2723
      $region56: #{jup_concat_forward.3} parent=51 // pred_fallthru
        _
    $region52: #{jup_concat_forward.3} parent=5 // pred_fallthru
      _
  $region6: #{jup_concat_forward.3} parent=0 // loop_footer
    %s16 = sadd.s32 1, %s12
  $region7: #{jup_concat_forward.3} parent=0 // loop_footer_branch
    %11 = sbr.rel target = $region3
  $region8: #{jup_concat_forward.3} parent=0 // loop_exit
    _

</llo_original>
